<compile_context>
chip_gen: v5e
topology: v5e:2x2
jax: 0.10.0
libtpu: 0.0.40
codegen_flags: <defaults>
</compile_context>

<pallas_src>
import jax
import jax.numpy as jnp
from jax import lax
from jax.experimental import pallas as pl
from jax.experimental.pallas import tpu as pltpu

EPS = 1e-8


# --------------------------------------------------------------------------
# Pallas kernel
# --------------------------------------------------------------------------
def _make_kernel(T, NB, dilations, hidden_dim):
    dilations = tuple(int(d) for d in dilations)

    def kernel(x_ref, g0_ref, b0_ref, wf_ref, bf_ref,
               w11_ref, b11_ref, g1_ref, bt1_ref,
               wd_ref, bd_ref, g2_ref, bt2_ref,
               wrs_ref, brs_ref, wout_ref, bout_ref,
               alphas_ref, o_ref):

        def gnorm(v, gamma, beta):
            # GroupNorm(1, C): normalize over all (T, C) elems of this batch
            # element.  One-pass statistics; gamma folded into the rsqrt scale.
            mu = jnp.mean(v)
            ms = jnp.mean(v * v)
            var = ms - mu * mu
            scale = lax.rsqrt(var + EPS) * gamma            # (1, C)
            return v * scale + (beta - mu * scale)

        def prelu(v, a):
            return jnp.where(v >= 0, v, a * v)

        x = x_ref[0]                                        # (T, Din)
        h = gnorm(x, g0_ref[...], b0_ref[...])
        out = jnp.dot(h, wf_ref[...],
                      preferred_element_type=jnp.float32) + bf_ref[...]
        skip_acc = jnp.zeros_like(out)
        sep_dim = out.shape[-1]

        # Row-index masks for the wrapped rows of the rolled activations.
        # Hoisted out of the block loop (JAX does not CSE broadcast_in_dim);
        # only one mask pair per *distinct* dilation.
        rows = lax.broadcasted_iota(jnp.int32, (T, hidden_dim), 0)
        shift_masks = {d: (rows >= d, rows < T - d)
                       for d in sorted(set(dilations))}

        for i in range(NB):                                 # unrolled, NB small
            d = dilations[i]                                # static python int
            m_lo, m_hi = shift_masks[d]
            a1 = alphas_ref[2 * i]
            a2 = alphas_ref[2 * i + 1]

            # 1x1 conv -> PReLU -> GroupNorm
            h1 = jnp.dot(out, w11_ref[i],
                         preferred_element_type=jnp.float32) + b11_ref[i]
            h1 = prelu(h1, a1)
            h1 = gnorm(h1, g1_ref[i], bt1_ref[i])

            # dilated conv1d, kernel=3, dilation=d, padding=d ("same" length):
            #   y[t] = h1[t-d] @ W0 + h1[t] @ W1 + h1[t+d] @ W2 + b
            # shifts via XLU rolls + hoisted row masks (no VMEM staging).
            xm = jnp.where(m_lo, pltpu.roll(h1, shift=d, axis=0), 0.0)      # h1[t-d]
            xp = jnp.where(m_hi, pltpu.roll(h1, shift=T - d, axis=0), 0.0)  # h1[t+d]
            h2 = (jnp.dot(xm, wd_ref[3 * i + 0], preferred_element_type=jnp.float32)
                  + jnp.dot(h1, wd_ref[3 * i + 1], preferred_element_type=jnp.float32)
                  + jnp.dot(xp, wd_ref[3 * i + 2], preferred_element_type=jnp.float32)
                  + bd_ref[i])
            h2 = prelu(h2, a2)
            h2 = gnorm(h2, g2_ref[i], bt2_ref[i])

            # fused residual & skip 1x1 convs: one (T,H) @ (H, 2*Dsep) matmul
            rs = jnp.dot(h2, wrs_ref[i],
                         preferred_element_type=jnp.float32) + brs_ref[i]
            out = out + rs[:, :sep_dim]
            skip_acc = skip_acc + rs[:, sep_dim:]

        sc = prelu(skip_acc, alphas_ref[2 * NB])
        y = jnp.dot(sc, wout_ref[...],
                    preferred_element_type=jnp.float32) + bout_ref[...]
        o_ref[0] = jax.nn.sigmoid(y)

    return kernel


def separation_pallas(x_ntc, kp, *, dilations, hidden_dim, out_dim):
    """x_ntc: (B, T, Din) float32.  kp: dict of kernel-layout params."""
    B, T, Din = x_ntc.shape
    NB = len(dilations)

    weights = [kp["g0"], kp["b0"], kp["wf"], kp["bf"],
               kp["w11"], kp["b11"], kp["g1"], kp["bt1"],
               kp["wd"], kp["bd"], kp["g2"], kp["bt2"],
               kp["wrs"], kp["brs"], kp["wout"], kp["bout"]]

    def const_spec(a):
        # full-array block with a constant index map: stays resident in VMEM
        # across the batch grid (no re-DMA per grid step).
        nd = a.ndim
        return pl.BlockSpec(a.shape, lambda b, nd=nd: (0,) * nd)

    in_specs = ([pl.BlockSpec((1, T, Din), lambda b: (b, 0, 0))]
                + [const_spec(a) for a in weights]
                + [pl.BlockSpec(memory_space=pltpu.MemorySpace.SMEM)])

    grid_spec = pltpu.PrefetchScalarGridSpec(
        num_scalar_prefetch=0,
        grid=(B,),
        in_specs=in_specs,
        out_specs=pl.BlockSpec((1, T, out_dim), lambda b: (b, 0, 0)),
    )

    kernel = _make_kernel(T, NB, tuple(dilations), hidden_dim)

    return pl.pallas_call(
        kernel,
        out_shape=jax.ShapeDtypeStruct((B, T, out_dim), jnp.float32),
        grid_spec=grid_spec,
        compiler_params=pltpu.CompilerParams(
            # batch elements are independent -> megacore sharding on v7x
            dimension_semantics=("parallel",)),
    )(x_ntc, *weights, kp["alphas_all"])


# --------------------------------------------------------------------------
# Pure-JAX reference (NCT layout, mirrors PyTorch semantics exactly)
# --------------------------------------------------------------------------
def ref_forward(x_nct, P, dilations):
    def gn(v, g, b):
        mu = jnp.mean(v, axis=(1, 2), keepdims=True)
        var = jnp.mean((v - mu) ** 2, axis=(1, 2), keepdims=True)
        return (v - mu) / jnp.sqrt(var + EPS) * g[None, :, None] + b[None, :, None]

    def conv(v, W, b, d=1, pad=0):
        y = lax.conv_general_dilated(
            v, W, window_strides=(1,), padding=[(pad, pad)],
            rhs_dilation=(d,), dimension_numbers=("NCH", "OIH", "NCH"),
            precision=lax.Precision.HIGHEST)
        return y + b[None, :, None]

    def prelu(v, a):
        return jnp.where(v >= 0, v, a * v)

    out = conv(gn(x_nct, P["ln_g"], P["ln_b"]), P["Wf"], P["bf"])
    skip_acc = 0.0
    for i, d in enumerate(dilations):
        blk = P["blocks"][i]
        h = gn(prelu(conv(out, blk["W11"], blk["b11"]), blk["a1"]),
               blk["g1"], blk["bt1"])
        h = gn(prelu(conv(h, blk["Wd"], blk["bd"], d=d, pad=d), blk["a2"]),
               blk["g2"], blk["bt2"])
        out = out + conv(h, blk["Wres"], blk["bres"])
        skip_acc = skip_acc + conv(h, blk["Wskip"], blk["bskip"])
    y = conv(prelu(skip_acc, P["a_out"]), P["Wout"], P["bout"])
    return jax.nn.sigmoid(y)


# --------------------------------------------------------------------------
# Parameter construction (deterministic, PyTorch layouts) + kernel repack
# --------------------------------------------------------------------------
def build_params(key, Din, Dout, Dsep, H, layers, stacks):
    NB = layers * stacks
    keys = iter(jax.random.split(key, 16 * NB + 16))

    def nrm(shape, scale=0.1):
        return scale * jax.random.normal(next(keys), shape, jnp.float32)

    P = {
        "ln_g": 1.0 + nrm((Din,)), "ln_b": nrm((Din,)),
        "Wf": nrm((Dsep, Din, 1)), "bf": nrm((Dsep,)),
        "Wout": nrm((Dout, Dsep, 1)), "bout": nrm((Dout,)),
        "a_out": 0.25,
        "blocks": [],
    }
    for _ in range(NB):
        P["blocks"].append({
            "W11": nrm((H, Dsep, 1)), "b11": nrm((H,)),
            "a1": 0.25, "g1": 1.0 + nrm((H,)), "bt1": nrm((H,)),
            "Wd": nrm((H, H, 3)), "bd": nrm((H,)),
            "a2": 0.25, "g2": 1.0 + nrm((H,)), "bt2": nrm((H,)),
            "Wres": nrm((Dsep, H, 1)), "bres": nrm((Dsep,)),
            "Wskip": nrm((Dsep, H, 1)), "bskip": nrm((Dsep,)),
        })
    return P


def to_kernel_params(P):
    blks = P["blocks"]
    NB = len(blks)
    alphas = []
    for b in blks:
        alphas.extend([b["a1"], b["a2"]])
    alphas.append(P["a_out"])
    kp = {
        "g0": P["ln_g"][None, :], "b0": P["ln_b"][None, :],
        "wf": P["Wf"][:, :, 0].T, "bf": P["bf"][None, :],
        "w11": jnp.stack([b["W11"][:, :, 0].T for b in blks]),
        "b11": jnp.stack([b["b11"][None, :] for b in blks]),
        "g1": jnp.stack([b["g1"][None, :] for b in blks]),
        "bt1": jnp.stack([b["bt1"][None, :] for b in blks]),
        # tap k of the k=3 dilated conv: wd[3*i + k] = Wd[:, :, k].T
        "wd": jnp.stack([b["Wd"][:, :, k].T for b in blks for k in range(3)]),
        "bd": jnp.stack([b["bd"][None, :] for b in blks]),
        "g2": jnp.stack([b["g2"][None, :] for b in blks]),
        "bt2": jnp.stack([b["bt2"][None, :] for b in blks]),
        # fused residual/skip weights: (NB, H, 2*Dsep) and (NB, 1, 2*Dsep)
        "wrs": jnp.stack([jnp.concatenate(
            [b["Wres"][:, :, 0].T, b["Wskip"][:, :, 0].T], axis=1)
            for b in blks]),
        "brs": jnp.stack([jnp.concatenate(
            [b["bres"], b["bskip"]])[None, :] for b in blks]),
        "wout": P["Wout"][:, :, 0].T, "bout": P["bout"][None, :],
        # all PReLU alphas flattened into one SMEM scalar table:
        # [a1_0, a2_0, a1_1, a2_1, ..., a_out]
        "alphas_all": jnp.array(alphas, jnp.float32),
    }
    assert kp["alphas_all"].shape == (2 * NB + 1,)
    return kp


# --------------------------------------------------------------------------
if __name__ == "__main__":
    # Small, shape-consistent configuration of Separation(...)
    B, T = 2, 32
    input_dim, output_dim = 16, 16
    sep_dim, hidden = 32, 32
    layers_, stacks_, kernel_ = 2, 2, 3
    dilations = [2 ** l for _ in range(stacks_) for l in range(layers_)]  # [1,2,1,2]

    key = jax.random.PRNGKey(0)
    kx, kparam = jax.random.split(key)

    # kernel input layout (B, T, C); PyTorch equivalent input is (B, C, T)
    x_ntc = jax.random.normal(kx, (B, T, input_dim), jnp.float32)
    x_nct = jnp.transpose(x_ntc, (0, 2, 1))

    P = build_params(kparam, input_dim, output_dim, sep_dim, hidden,
                     layers_, stacks_)
    kp = to_kernel_params(P)

    out = separation_pallas(x_ntc, kp, dilations=dilations,
                            hidden_dim=hidden, out_dim=output_dim)
    out = jax.block_until_ready(out)

    ref = ref_forward(x_nct, P, dilations)          # (B, Dout, T)
    ref_ntc = jnp.transpose(ref, (0, 2, 1))
    # Tolerance leaves headroom for the TPU MXU's reduced-precision f32
    # matmul passes; real bugs (wrong tap/shift/weight) show up as O(0.1+).
    max_err = float(jnp.max(jnp.abs(out - ref_ntc)))
    assert max_err < 1e-2, f"mismatch vs reference: max_err={max_err}"

    print("KERNEL_OK")
</pallas_src>

<mosaic_0001>
module attributes {stable_mosaic.version = 11 : i64} {
  func.func @kernel(%arg0: i32, %arg1: memref<1x32x16xf32, #tpu.memory_space<vmem>>, %arg2: memref<1x16xf32, #tpu.memory_space<vmem>>, %arg3: memref<1x16xf32, #tpu.memory_space<vmem>>, %arg4: memref<16x32xf32, #tpu.memory_space<vmem>>, %arg5: memref<1x32xf32, #tpu.memory_space<vmem>>, %arg6: memref<4x32x32xf32, #tpu.memory_space<vmem>>, %arg7: memref<4x1x32xf32, #tpu.memory_space<vmem>>, %arg8: memref<4x1x32xf32, #tpu.memory_space<vmem>>, %arg9: memref<4x1x32xf32, #tpu.memory_space<vmem>>, %arg10: memref<12x32x32xf32, #tpu.memory_space<vmem>>, %arg11: memref<4x1x32xf32, #tpu.memory_space<vmem>>, %arg12: memref<4x1x32xf32, #tpu.memory_space<vmem>>, %arg13: memref<4x1x32xf32, #tpu.memory_space<vmem>>, %arg14: memref<4x32x64xf32, #tpu.memory_space<vmem>>, %arg15: memref<4x1x64xf32, #tpu.memory_space<vmem>>, %arg16: memref<32x16xf32, #tpu.memory_space<vmem>>, %arg17: memref<1x16xf32, #tpu.memory_space<vmem>>, %arg18: memref<9xf32, #tpu.memory_space<smem>>, %arg19: memref<1x32x16xf32, #tpu.memory_space<vmem>>) attributes {dimension_semantics = [#tpu.dimension_semantics<parallel>], iteration_bounds = array<i64: 2>, scalar_prefetch = 0 : i64, scratch_operands = 0 : i64, tpu.core_type = #tpu.core_type<tc>, window_params = [{transform_indices = @transform_0, window_bounds = array<i64: 1, 32, 16>}, {pipeline_mode = #tpu.pipeline_mode<synchronous>, transform_indices = @transform_1, window_bounds = array<i64: 1, 16>}, {pipeline_mode = #tpu.pipeline_mode<synchronous>, transform_indices = @transform_2, window_bounds = array<i64: 1, 16>}, {pipeline_mode = #tpu.pipeline_mode<synchronous>, transform_indices = @transform_3, window_bounds = array<i64: 16, 32>}, {pipeline_mode = #tpu.pipeline_mode<synchronous>, transform_indices = @transform_4, window_bounds = array<i64: 1, 32>}, {pipeline_mode = #tpu.pipeline_mode<synchronous>, transform_indices = @transform_5, window_bounds = array<i64: 4, 32, 32>}, {pipeline_mode = #tpu.pipeline_mode<synchronous>, transform_indices = @transform_6, window_bounds = array<i64: 4, 1, 32>}, {pipeline_mode = #tpu.pipeline_mode<synchronous>, transform_indices = @transform_7, window_bounds = array<i64: 4, 1, 32>}, {pipeline_mode = #tpu.pipeline_mode<synchronous>, transform_indices = @transform_8, window_bounds = array<i64: 4, 1, 32>}, {pipeline_mode = #tpu.pipeline_mode<synchronous>, transform_indices = @transform_9, window_bounds = array<i64: 12, 32, 32>}, {pipeline_mode = #tpu.pipeline_mode<synchronous>, transform_indices = @transform_10, window_bounds = array<i64: 4, 1, 32>}, {pipeline_mode = #tpu.pipeline_mode<synchronous>, transform_indices = @transform_11, window_bounds = array<i64: 4, 1, 32>}, {pipeline_mode = #tpu.pipeline_mode<synchronous>, transform_indices = @transform_12, window_bounds = array<i64: 4, 1, 32>}, {pipeline_mode = #tpu.pipeline_mode<synchronous>, transform_indices = @transform_13, window_bounds = array<i64: 4, 32, 64>}, {pipeline_mode = #tpu.pipeline_mode<synchronous>, transform_indices = @transform_14, window_bounds = array<i64: 4, 1, 64>}, {pipeline_mode = #tpu.pipeline_mode<synchronous>, transform_indices = @transform_15, window_bounds = array<i64: 32, 16>}, {pipeline_mode = #tpu.pipeline_mode<synchronous>, transform_indices = @transform_16, window_bounds = array<i64: 1, 16>}, {transform_indices = @transform_17, window_bounds = array<i64: 9>}, {transform_indices = @transform_18, window_bounds = array<i64: 1, 32, 16>}]} {
    %c0 = arith.constant 0 : index
    %c0_0 = arith.constant 0 : index
    %c0_1 = arith.constant 0 : index
    %0 = vector.load %arg1[%c0, %c0_0, %c0_1] : memref<1x32x16xf32, #tpu.memory_space<vmem>>, vector<1x32x16xf32>
    %1 = vector.shape_cast %0 : vector<1x32x16xf32> to vector<32x16xf32>
    %c0_2 = arith.constant 0 : index
    %c0_3 = arith.constant 0 : index
    %2 = vector.load %arg2[%c0_2, %c0_3] : memref<1x16xf32, #tpu.memory_space<vmem>>, vector<1x16xf32>
    %c0_4 = arith.constant 0 : index
    %c0_5 = arith.constant 0 : index
    %3 = vector.load %arg3[%c0_4, %c0_5] : memref<1x16xf32, #tpu.memory_space<vmem>>, vector<1x16xf32>
    %4 = vector.shape_cast %1 : vector<32x16xf32> to vector<1x32x16xf32>
    %cst = arith.constant dense<0.000000e+00> : vector<1xf32>
    %5 = vector.multi_reduction <add>, %4, %cst [1, 2] : vector<1x32x16xf32> to vector<1xf32>
    %6 = vector.shape_cast %5 : vector<1xf32> to vector<1x1x1xf32>
    %7 = vector.extract %6[0, 0, 0] : f32 from vector<1x1x1xf32>
    %cst_6 = arith.constant 5.120000e+02 : f32
    %8 = arith.divf %7, %cst_6 : f32
    %9 = arith.mulf %1, %1 : vector<32x16xf32>
    %10 = vector.shape_cast %9 : vector<32x16xf32> to vector<1x32x16xf32>
    %cst_7 = arith.constant dense<0.000000e+00> : vector<1xf32>
    %11 = vector.multi_reduction <add>, %10, %cst_7 [1, 2] : vector<1x32x16xf32> to vector<1xf32>
    %12 = vector.shape_cast %11 : vector<1xf32> to vector<1x1x1xf32>
    %13 = vector.extract %12[0, 0, 0] : f32 from vector<1x1x1xf32>
    %cst_8 = arith.constant 5.120000e+02 : f32
    %14 = arith.divf %13, %cst_8 : f32
    %15 = arith.mulf %8, %8 : f32
    %16 = arith.subf %14, %15 : f32
    %cst_9 = arith.constant 9.99999993E-9 : f32
    %17 = arith.addf %16, %cst_9 : f32
    %18 = math.rsqrt %17 : f32
    %19 = vector.broadcast %18 : f32 to vector<1x16xf32>
    %20 = arith.mulf %19, %2 : vector<1x16xf32>
    %21 = vector.broadcast %20 : vector<1x16xf32> to vector<32x16xf32>
    %22 = arith.mulf %1, %21 : vector<32x16xf32>
    %23 = vector.broadcast %8 : f32 to vector<1x16xf32>
    %24 = arith.mulf %23, %20 : vector<1x16xf32>
    %25 = arith.subf %3, %24 : vector<1x16xf32>
    %26 = vector.broadcast %25 : vector<1x16xf32> to vector<32x16xf32>
    %27 = arith.addf %22, %26 : vector<32x16xf32>
    %c0_10 = arith.constant 0 : index
    %c0_11 = arith.constant 0 : index
    %28 = vector.load %arg4[%c0_10, %c0_11] : memref<16x32xf32, #tpu.memory_space<vmem>>, vector<16x32xf32>
    %cst_12 = arith.constant dense<0.000000e+00> : vector<32x32xf32>
    %29 = tpu.matmul %27, %28, %cst_12 {dimension_numbers = #tpu.dot_dimension_numbers<[1], [0], [0], [1], [0, 0, 1, 1], [], []>} : vector<32x16xf32>, vector<16x32xf32>, vector<32x32xf32> -> vector<32x32xf32>
    %c0_13 = arith.constant 0 : index
    %c0_14 = arith.constant 0 : index
    %30 = vector.load %arg5[%c0_13, %c0_14] : memref<1x32xf32, #tpu.memory_space<vmem>>, vector<1x32xf32>
    %31 = vector.broadcast %30 : vector<1x32xf32> to vector<32x32xf32>
    %32 = arith.addf %29, %31 : vector<32x32xf32>
    %cst_15 = arith.constant 0.000000e+00 : f32
    %33 = vector.broadcast %cst_15 : f32 to vector<32x32xf32>
    %34 = tpu.iota {dimensions = array<i32: 0>} : vector<32x32xi32>
    %c1_i32 = arith.constant 1 : i32
    %35 = vector.broadcast %c1_i32 : i32 to vector<32x32xi32>
    %36 = arith.cmpi sge, %34, %35 : vector<32x32xi32>
    %c31_i32 = arith.constant 31 : i32
    %37 = vector.broadcast %c31_i32 : i32 to vector<32x32xi32>
    %38 = arith.cmpi slt, %34, %37 : vector<32x32xi32>
    %c2_i32 = arith.constant 2 : i32
    %39 = vector.broadcast %c2_i32 : i32 to vector<32x32xi32>
    %40 = arith.cmpi sge, %34, %39 : vector<32x32xi32>
    %c30_i32 = arith.constant 30 : i32
    %41 = vector.broadcast %c30_i32 : i32 to vector<32x32xi32>
    %42 = arith.cmpi slt, %34, %41 : vector<32x32xi32>
    %c0_16 = arith.constant 0 : index
    %43 = memref.load %arg18[%c0_16] : memref<9xf32, #tpu.memory_space<smem>>
    %c1 = arith.constant 1 : index
    %44 = memref.load %arg18[%c1] : memref<9xf32, #tpu.memory_space<smem>>
    %c0_17 = arith.constant 0 : index
    %c0_18 = arith.constant 0 : index
    %c0_19 = arith.constant 0 : index
    %45 = vector.load %arg6[%c0_17, %c0_18, %c0_19] : memref<4x32x32xf32, #tpu.memory_space<vmem>>, vector<1x32x32xf32>
    %46 = vector.shape_cast %45 : vector<1x32x32xf32> to vector<32x32xf32>
    %cst_20 = arith.constant dense<0.000000e+00> : vector<32x32xf32>
    %47 = tpu.matmul %32, %46, %cst_20 {dimension_numbers = #tpu.dot_dimension_numbers<[1], [0], [0], [1], [0, 0, 1, 1], [], []>} : vector<32x32xf32>, vector<32x32xf32>, vector<32x32xf32> -> vector<32x32xf32>
    %c0_21 = arith.constant 0 : index
    %c0_22 = arith.constant 0 : index
    %c0_23 = arith.constant 0 : index
    %48 = vector.load %arg7[%c0_21, %c0_22, %c0_23] : memref<4x1x32xf32, #tpu.memory_space<vmem>>, vector<1x1x32xf32>
    %49 = vector.shape_cast %48 : vector<1x1x32xf32> to vector<1x32xf32>
    %50 = vector.broadcast %49 : vector<1x32xf32> to vector<32x32xf32>
    %51 = arith.addf %47, %50 : vector<32x32xf32>
    %cst_24 = arith.constant 0.000000e+00 : f32
    %52 = vector.broadcast %cst_24 : f32 to vector<32x32xf32>
    %53 = arith.cmpf oge, %51, %52 : vector<32x32xf32>
    %54 = vector.broadcast %43 : f32 to vector<32x32xf32>
    %55 = arith.mulf %54, %51 : vector<32x32xf32>
    %56 = arith.select %53, %51, %55 : vector<32x32xi1>, vector<32x32xf32>
    %c0_25 = arith.constant 0 : index
    %c0_26 = arith.constant 0 : index
    %c0_27 = arith.constant 0 : index
    %57 = vector.load %arg8[%c0_25, %c0_26, %c0_27] : memref<4x1x32xf32, #tpu.memory_space<vmem>>, vector<1x1x32xf32>
    %58 = vector.shape_cast %57 : vector<1x1x32xf32> to vector<1x32xf32>
    %c0_28 = arith.constant 0 : index
    %c0_29 = arith.constant 0 : index
    %c0_30 = arith.constant 0 : index
    %59 = vector.load %arg9[%c0_28, %c0_29, %c0_30] : memref<4x1x32xf32, #tpu.memory_space<vmem>>, vector<1x1x32xf32>
    %60 = vector.shape_cast %59 : vector<1x1x32xf32> to vector<1x32xf32>
    %61 = vector.shape_cast %56 : vector<32x32xf32> to vector<1x32x32xf32>
    %cst_31 = arith.constant dense<0.000000e+00> : vector<1xf32>
    %62 = vector.multi_reduction <add>, %61, %cst_31 [1, 2] : vector<1x32x32xf32> to vector<1xf32>
    %63 = vector.shape_cast %62 : vector<1xf32> to vector<1x1x1xf32>
    %64 = vector.extract %63[0, 0, 0] : f32 from vector<1x1x1xf32>
    %cst_32 = arith.constant 1.024000e+03 : f32
    %65 = arith.divf %64, %cst_32 : f32
    %66 = arith.mulf %56, %56 : vector<32x32xf32>
    %67 = vector.shape_cast %66 : vector<32x32xf32> to vector<1x32x32xf32>
    %cst_33 = arith.constant dense<0.000000e+00> : vector<1xf32>
    %68 = vector.multi_reduction <add>, %67, %cst_33 [1, 2] : vector<1x32x32xf32> to vector<1xf32>
    %69 = vector.shape_cast %68 : vector<1xf32> to vector<1x1x1xf32>
    %70 = vector.extract %69[0, 0, 0] : f32 from vector<1x1x1xf32>
    %cst_34 = arith.constant 1.024000e+03 : f32
    %71 = arith.divf %70, %cst_34 : f32
    %72 = arith.mulf %65, %65 : f32
    %73 = arith.subf %71, %72 : f32
    %cst_35 = arith.constant 9.99999993E-9 : f32
    %74 = arith.addf %73, %cst_35 : f32
    %75 = math.rsqrt %74 : f32
    %76 = vector.broadcast %75 : f32 to vector<1x32xf32>
    %77 = arith.mulf %76, %58 : vector<1x32xf32>
    %78 = vector.broadcast %77 : vector<1x32xf32> to vector<32x32xf32>
    %79 = arith.mulf %56, %78 : vector<32x32xf32>
    %80 = vector.broadcast %65 : f32 to vector<1x32xf32>
    %81 = arith.mulf %80, %77 : vector<1x32xf32>
    %82 = arith.subf %60, %81 : vector<1x32xf32>
    %83 = vector.broadcast %82 : vector<1x32xf32> to vector<32x32xf32>
    %84 = arith.addf %79, %83 : vector<32x32xf32>
    %c1_i32_36 = arith.constant 1 : i32
    %85 = tpu.dynamic_rotate %84 by %c1_i32_36 dim 0 : vector<32x32xf32>, i32 -> vector<32x32xf32>
    %cst_37 = arith.constant 0.000000e+00 : f32
    %86 = vector.broadcast %cst_37 : f32 to vector<32x32xf32>
    %87 = arith.select %36, %85, %86 : vector<32x32xi1>, vector<32x32xf32>
    %c31_i32_38 = arith.constant 31 : i32
    %88 = tpu.dynamic_rotate %84 by %c31_i32_38 dim 0 : vector<32x32xf32>, i32 -> vector<32x32xf32>
    %cst_39 = arith.constant 0.000000e+00 : f32
    %89 = vector.broadcast %cst_39 : f32 to vector<32x32xf32>
    %90 = arith.select %38, %88, %89 : vector<32x32xi1>, vector<32x32xf32>
    %c0_40 = arith.constant 0 : index
    %c0_41 = arith.constant 0 : index
    %c0_42 = arith.constant 0 : index
    %91 = vector.load %arg10[%c0_40, %c0_41, %c0_42] : memref<12x32x32xf32, #tpu.memory_space<vmem>>, vector<1x32x32xf32>
    %92 = vector.shape_cast %91 : vector<1x32x32xf32> to vector<32x32xf32>
    %cst_43 = arith.constant dense<0.000000e+00> : vector<32x32xf32>
    %93 = tpu.matmul %87, %92, %cst_43 {dimension_numbers = #tpu.dot_dimension_numbers<[1], [0], [0], [1], [0, 0, 1, 1], [], []>} : vector<32x32xf32>, vector<32x32xf32>, vector<32x32xf32> -> vector<32x32xf32>
    %c1_44 = arith.constant 1 : index
    %c0_45 = arith.constant 0 : index
    %c0_46 = arith.constant 0 : index
    %94 = vector.load %arg10[%c1_44, %c0_45, %c0_46] : memref<12x32x32xf32, #tpu.memory_space<vmem>>, vector<1x32x32xf32>
    %95 = vector.shape_cast %94 : vector<1x32x32xf32> to vector<32x32xf32>
    %cst_47 = arith.constant dense<0.000000e+00> : vector<32x32xf32>
    %96 = tpu.matmul %84, %95, %cst_47 {dimension_numbers = #tpu.dot_dimension_numbers<[1], [0], [0], [1], [0, 0, 1, 1], [], []>} : vector<32x32xf32>, vector<32x32xf32>, vector<32x32xf32> -> vector<32x32xf32>
    %97 = arith.addf %93, %96 : vector<32x32xf32>
    %c2 = arith.constant 2 : index
    %c0_48 = arith.constant 0 : index
    %c0_49 = arith.constant 0 : index
    %98 = vector.load %arg10[%c2, %c0_48, %c0_49] : memref<12x32x32xf32, #tpu.memory_space<vmem>>, vector<1x32x32xf32>
    %99 = vector.shape_cast %98 : vector<1x32x32xf32> to vector<32x32xf32>
    %cst_50 = arith.constant dense<0.000000e+00> : vector<32x32xf32>
    %100 = tpu.matmul %90, %99, %cst_50 {dimension_numbers = #tpu.dot_dimension_numbers<[1], [0], [0], [1], [0, 0, 1, 1], [], []>} : vector<32x32xf32>, vector<32x32xf32>, vector<32x32xf32> -> vector<32x32xf32>
    %101 = arith.addf %97, %100 : vector<32x32xf32>
    %c0_51 = arith.constant 0 : index
    %c0_52 = arith.constant 0 : index
    %c0_53 = arith.constant 0 : index
    %102 = vector.load %arg11[%c0_51, %c0_52, %c0_53] : memref<4x1x32xf32, #tpu.memory_space<vmem>>, vector<1x1x32xf32>
    %103 = vector.shape_cast %102 : vector<1x1x32xf32> to vector<1x32xf32>
    %104 = vector.broadcast %103 : vector<1x32xf32> to vector<32x32xf32>
    %105 = arith.addf %101, %104 : vector<32x32xf32>
    %cst_54 = arith.constant 0.000000e+00 : f32
    %106 = vector.broadcast %cst_54 : f32 to vector<32x32xf32>
    %107 = arith.cmpf oge, %105, %106 : vector<32x32xf32>
    %108 = vector.broadcast %44 : f32 to vector<32x32xf32>
    %109 = arith.mulf %108, %105 : vector<32x32xf32>
    %110 = arith.select %107, %105, %109 : vector<32x32xi1>, vector<32x32xf32>
    %c0_55 = arith.constant 0 : index
    %c0_56 = arith.constant 0 : index
    %c0_57 = arith.constant 0 : index
    %111 = vector.load %arg12[%c0_55, %c0_56, %c0_57] : memref<4x1x32xf32, #tpu.memory_space<vmem>>, vector<1x1x32xf32>
    %112 = vector.shape_cast %111 : vector<1x1x32xf32> to vector<1x32xf32>
    %c0_58 = arith.constant 0 : index
    %c0_59 = arith.constant 0 : index
    %c0_60 = arith.constant 0 : index
    %113 = vector.load %arg13[%c0_58, %c0_59, %c0_60] : memref<4x1x32xf32, #tpu.memory_space<vmem>>, vector<1x1x32xf32>
    %114 = vector.shape_cast %113 : vector<1x1x32xf32> to vector<1x32xf32>
    %115 = vector.shape_cast %110 : vector<32x32xf32> to vector<1x32x32xf32>
    %cst_61 = arith.constant dense<0.000000e+00> : vector<1xf32>
    %116 = vector.multi_reduction <add>, %115, %cst_61 [1, 2] : vector<1x32x32xf32> to vector<1xf32>
    %117 = vector.shape_cast %116 : vector<1xf32> to vector<1x1x1xf32>
    %118 = vector.extract %117[0, 0, 0] : f32 from vector<1x1x1xf32>
    %cst_62 = arith.constant 1.024000e+03 : f32
    %119 = arith.divf %118, %cst_62 : f32
    %120 = arith.mulf %110, %110 : vector<32x32xf32>
    %121 = vector.shape_cast %120 : vector<32x32xf32> to vector<1x32x32xf32>
    %cst_63 = arith.constant dense<0.000000e+00> : vector<1xf32>
    %122 = vector.multi_reduction <add>, %121, %cst_63 [1, 2] : vector<1x32x32xf32> to vector<1xf32>
    %123 = vector.shape_cast %122 : vector<1xf32> to vector<1x1x1xf32>
    %124 = vector.extract %123[0, 0, 0] : f32 from vector<1x1x1xf32>
    %cst_64 = arith.constant 1.024000e+03 : f32
    %125 = arith.divf %124, %cst_64 : f32
    %126 = arith.mulf %119, %119 : f32
    %127 = arith.subf %125, %126 : f32
    %cst_65 = arith.constant 9.99999993E-9 : f32
    %128 = arith.addf %127, %cst_65 : f32
    %129 = math.rsqrt %128 : f32
    %130 = vector.broadcast %129 : f32 to vector<1x32xf32>
    %131 = arith.mulf %130, %112 : vector<1x32xf32>
    %132 = vector.broadcast %131 : vector<1x32xf32> to vector<32x32xf32>
    %133 = arith.mulf %110, %132 : vector<32x32xf32>
    %134 = vector.broadcast %119 : f32 to vector<1x32xf32>
    %135 = arith.mulf %134, %131 : vector<1x32xf32>
    %136 = arith.subf %114, %135 : vector<1x32xf32>
    %137 = vector.broadcast %136 : vector<1x32xf32> to vector<32x32xf32>
    %138 = arith.addf %133, %137 : vector<32x32xf32>
    %c0_66 = arith.constant 0 : index
    %c0_67 = arith.constant 0 : index
    %c0_68 = arith.constant 0 : index
    %139 = vector.load %arg14[%c0_66, %c0_67, %c0_68] : memref<4x32x64xf32, #tpu.memory_space<vmem>>, vector<1x32x64xf32>
    %140 = vector.shape_cast %139 : vector<1x32x64xf32> to vector<32x64xf32>
    %cst_69 = arith.constant dense<0.000000e+00> : vector<32x64xf32>
    %141 = tpu.matmul %138, %140, %cst_69 {dimension_numbers = #tpu.dot_dimension_numbers<[1], [0], [0], [1], [0, 0, 1, 1], [], []>} : vector<32x32xf32>, vector<32x64xf32>, vector<32x64xf32> -> vector<32x64xf32>
    %c0_70 = arith.constant 0 : index
    %c0_71 = arith.constant 0 : index
    %c0_72 = arith.constant 0 : index
    %142 = vector.load %arg15[%c0_70, %c0_71, %c0_72] : memref<4x1x64xf32, #tpu.memory_space<vmem>>, vector<1x1x64xf32>
    %143 = vector.shape_cast %142 : vector<1x1x64xf32> to vector<1x64xf32>
    %144 = vector.broadcast %143 : vector<1x64xf32> to vector<32x64xf32>
    %145 = arith.addf %141, %144 : vector<32x64xf32>
    %146 = vector.extract_strided_slice %145 {offsets = [0, 0], sizes = [32, 32], strides = [1, 1]} : vector<32x64xf32> to vector<32x32xf32>
    %147 = arith.addf %32, %146 : vector<32x32xf32>
    %148 = vector.extract_strided_slice %145 {offsets = [0, 32], sizes = [32, 32], strides = [1, 1]} : vector<32x64xf32> to vector<32x32xf32>
    %149 = arith.addf %33, %148 : vector<32x32xf32>
    %c2_73 = arith.constant 2 : index
    %150 = memref.load %arg18[%c2_73] : memref<9xf32, #tpu.memory_space<smem>>
    %c3 = arith.constant 3 : index
    %151 = memref.load %arg18[%c3] : memref<9xf32, #tpu.memory_space<smem>>
    %c1_74 = arith.constant 1 : index
    %c0_75 = arith.constant 0 : index
    %c0_76 = arith.constant 0 : index
    %152 = vector.load %arg6[%c1_74, %c0_75, %c0_76] : memref<4x32x32xf32, #tpu.memory_space<vmem>>, vector<1x32x32xf32>
    %153 = vector.shape_cast %152 : vector<1x32x32xf32> to vector<32x32xf32>
    %cst_77 = arith.constant dense<0.000000e+00> : vector<32x32xf32>
    %154 = tpu.matmul %147, %153, %cst_77 {dimension_numbers = #tpu.dot_dimension_numbers<[1], [0], [0], [1], [0, 0, 1, 1], [], []>} : vector<32x32xf32>, vector<32x32xf32>, vector<32x32xf32> -> vector<32x32xf32>
    %c1_78 = arith.constant 1 : index
    %c0_79 = arith.constant 0 : index
    %c0_80 = arith.constant 0 : index
    %155 = vector.load %arg7[%c1_78, %c0_79, %c0_80] : memref<4x1x32xf32, #tpu.memory_space<vmem>>, vector<1x1x32xf32>
    %156 = vector.shape_cast %155 : vector<1x1x32xf32> to vector<1x32xf32>
    %157 = vector.broadcast %156 : vector<1x32xf32> to vector<32x32xf32>
    %158 = arith.addf %154, %157 : vector<32x32xf32>
    %cst_81 = arith.constant 0.000000e+00 : f32
    %159 = vector.broadcast %cst_81 : f32 to vector<32x32xf32>
    %160 = arith.cmpf oge, %158, %159 : vector<32x32xf32>
    %161 = vector.broadcast %150 : f32 to vector<32x32xf32>
    %162 = arith.mulf %161, %158 : vector<32x32xf32>
    %163 = arith.select %160, %158, %162 : vector<32x32xi1>, vector<32x32xf32>
    %c1_82 = arith.constant 1 : index
    %c0_83 = arith.constant 0 : index
    %c0_84 = arith.constant 0 : index
    %164 = vector.load %arg8[%c1_82, %c0_83, %c0_84] : memref<4x1x32xf32, #tpu.memory_space<vmem>>, vector<1x1x32xf32>
    %165 = vector.shape_cast %164 : vector<1x1x32xf32> to vector<1x32xf32>
    %c1_85 = arith.constant 1 : index
    %c0_86 = arith.constant 0 : index
    %c0_87 = arith.constant 0 : index
    %166 = vector.load %arg9[%c1_85, %c0_86, %c0_87] : memref<4x1x32xf32, #tpu.memory_space<vmem>>, vector<1x1x32xf32>
    %167 = vector.shape_cast %166 : vector<1x1x32xf32> to vector<1x32xf32>
    %168 = vector.shape_cast %163 : vector<32x32xf32> to vector<1x32x32xf32>
    %cst_88 = arith.constant dense<0.000000e+00> : vector<1xf32>
    %169 = vector.multi_reduction <add>, %168, %cst_88 [1, 2] : vector<1x32x32xf32> to vector<1xf32>
    %170 = vector.shape_cast %169 : vector<1xf32> to vector<1x1x1xf32>
    %171 = vector.extract %170[0, 0, 0] : f32 from vector<1x1x1xf32>
    %cst_89 = arith.constant 1.024000e+03 : f32
    %172 = arith.divf %171, %cst_89 : f32
    %173 = arith.mulf %163, %163 : vector<32x32xf32>
    %174 = vector.shape_cast %173 : vector<32x32xf32> to vector<1x32x32xf32>
    %cst_90 = arith.constant dense<0.000000e+00> : vector<1xf32>
    %175 = vector.multi_reduction <add>, %174, %cst_90 [1, 2] : vector<1x32x32xf32> to vector<1xf32>
    %176 = vector.shape_cast %175 : vector<1xf32> to vector<1x1x1xf32>
    %177 = vector.extract %176[0, 0, 0] : f32 from vector<1x1x1xf32>
    %cst_91 = arith.constant 1.024000e+03 : f32
    %178 = arith.divf %177, %cst_91 : f32
    %179 = arith.mulf %172, %172 : f32
    %180 = arith.subf %178, %179 : f32
    %cst_92 = arith.constant 9.99999993E-9 : f32
    %181 = arith.addf %180, %cst_92 : f32
    %182 = math.rsqrt %181 : f32
    %183 = vector.broadcast %182 : f32 to vector<1x32xf32>
    %184 = arith.mulf %183, %165 : vector<1x32xf32>
    %185 = vector.broadcast %184 : vector<1x32xf32> to vector<32x32xf32>
    %186 = arith.mulf %163, %185 : vector<32x32xf32>
    %187 = vector.broadcast %172 : f32 to vector<1x32xf32>
    %188 = arith.mulf %187, %184 : vector<1x32xf32>
    %189 = arith.subf %167, %188 : vector<1x32xf32>
    %190 = vector.broadcast %189 : vector<1x32xf32> to vector<32x32xf32>
    %191 = arith.addf %186, %190 : vector<32x32xf32>
    %c2_i32_93 = arith.constant 2 : i32
    %192 = tpu.dynamic_rotate %191 by %c2_i32_93 dim 0 : vector<32x32xf32>, i32 -> vector<32x32xf32>
    %cst_94 = arith.constant 0.000000e+00 : f32
    %193 = vector.broadcast %cst_94 : f32 to vector<32x32xf32>
    %194 = arith.select %40, %192, %193 : vector<32x32xi1>, vector<32x32xf32>
    %c30_i32_95 = arith.constant 30 : i32
    %195 = tpu.dynamic_rotate %191 by %c30_i32_95 dim 0 : vector<32x32xf32>, i32 -> vector<32x32xf32>
    %cst_96 = arith.constant 0.000000e+00 : f32
    %196 = vector.broadcast %cst_96 : f32 to vector<32x32xf32>
    %197 = arith.select %42, %195, %196 : vector<32x32xi1>, vector<32x32xf32>
    %c3_97 = arith.constant 3 : index
    %c0_98 = arith.constant 0 : index
    %c0_99 = arith.constant 0 : index
    %198 = vector.load %arg10[%c3_97, %c0_98, %c0_99] : memref<12x32x32xf32, #tpu.memory_space<vmem>>, vector<1x32x32xf32>
    %199 = vector.shape_cast %198 : vector<1x32x32xf32> to vector<32x32xf32>
    %cst_100 = arith.constant dense<0.000000e+00> : vector<32x32xf32>
    %200 = tpu.matmul %194, %199, %cst_100 {dimension_numbers = #tpu.dot_dimension_numbers<[1], [0], [0], [1], [0, 0, 1, 1], [], []>} : vector<32x32xf32>, vector<32x32xf32>, vector<32x32xf32> -> vector<32x32xf32>
    %c4 = arith.constant 4 : index
    %c0_101 = arith.constant 0 : index
    %c0_102 = arith.constant 0 : index
    %201 = vector.load %arg10[%c4, %c0_101, %c0_102] : memref<12x32x32xf32, #tpu.memory_space<vmem>>, vector<1x32x32xf32>
    %202 = vector.shape_cast %201 : vector<1x32x32xf32> to vector<32x32xf32>
    %cst_103 = arith.constant dense<0.000000e+00> : vector<32x32xf32>
    %203 = tpu.matmul %191, %202, %cst_103 {dimension_numbers = #tpu.dot_dimension_numbers<[1], [0], [0], [1], [0, 0, 1, 1], [], []>} : vector<32x32xf32>, vector<32x32xf32>, vector<32x32xf32> -> vector<32x32xf32>
    %204 = arith.addf %200, %203 : vector<32x32xf32>
    %c5 = arith.constant 5 : index
    %c0_104 = arith.constant 0 : index
    %c0_105 = arith.constant 0 : index
    %205 = vector.load %arg10[%c5, %c0_104, %c0_105] : memref<12x32x32xf32, #tpu.memory_space<vmem>>, vector<1x32x32xf32>
    %206 = vector.shape_cast %205 : vector<1x32x32xf32> to vector<32x32xf32>
    %cst_106 = arith.constant dense<0.000000e+00> : vector<32x32xf32>
    %207 = tpu.matmul %197, %206, %cst_106 {dimension_numbers = #tpu.dot_dimension_numbers<[1], [0], [0], [1], [0, 0, 1, 1], [], []>} : vector<32x32xf32>, vector<32x32xf32>, vector<32x32xf32> -> vector<32x32xf32>
    %208 = arith.addf %204, %207 : vector<32x32xf32>
    %c1_107 = arith.constant 1 : index
    %c0_108 = arith.constant 0 : index
    %c0_109 = arith.constant 0 : index
    %209 = vector.load %arg11[%c1_107, %c0_108, %c0_109] : memref<4x1x32xf32, #tpu.memory_space<vmem>>, vector<1x1x32xf32>
    %210 = vector.shape_cast %209 : vector<1x1x32xf32> to vector<1x32xf32>
    %211 = vector.broadcast %210 : vector<1x32xf32> to vector<32x32xf32>
    %212 = arith.addf %208, %211 : vector<32x32xf32>
    %cst_110 = arith.constant 0.000000e+00 : f32
    %213 = vector.broadcast %cst_110 : f32 to vector<32x32xf32>
    %214 = arith.cmpf oge, %212, %213 : vector<32x32xf32>
    %215 = vector.broadcast %151 : f32 to vector<32x32xf32>
    %216 = arith.mulf %215, %212 : vector<32x32xf32>
    %217 = arith.select %214, %212, %216 : vector<32x32xi1>, vector<32x32xf32>
    %c1_111 = arith.constant 1 : index
    %c0_112 = arith.constant 0 : index
    %c0_113 = arith.constant 0 : index
    %218 = vector.load %arg12[%c1_111, %c0_112, %c0_113] : memref<4x1x32xf32, #tpu.memory_space<vmem>>, vector<1x1x32xf32>
    %219 = vector.shape_cast %218 : vector<1x1x32xf32> to vector<1x32xf32>
    %c1_114 = arith.constant 1 : index
    %c0_115 = arith.constant 0 : index
    %c0_116 = arith.constant 0 : index
    %220 = vector.load %arg13[%c1_114, %c0_115, %c0_116] : memref<4x1x32xf32, #tpu.memory_space<vmem>>, vector<1x1x32xf32>
    %221 = vector.shape_cast %220 : vector<1x1x32xf32> to vector<1x32xf32>
    %222 = vector.shape_cast %217 : vector<32x32xf32> to vector<1x32x32xf32>
    %cst_117 = arith.constant dense<0.000000e+00> : vector<1xf32>
    %223 = vector.multi_reduction <add>, %222, %cst_117 [1, 2] : vector<1x32x32xf32> to vector<1xf32>
    %224 = vector.shape_cast %223 : vector<1xf32> to vector<1x1x1xf32>
    %225 = vector.extract %224[0, 0, 0] : f32 from vector<1x1x1xf32>
    %cst_118 = arith.constant 1.024000e+03 : f32
    %226 = arith.divf %225, %cst_118 : f32
    %227 = arith.mulf %217, %217 : vector<32x32xf32>
    %228 = vector.shape_cast %227 : vector<32x32xf32> to vector<1x32x32xf32>
    %cst_119 = arith.constant dense<0.000000e+00> : vector<1xf32>
    %229 = vector.multi_reduction <add>, %228, %cst_119 [1, 2] : vector<1x32x32xf32> to vector<1xf32>
    %230 = vector.shape_cast %229 : vector<1xf32> to vector<1x1x1xf32>
    %231 = vector.extract %230[0, 0, 0] : f32 from vector<1x1x1xf32>
    %cst_120 = arith.constant 1.024000e+03 : f32
    %232 = arith.divf %231, %cst_120 : f32
    %233 = arith.mulf %226, %226 : f32
    %234 = arith.subf %232, %233 : f32
    %cst_121 = arith.constant 9.99999993E-9 : f32
    %235 = arith.addf %234, %cst_121 : f32
    %236 = math.rsqrt %235 : f32
    %237 = vector.broadcast %236 : f32 to vector<1x32xf32>
    %238 = arith.mulf %237, %219 : vector<1x32xf32>
    %239 = vector.broadcast %238 : vector<1x32xf32> to vector<32x32xf32>
    %240 = arith.mulf %217, %239 : vector<32x32xf32>
    %241 = vector.broadcast %226 : f32 to vector<1x32xf32>
    %242 = arith.mulf %241, %238 : vector<1x32xf32>
    %243 = arith.subf %221, %242 : vector<1x32xf32>
    %244 = vector.broadcast %243 : vector<1x32xf32> to vector<32x32xf32>
    %245 = arith.addf %240, %244 : vector<32x32xf32>
    %c1_122 = arith.constant 1 : index
    %c0_123 = arith.constant 0 : index
    %c0_124 = arith.constant 0 : index
    %246 = vector.load %arg14[%c1_122, %c0_123, %c0_124] : memref<4x32x64xf32, #tpu.memory_space<vmem>>, vector<1x32x64xf32>
    %247 = vector.shape_cast %246 : vector<1x32x64xf32> to vector<32x64xf32>
    %cst_125 = arith.constant dense<0.000000e+00> : vector<32x64xf32>
    %248 = tpu.matmul %245, %247, %cst_125 {dimension_numbers = #tpu.dot_dimension_numbers<[1], [0], [0], [1], [0, 0, 1, 1], [], []>} : vector<32x32xf32>, vector<32x64xf32>, vector<32x64xf32> -> vector<32x64xf32>
    %c1_126 = arith.constant 1 : index
    %c0_127 = arith.constant 0 : index
    %c0_128 = arith.constant 0 : index
    %249 = vector.load %arg15[%c1_126, %c0_127, %c0_128] : memref<4x1x64xf32, #tpu.memory_space<vmem>>, vector<1x1x64xf32>
    %250 = vector.shape_cast %249 : vector<1x1x64xf32> to vector<1x64xf32>
    %251 = vector.broadcast %250 : vector<1x64xf32> to vector<32x64xf32>
    %252 = arith.addf %248, %251 : vector<32x64xf32>
    %253 = vector.extract_strided_slice %252 {offsets = [0, 0], sizes = [32, 32], strides = [1, 1]} : vector<32x64xf32> to vector<32x32xf32>
    %254 = arith.addf %147, %253 : vector<32x32xf32>
    %255 = vector.extract_strided_slice %252 {offsets = [0, 32], sizes = [32, 32], strides = [1, 1]} : vector<32x64xf32> to vector<32x32xf32>
    %256 = arith.addf %149, %255 : vector<32x32xf32>
    %c4_129 = arith.constant 4 : index
    %257 = memref.load %arg18[%c4_129] : memref<9xf32, #tpu.memory_space<smem>>
    %c5_130 = arith.constant 5 : index
    %258 = memref.load %arg18[%c5_130] : memref<9xf32, #tpu.memory_space<smem>>
    %c2_131 = arith.constant 2 : index
    %c0_132 = arith.constant 0 : index
    %c0_133 = arith.constant 0 : index
    %259 = vector.load %arg6[%c2_131, %c0_132, %c0_133] : memref<4x32x32xf32, #tpu.memory_space<vmem>>, vector<1x32x32xf32>
    %260 = vector.shape_cast %259 : vector<1x32x32xf32> to vector<32x32xf32>
    %cst_134 = arith.constant dense<0.000000e+00> : vector<32x32xf32>
    %261 = tpu.matmul %254, %260, %cst_134 {dimension_numbers = #tpu.dot_dimension_numbers<[1], [0], [0], [1], [0, 0, 1, 1], [], []>} : vector<32x32xf32>, vector<32x32xf32>, vector<32x32xf32> -> vector<32x32xf32>
    %c2_135 = arith.constant 2 : index
    %c0_136 = arith.constant 0 : index
    %c0_137 = arith.constant 0 : index
    %262 = vector.load %arg7[%c2_135, %c0_136, %c0_137] : memref<4x1x32xf32, #tpu.memory_space<vmem>>, vector<1x1x32xf32>
    %263 = vector.shape_cast %262 : vector<1x1x32xf32> to vector<1x32xf32>
    %264 = vector.broadcast %263 : vector<1x32xf32> to vector<32x32xf32>
    %265 = arith.addf %261, %264 : vector<32x32xf32>
    %cst_138 = arith.constant 0.000000e+00 : f32
    %266 = vector.broadcast %cst_138 : f32 to vector<32x32xf32>
    %267 = arith.cmpf oge, %265, %266 : vector<32x32xf32>
    %268 = vector.broadcast %257 : f32 to vector<32x32xf32>
    %269 = arith.mulf %268, %265 : vector<32x32xf32>
    %270 = arith.select %267, %265, %269 : vector<32x32xi1>, vector<32x32xf32>
    %c2_139 = arith.constant 2 : index
    %c0_140 = arith.constant 0 : index
    %c0_141 = arith.constant 0 : index
    %271 = vector.load %arg8[%c2_139, %c0_140, %c0_141] : memref<4x1x32xf32, #tpu.memory_space<vmem>>, vector<1x1x32xf32>
    %272 = vector.shape_cast %271 : vector<1x1x32xf32> to vector<1x32xf32>
    %c2_142 = arith.constant 2 : index
    %c0_143 = arith.constant 0 : index
    %c0_144 = arith.constant 0 : index
    %273 = vector.load %arg9[%c2_142, %c0_143, %c0_144] : memref<4x1x32xf32, #tpu.memory_space<vmem>>, vector<1x1x32xf32>
    %274 = vector.shape_cast %273 : vector<1x1x32xf32> to vector<1x32xf32>
    %275 = vector.shape_cast %270 : vector<32x32xf32> to vector<1x32x32xf32>
    %cst_145 = arith.constant dense<0.000000e+00> : vector<1xf32>
    %276 = vector.multi_reduction <add>, %275, %cst_145 [1, 2] : vector<1x32x32xf32> to vector<1xf32>
    %277 = vector.shape_cast %276 : vector<1xf32> to vector<1x1x1xf32>
    %278 = vector.extract %277[0, 0, 0] : f32 from vector<1x1x1xf32>
    %cst_146 = arith.constant 1.024000e+03 : f32
    %279 = arith.divf %278, %cst_146 : f32
    %280 = arith.mulf %270, %270 : vector<32x32xf32>
    %281 = vector.shape_cast %280 : vector<32x32xf32> to vector<1x32x32xf32>
    %cst_147 = arith.constant dense<0.000000e+00> : vector<1xf32>
    %282 = vector.multi_reduction <add>, %281, %cst_147 [1, 2] : vector<1x32x32xf32> to vector<1xf32>
    %283 = vector.shape_cast %282 : vector<1xf32> to vector<1x1x1xf32>
    %284 = vector.extract %283[0, 0, 0] : f32 from vector<1x1x1xf32>
    %cst_148 = arith.constant 1.024000e+03 : f32
    %285 = arith.divf %284, %cst_148 : f32
    %286 = arith.mulf %279, %279 : f32
    %287 = arith.subf %285, %286 : f32
    %cst_149 = arith.constant 9.99999993E-9 : f32
    %288 = arith.addf %287, %cst_149 : f32
    %289 = math.rsqrt %288 : f32
    %290 = vector.broadcast %289 : f32 to vector<1x32xf32>
    %291 = arith.mulf %290, %272 : vector<1x32xf32>
    %292 = vector.broadcast %291 : vector<1x32xf32> to vector<32x32xf32>
    %293 = arith.mulf %270, %292 : vector<32x32xf32>
    %294 = vector.broadcast %279 : f32 to vector<1x32xf32>
    %295 = arith.mulf %294, %291 : vector<1x32xf32>
    %296 = arith.subf %274, %295 : vector<1x32xf32>
    %297 = vector.broadcast %296 : vector<1x32xf32> to vector<32x32xf32>
    %298 = arith.addf %293, %297 : vector<32x32xf32>
    %c1_i32_150 = arith.constant 1 : i32
    %299 = tpu.dynamic_rotate %298 by %c1_i32_150 dim 0 : vector<32x32xf32>, i32 -> vector<32x32xf32>
    %cst_151 = arith.constant 0.000000e+00 : f32
    %300 = vector.broadcast %cst_151 : f32 to vector<32x32xf32>
    %301 = arith.select %36, %299, %300 : vector<32x32xi1>, vector<32x32xf32>
    %c31_i32_152 = arith.constant 31 : i32
    %302 = tpu.dynamic_rotate %298 by %c31_i32_152 dim 0 : vector<32x32xf32>, i32 -> vector<32x32xf32>
    %cst_153 = arith.constant 0.000000e+00 : f32
    %303 = vector.broadcast %cst_153 : f32 to vector<32x32xf32>
    %304 = arith.select %38, %302, %303 : vector<32x32xi1>, vector<32x32xf32>
    %c6 = arith.constant 6 : index
    %c0_154 = arith.constant 0 : index
    %c0_155 = arith.constant 0 : index
    %305 = vector.load %arg10[%c6, %c0_154, %c0_155] : memref<12x32x32xf32, #tpu.memory_space<vmem>>, vector<1x32x32xf32>
    %306 = vector.shape_cast %305 : vector<1x32x32xf32> to vector<32x32xf32>
    %cst_156 = arith.constant dense<0.000000e+00> : vector<32x32xf32>
    %307 = tpu.matmul %301, %306, %cst_156 {dimension_numbers = #tpu.dot_dimension_numbers<[1], [0], [0], [1], [0, 0, 1, 1], [], []>} : vector<32x32xf32>, vector<32x32xf32>, vector<32x32xf32> -> vector<32x32xf32>
    %c7 = arith.constant 7 : index
    %c0_157 = arith.constant 0 : index
    %c0_158 = arith.constant 0 : index
    %308 = vector.load %arg10[%c7, %c0_157, %c0_158] : memref<12x32x32xf32, #tpu.memory_space<vmem>>, vector<1x32x32xf32>
    %309 = vector.shape_cast %308 : vector<1x32x32xf32> to vector<32x32xf32>
    %cst_159 = arith.constant dense<0.000000e+00> : vector<32x32xf32>
    %310 = tpu.matmul %298, %309, %cst_159 {dimension_numbers = #tpu.dot_dimension_numbers<[1], [0], [0], [1], [0, 0, 1, 1], [], []>} : vector<32x32xf32>, vector<32x32xf32>, vector<32x32xf32> -> vector<32x32xf32>
    %311 = arith.addf %307, %310 : vector<32x32xf32>
    %c8 = arith.constant 8 : index
    %c0_160 = arith.constant 0 : index
    %c0_161 = arith.constant 0 : index
    %312 = vector.load %arg10[%c8, %c0_160, %c0_161] : memref<12x32x32xf32, #tpu.memory_space<vmem>>, vector<1x32x32xf32>
    %313 = vector.shape_cast %312 : vector<1x32x32xf32> to vector<32x32xf32>
    %cst_162 = arith.constant dense<0.000000e+00> : vector<32x32xf32>
    %314 = tpu.matmul %304, %313, %cst_162 {dimension_numbers = #tpu.dot_dimension_numbers<[1], [0], [0], [1], [0, 0, 1, 1], [], []>} : vector<32x32xf32>, vector<32x32xf32>, vector<32x32xf32> -> vector<32x32xf32>
    %315 = arith.addf %311, %314 : vector<32x32xf32>
    %c2_163 = arith.constant 2 : index
    %c0_164 = arith.constant 0 : index
    %c0_165 = arith.constant 0 : index
    %316 = vector.load %arg11[%c2_163, %c0_164, %c0_165] : memref<4x1x32xf32, #tpu.memory_space<vmem>>, vector<1x1x32xf32>
    %317 = vector.shape_cast %316 : vector<1x1x32xf32> to vector<1x32xf32>
    %318 = vector.broadcast %317 : vector<1x32xf32> to vector<32x32xf32>
    %319 = arith.addf %315, %318 : vector<32x32xf32>
    %cst_166 = arith.constant 0.000000e+00 : f32
    %320 = vector.broadcast %cst_166 : f32 to vector<32x32xf32>
    %321 = arith.cmpf oge, %319, %320 : vector<32x32xf32>
    %322 = vector.broadcast %258 : f32 to vector<32x32xf32>
    %323 = arith.mulf %322, %319 : vector<32x32xf32>
    %324 = arith.select %321, %319, %323 : vector<32x32xi1>, vector<32x32xf32>
    %c2_167 = arith.constant 2 : index
    %c0_168 = arith.constant 0 : index
    %c0_169 = arith.constant 0 : index
    %325 = vector.load %arg12[%c2_167, %c0_168, %c0_169] : memref<4x1x32xf32, #tpu.memory_space<vmem>>, vector<1x1x32xf32>
    %326 = vector.shape_cast %325 : vector<1x1x32xf32> to vector<1x32xf32>
    %c2_170 = arith.constant 2 : index
    %c0_171 = arith.constant 0 : index
    %c0_172 = arith.constant 0 : index
    %327 = vector.load %arg13[%c2_170, %c0_171, %c0_172] : memref<4x1x32xf32, #tpu.memory_space<vmem>>, vector<1x1x32xf32>
    %328 = vector.shape_cast %327 : vector<1x1x32xf32> to vector<1x32xf32>
    %329 = vector.shape_cast %324 : vector<32x32xf32> to vector<1x32x32xf32>
    %cst_173 = arith.constant dense<0.000000e+00> : vector<1xf32>
    %330 = vector.multi_reduction <add>, %329, %cst_173 [1, 2] : vector<1x32x32xf32> to vector<1xf32>
    %331 = vector.shape_cast %330 : vector<1xf32> to vector<1x1x1xf32>
    %332 = vector.extract %331[0, 0, 0] : f32 from vector<1x1x1xf32>
    %cst_174 = arith.constant 1.024000e+03 : f32
    %333 = arith.divf %332, %cst_174 : f32
    %334 = arith.mulf %324, %324 : vector<32x32xf32>
    %335 = vector.shape_cast %334 : vector<32x32xf32> to vector<1x32x32xf32>
    %cst_175 = arith.constant dense<0.000000e+00> : vector<1xf32>
    %336 = vector.multi_reduction <add>, %335, %cst_175 [1, 2] : vector<1x32x32xf32> to vector<1xf32>
    %337 = vector.shape_cast %336 : vector<1xf32> to vector<1x1x1xf32>
    %338 = vector.extract %337[0, 0, 0] : f32 from vector<1x1x1xf32>
    %cst_176 = arith.constant 1.024000e+03 : f32
    %339 = arith.divf %338, %cst_176 : f32
    %340 = arith.mulf %333, %333 : f32
    %341 = arith.subf %339, %340 : f32
    %cst_177 = arith.constant 9.99999993E-9 : f32
    %342 = arith.addf %341, %cst_177 : f32
    %343 = math.rsqrt %342 : f32
    %344 = vector.broadcast %343 : f32 to vector<1x32xf32>
    %345 = arith.mulf %344, %326 : vector<1x32xf32>
    %346 = vector.broadcast %345 : vector<1x32xf32> to vector<32x32xf32>
    %347 = arith.mulf %324, %346 : vector<32x32xf32>
    %348 = vector.broadcast %333 : f32 to vector<1x32xf32>
    %349 = arith.mulf %348, %345 : vector<1x32xf32>
    %350 = arith.subf %328, %349 : vector<1x32xf32>
    %351 = vector.broadcast %350 : vector<1x32xf32> to vector<32x32xf32>
    %352 = arith.addf %347, %351 : vector<32x32xf32>
    %c2_178 = arith.constant 2 : index
    %c0_179 = arith.constant 0 : index
    %c0_180 = arith.constant 0 : index
    %353 = vector.load %arg14[%c2_178, %c0_179, %c0_180] : memref<4x32x64xf32, #tpu.memory_space<vmem>>, vector<1x32x64xf32>
    %354 = vector.shape_cast %353 : vector<1x32x64xf32> to vector<32x64xf32>
    %cst_181 = arith.constant dense<0.000000e+00> : vector<32x64xf32>
    %355 = tpu.matmul %352, %354, %cst_181 {dimension_numbers = #tpu.dot_dimension_numbers<[1], [0], [0], [1], [0, 0, 1, 1], [], []>} : vector<32x32xf32>, vector<32x64xf32>, vector<32x64xf32> -> vector<32x64xf32>
    %c2_182 = arith.constant 2 : index
    %c0_183 = arith.constant 0 : index
    %c0_184 = arith.constant 0 : index
    %356 = vector.load %arg15[%c2_182, %c0_183, %c0_184] : memref<4x1x64xf32, #tpu.memory_space<vmem>>, vector<1x1x64xf32>
    %357 = vector.shape_cast %356 : vector<1x1x64xf32> to vector<1x64xf32>
    %358 = vector.broadcast %357 : vector<1x64xf32> to vector<32x64xf32>
    %359 = arith.addf %355, %358 : vector<32x64xf32>
    %360 = vector.extract_strided_slice %359 {offsets = [0, 0], sizes = [32, 32], strides = [1, 1]} : vector<32x64xf32> to vector<32x32xf32>
    %361 = arith.addf %254, %360 : vector<32x32xf32>
    %362 = vector.extract_strided_slice %359 {offsets = [0, 32], sizes = [32, 32], strides = [1, 1]} : vector<32x64xf32> to vector<32x32xf32>
    %363 = arith.addf %256, %362 : vector<32x32xf32>
    %c6_185 = arith.constant 6 : index
    %364 = memref.load %arg18[%c6_185] : memref<9xf32, #tpu.memory_space<smem>>
    %c7_186 = arith.constant 7 : index
    %365 = memref.load %arg18[%c7_186] : memref<9xf32, #tpu.memory_space<smem>>
    %c3_187 = arith.constant 3 : index
    %c0_188 = arith.constant 0 : index
    %c0_189 = arith.constant 0 : index
    %366 = vector.load %arg6[%c3_187, %c0_188, %c0_189] : memref<4x32x32xf32, #tpu.memory_space<vmem>>, vector<1x32x32xf32>
    %367 = vector.shape_cast %366 : vector<1x32x32xf32> to vector<32x32xf32>
    %cst_190 = arith.constant dense<0.000000e+00> : vector<32x32xf32>
    %368 = tpu.matmul %361, %367, %cst_190 {dimension_numbers = #tpu.dot_dimension_numbers<[1], [0], [0], [1], [0, 0, 1, 1], [], []>} : vector<32x32xf32>, vector<32x32xf32>, vector<32x32xf32> -> vector<32x32xf32>
    %c3_191 = arith.constant 3 : index
    %c0_192 = arith.constant 0 : index
    %c0_193 = arith.constant 0 : index
    %369 = vector.load %arg7[%c3_191, %c0_192, %c0_193] : memref<4x1x32xf32, #tpu.memory_space<vmem>>, vector<1x1x32xf32>
    %370 = vector.shape_cast %369 : vector<1x1x32xf32> to vector<1x32xf32>
    %371 = vector.broadcast %370 : vector<1x32xf32> to vector<32x32xf32>
    %372 = arith.addf %368, %371 : vector<32x32xf32>
    %cst_194 = arith.constant 0.000000e+00 : f32
    %373 = vector.broadcast %cst_194 : f32 to vector<32x32xf32>
    %374 = arith.cmpf oge, %372, %373 : vector<32x32xf32>
    %375 = vector.broadcast %364 : f32 to vector<32x32xf32>
    %376 = arith.mulf %375, %372 : vector<32x32xf32>
    %377 = arith.select %374, %372, %376 : vector<32x32xi1>, vector<32x32xf32>
    %c3_195 = arith.constant 3 : index
    %c0_196 = arith.constant 0 : index
    %c0_197 = arith.constant 0 : index
    %378 = vector.load %arg8[%c3_195, %c0_196, %c0_197] : memref<4x1x32xf32, #tpu.memory_space<vmem>>, vector<1x1x32xf32>
    %379 = vector.shape_cast %378 : vector<1x1x32xf32> to vector<1x32xf32>
    %c3_198 = arith.constant 3 : index
    %c0_199 = arith.constant 0 : index
    %c0_200 = arith.constant 0 : index
    %380 = vector.load %arg9[%c3_198, %c0_199, %c0_200] : memref<4x1x32xf32, #tpu.memory_space<vmem>>, vector<1x1x32xf32>
    %381 = vector.shape_cast %380 : vector<1x1x32xf32> to vector<1x32xf32>
    %382 = vector.shape_cast %377 : vector<32x32xf32> to vector<1x32x32xf32>
    %cst_201 = arith.constant dense<0.000000e+00> : vector<1xf32>
    %383 = vector.multi_reduction <add>, %382, %cst_201 [1, 2] : vector<1x32x32xf32> to vector<1xf32>
    %384 = vector.shape_cast %383 : vector<1xf32> to vector<1x1x1xf32>
    %385 = vector.extract %384[0, 0, 0] : f32 from vector<1x1x1xf32>
    %cst_202 = arith.constant 1.024000e+03 : f32
    %386 = arith.divf %385, %cst_202 : f32
    %387 = arith.mulf %377, %377 : vector<32x32xf32>
    %388 = vector.shape_cast %387 : vector<32x32xf32> to vector<1x32x32xf32>
    %cst_203 = arith.constant dense<0.000000e+00> : vector<1xf32>
    %389 = vector.multi_reduction <add>, %388, %cst_203 [1, 2] : vector<1x32x32xf32> to vector<1xf32>
    %390 = vector.shape_cast %389 : vector<1xf32> to vector<1x1x1xf32>
    %391 = vector.extract %390[0, 0, 0] : f32 from vector<1x1x1xf32>
    %cst_204 = arith.constant 1.024000e+03 : f32
    %392 = arith.divf %391, %cst_204 : f32
    %393 = arith.mulf %386, %386 : f32
    %394 = arith.subf %392, %393 : f32
    %cst_205 = arith.constant 9.99999993E-9 : f32
    %395 = arith.addf %394, %cst_205 : f32
    %396 = math.rsqrt %395 : f32
    %397 = vector.broadcast %396 : f32 to vector<1x32xf32>
    %398 = arith.mulf %397, %379 : vector<1x32xf32>
    %399 = vector.broadcast %398 : vector<1x32xf32> to vector<32x32xf32>
    %400 = arith.mulf %377, %399 : vector<32x32xf32>
    %401 = vector.broadcast %386 : f32 to vector<1x32xf32>
    %402 = arith.mulf %401, %398 : vector<1x32xf32>
    %403 = arith.subf %381, %402 : vector<1x32xf32>
    %404 = vector.broadcast %403 : vector<1x32xf32> to vector<32x32xf32>
    %405 = arith.addf %400, %404 : vector<32x32xf32>
    %c2_i32_206 = arith.constant 2 : i32
    %406 = tpu.dynamic_rotate %405 by %c2_i32_206 dim 0 : vector<32x32xf32>, i32 -> vector<32x32xf32>
    %cst_207 = arith.constant 0.000000e+00 : f32
    %407 = vector.broadcast %cst_207 : f32 to vector<32x32xf32>
    %408 = arith.select %40, %406, %407 : vector<32x32xi1>, vector<32x32xf32>
    %c30_i32_208 = arith.constant 30 : i32
    %409 = tpu.dynamic_rotate %405 by %c30_i32_208 dim 0 : vector<32x32xf32>, i32 -> vector<32x32xf32>
    %cst_209 = arith.constant 0.000000e+00 : f32
    %410 = vector.broadcast %cst_209 : f32 to vector<32x32xf32>
    %411 = arith.select %42, %409, %410 : vector<32x32xi1>, vector<32x32xf32>
    %c9 = arith.constant 9 : index
    %c0_210 = arith.constant 0 : index
    %c0_211 = arith.constant 0 : index
    %412 = vector.load %arg10[%c9, %c0_210, %c0_211] : memref<12x32x32xf32, #tpu.memory_space<vmem>>, vector<1x32x32xf32>
    %413 = vector.shape_cast %412 : vector<1x32x32xf32> to vector<32x32xf32>
    %cst_212 = arith.constant dense<0.000000e+00> : vector<32x32xf32>
    %414 = tpu.matmul %408, %413, %cst_212 {dimension_numbers = #tpu.dot_dimension_numbers<[1], [0], [0], [1], [0, 0, 1, 1], [], []>} : vector<32x32xf32>, vector<32x32xf32>, vector<32x32xf32> -> vector<32x32xf32>
    %c10 = arith.constant 10 : index
    %c0_213 = arith.constant 0 : index
    %c0_214 = arith.constant 0 : index
    %415 = vector.load %arg10[%c10, %c0_213, %c0_214] : memref<12x32x32xf32, #tpu.memory_space<vmem>>, vector<1x32x32xf32>
    %416 = vector.shape_cast %415 : vector<1x32x32xf32> to vector<32x32xf32>
    %cst_215 = arith.constant dense<0.000000e+00> : vector<32x32xf32>
    %417 = tpu.matmul %405, %416, %cst_215 {dimension_numbers = #tpu.dot_dimension_numbers<[1], [0], [0], [1], [0, 0, 1, 1], [], []>} : vector<32x32xf32>, vector<32x32xf32>, vector<32x32xf32> -> vector<32x32xf32>
    %418 = arith.addf %414, %417 : vector<32x32xf32>
    %c11 = arith.constant 11 : index
    %c0_216 = arith.constant 0 : index
    %c0_217 = arith.constant 0 : index
    %419 = vector.load %arg10[%c11, %c0_216, %c0_217] : memref<12x32x32xf32, #tpu.memory_space<vmem>>, vector<1x32x32xf32>
    %420 = vector.shape_cast %419 : vector<1x32x32xf32> to vector<32x32xf32>
    %cst_218 = arith.constant dense<0.000000e+00> : vector<32x32xf32>
    %421 = tpu.matmul %411, %420, %cst_218 {dimension_numbers = #tpu.dot_dimension_numbers<[1], [0], [0], [1], [0, 0, 1, 1], [], []>} : vector<32x32xf32>, vector<32x32xf32>, vector<32x32xf32> -> vector<32x32xf32>
    %422 = arith.addf %418, %421 : vector<32x32xf32>
    %c3_219 = arith.constant 3 : index
    %c0_220 = arith.constant 0 : index
    %c0_221 = arith.constant 0 : index
    %423 = vector.load %arg11[%c3_219, %c0_220, %c0_221] : memref<4x1x32xf32, #tpu.memory_space<vmem>>, vector<1x1x32xf32>
    %424 = vector.shape_cast %423 : vector<1x1x32xf32> to vector<1x32xf32>
    %425 = vector.broadcast %424 : vector<1x32xf32> to vector<32x32xf32>
    %426 = arith.addf %422, %425 : vector<32x32xf32>
    %cst_222 = arith.constant 0.000000e+00 : f32
    %427 = vector.broadcast %cst_222 : f32 to vector<32x32xf32>
    %428 = arith.cmpf oge, %426, %427 : vector<32x32xf32>
    %429 = vector.broadcast %365 : f32 to vector<32x32xf32>
    %430 = arith.mulf %429, %426 : vector<32x32xf32>
    %431 = arith.select %428, %426, %430 : vector<32x32xi1>, vector<32x32xf32>
    %c3_223 = arith.constant 3 : index
    %c0_224 = arith.constant 0 : index
    %c0_225 = arith.constant 0 : index
    %432 = vector.load %arg12[%c3_223, %c0_224, %c0_225] : memref<4x1x32xf32, #tpu.memory_space<vmem>>, vector<1x1x32xf32>
    %433 = vector.shape_cast %432 : vector<1x1x32xf32> to vector<1x32xf32>
    %c3_226 = arith.constant 3 : index
    %c0_227 = arith.constant 0 : index
    %c0_228 = arith.constant 0 : index
    %434 = vector.load %arg13[%c3_226, %c0_227, %c0_228] : memref<4x1x32xf32, #tpu.memory_space<vmem>>, vector<1x1x32xf32>
    %435 = vector.shape_cast %434 : vector<1x1x32xf32> to vector<1x32xf32>
    %436 = vector.shape_cast %431 : vector<32x32xf32> to vector<1x32x32xf32>
    %cst_229 = arith.constant dense<0.000000e+00> : vector<1xf32>
    %437 = vector.multi_reduction <add>, %436, %cst_229 [1, 2] : vector<1x32x32xf32> to vector<1xf32>
    %438 = vector.shape_cast %437 : vector<1xf32> to vector<1x1x1xf32>
    %439 = vector.extract %438[0, 0, 0] : f32 from vector<1x1x1xf32>
    %cst_230 = arith.constant 1.024000e+03 : f32
    %440 = arith.divf %439, %cst_230 : f32
    %441 = arith.mulf %431, %431 : vector<32x32xf32>
    %442 = vector.shape_cast %441 : vector<32x32xf32> to vector<1x32x32xf32>
    %cst_231 = arith.constant dense<0.000000e+00> : vector<1xf32>
    %443 = vector.multi_reduction <add>, %442, %cst_231 [1, 2] : vector<1x32x32xf32> to vector<1xf32>
    %444 = vector.shape_cast %443 : vector<1xf32> to vector<1x1x1xf32>
    %445 = vector.extract %444[0, 0, 0] : f32 from vector<1x1x1xf32>
    %cst_232 = arith.constant 1.024000e+03 : f32
    %446 = arith.divf %445, %cst_232 : f32
    %447 = arith.mulf %440, %440 : f32
    %448 = arith.subf %446, %447 : f32
    %cst_233 = arith.constant 9.99999993E-9 : f32
    %449 = arith.addf %448, %cst_233 : f32
    %450 = math.rsqrt %449 : f32
    %451 = vector.broadcast %450 : f32 to vector<1x32xf32>
    %452 = arith.mulf %451, %433 : vector<1x32xf32>
    %453 = vector.broadcast %452 : vector<1x32xf32> to vector<32x32xf32>
    %454 = arith.mulf %431, %453 : vector<32x32xf32>
    %455 = vector.broadcast %440 : f32 to vector<1x32xf32>
    %456 = arith.mulf %455, %452 : vector<1x32xf32>
    %457 = arith.subf %435, %456 : vector<1x32xf32>
    %458 = vector.broadcast %457 : vector<1x32xf32> to vector<32x32xf32>
    %459 = arith.addf %454, %458 : vector<32x32xf32>
    %c3_234 = arith.constant 3 : index
    %c0_235 = arith.constant 0 : index
    %c0_236 = arith.constant 0 : index
    %460 = vector.load %arg14[%c3_234, %c0_235, %c0_236] : memref<4x32x64xf32, #tpu.memory_space<vmem>>, vector<1x32x64xf32>
    %461 = vector.shape_cast %460 : vector<1x32x64xf32> to vector<32x64xf32>
    %cst_237 = arith.constant dense<0.000000e+00> : vector<32x64xf32>
    %462 = tpu.matmul %459, %461, %cst_237 {dimension_numbers = #tpu.dot_dimension_numbers<[1], [0], [0], [1], [0, 0, 1, 1], [], []>} : vector<32x32xf32>, vector<32x64xf32>, vector<32x64xf32> -> vector<32x64xf32>
    %c3_238 = arith.constant 3 : index
    %c0_239 = arith.constant 0 : index
    %c0_240 = arith.constant 0 : index
    %463 = vector.load %arg15[%c3_238, %c0_239, %c0_240] : memref<4x1x64xf32, #tpu.memory_space<vmem>>, vector<1x1x64xf32>
    %464 = vector.shape_cast %463 : vector<1x1x64xf32> to vector<1x64xf32>
    %465 = vector.broadcast %464 : vector<1x64xf32> to vector<32x64xf32>
    %466 = arith.addf %462, %465 : vector<32x64xf32>
    %467 = vector.extract_strided_slice %466 {offsets = [0, 32], sizes = [32, 32], strides = [1, 1]} : vector<32x64xf32> to vector<32x32xf32>
    %468 = arith.addf %363, %467 : vector<32x32xf32>
    %c8_241 = arith.constant 8 : index
    %469 = memref.load %arg18[%c8_241] : memref<9xf32, #tpu.memory_space<smem>>
    %cst_242 = arith.constant 0.000000e+00 : f32
    %470 = vector.broadcast %cst_242 : f32 to vector<32x32xf32>
    %471 = arith.cmpf oge, %468, %470 : vector<32x32xf32>
    %472 = vector.broadcast %469 : f32 to vector<32x32xf32>
    %473 = arith.mulf %472, %468 : vector<32x32xf32>
    %474 = arith.select %471, %468, %473 : vector<32x32xi1>, vector<32x32xf32>
    %c0_243 = arith.constant 0 : index
    %c0_244 = arith.constant 0 : index
    %475 = vector.load %arg16[%c0_243, %c0_244] : memref<32x16xf32, #tpu.memory_space<vmem>>, vector<32x16xf32>
    %cst_245 = arith.constant dense<0.000000e+00> : vector<32x16xf32>
    %476 = tpu.matmul %474, %475, %cst_245 {dimension_numbers = #tpu.dot_dimension_numbers<[1], [0], [0], [1], [0, 0, 1, 1], [], []>} : vector<32x32xf32>, vector<32x16xf32>, vector<32x16xf32> -> vector<32x16xf32>
    %c0_246 = arith.constant 0 : index
    %c0_247 = arith.constant 0 : index
    %477 = vector.load %arg17[%c0_246, %c0_247] : memref<1x16xf32, #tpu.memory_space<vmem>>, vector<1x16xf32>
    %478 = vector.broadcast %477 : vector<1x16xf32> to vector<32x16xf32>
    %479 = arith.addf %476, %478 : vector<32x16xf32>
    %480 = arith.negf %479 : vector<32x16xf32>
    %481 = math.exp %480 : vector<32x16xf32>
    %cst_248 = arith.constant 1.000000e+00 : f32
    %482 = vector.broadcast %cst_248 : f32 to vector<32x16xf32>
    %483 = arith.addf %482, %481 : vector<32x16xf32>
    %484 = arith.divf %482, %483 : vector<32x16xf32>
    %c0_249 = arith.constant 0 : index
    %c0_250 = arith.constant 0 : index
    %c0_251 = arith.constant 0 : index
    %485 = vector.load %arg19[%c0_249, %c0_250, %c0_251] : memref<1x32x16xf32, #tpu.memory_space<vmem>>, vector<1x32x16xf32>
    %486 = vector.shape_cast %485 : vector<1x32x16xf32> to vector<32x16xf32>
    %487 = vector.shape_cast %484 : vector<32x16xf32> to vector<1x32x16xf32>
    tpu.vector_store %arg19[%c0_249, %c0_250, %c0_251], %487 {strides = array<i32>} : memref<1x32x16xf32, #tpu.memory_space<vmem>>, vector<1x32x16xf32>,
    return
  }
  func.func @transform_0(%arg0: i32) -> (i32, i32, i32) {
    %c0_i32 = arith.constant 0 : i32
    %c0_i32_0 = arith.constant 0 : i32
    %c0_i32_1 = arith.constant 0 : i32
    return %arg0, %c0_i32, %c0_i32_0 : i32, i32, i32
  }
  func.func @transform_1(%arg0: i32) -> (i32, i32) {
    %c0_i32 = arith.constant 0 : i32
    %c0_i32_0 = arith.constant 0 : i32
    %c0_i32_1 = arith.constant 0 : i32
    return %c0_i32, %c0_i32_0 : i32, i32
  }
  func.func @transform_2(%arg0: i32) -> (i32, i32) {
    %c0_i32 = arith.constant 0 : i32
    %c0_i32_0 = arith.constant 0 : i32
    %c0_i32_1 = arith.constant 0 : i32
    return %c0_i32, %c0_i32_0 : i32, i32
  }
  func.func @transform_3(%arg0: i32) -> (i32, i32) {
    %c0_i32 = arith.constant 0 : i32
    %c0_i32_0 = arith.constant 0 : i32
    %c0_i32_1 = arith.constant 0 : i32
    return %c0_i32, %c0_i32_0 : i32, i32
  }
  func.func @transform_4(%arg0: i32) -> (i32, i32) {
    %c0_i32 = arith.constant 0 : i32
    %c0_i32_0 = arith.constant 0 : i32
    %c0_i32_1 = arith.constant 0 : i32
    return %c0_i32, %c0_i32_0 : i32, i32
  }
  func.func @transform_5(%arg0: i32) -> (i32, i32, i32) {
    %c0_i32 = arith.constant 0 : i32
    %c0_i32_0 = arith.constant 0 : i32
    %c0_i32_1 = arith.constant 0 : i32
    %c0_i32_2 = arith.constant 0 : i32
    return %c0_i32, %c0_i32_0, %c0_i32_1 : i32, i32, i32
  }
  func.func @transform_6(%arg0: i32) -> (i32, i32, i32) {
    %c0_i32 = arith.constant 0 : i32
    %c0_i32_0 = arith.constant 0 : i32
    %c0_i32_1 = arith.constant 0 : i32
    %c0_i32_2 = arith.constant 0 : i32
    return %c0_i32, %c0_i32_0, %c0_i32_1 : i32, i32, i32
  }
  func.func @transform_7(%arg0: i32) -> (i32, i32, i32) {
    %c0_i32 = arith.constant 0 : i32
    %c0_i32_0 = arith.constant 0 : i32
    %c0_i32_1 = arith.constant 0 : i32
    %c0_i32_2 = arith.constant 0 : i32
    return %c0_i32, %c0_i32_0, %c0_i32_1 : i32, i32, i32
  }
  func.func @transform_8(%arg0: i32) -> (i32, i32, i32) {
    %c0_i32 = arith.constant 0 : i32
    %c0_i32_0 = arith.constant 0 : i32
    %c0_i32_1 = arith.constant 0 : i32
    %c0_i32_2 = arith.constant 0 : i32
    return %c0_i32, %c0_i32_0, %c0_i32_1 : i32, i32, i32
  }
  func.func @transform_9(%arg0: i32) -> (i32, i32, i32) {
    %c0_i32 = arith.constant 0 : i32
    %c0_i32_0 = arith.constant 0 : i32
    %c0_i32_1 = arith.constant 0 : i32
    %c0_i32_2 = arith.constant 0 : i32
    return %c0_i32, %c0_i32_0, %c0_i32_1 : i32, i32, i32
  }
  func.func @transform_10(%arg0: i32) -> (i32, i32, i32) {
    %c0_i32 = arith.constant 0 : i32
    %c0_i32_0 = arith.constant 0 : i32
    %c0_i32_1 = arith.constant 0 : i32
    %c0_i32_2 = arith.constant 0 : i32
    return %c0_i32, %c0_i32_0, %c0_i32_1 : i32, i32, i32
  }
  func.func @transform_11(%arg0: i32) -> (i32, i32, i32) {
    %c0_i32 = arith.constant 0 : i32
    %c0_i32_0 = arith.constant 0 : i32
    %c0_i32_1 = arith.constant 0 : i32
    %c0_i32_2 = arith.constant 0 : i32
    return %c0_i32, %c0_i32_0, %c0_i32_1 : i32, i32, i32
  }
  func.func @transform_12(%arg0: i32) -> (i32, i32, i32) {
    %c0_i32 = arith.constant 0 : i32
    %c0_i32_0 = arith.constant 0 : i32
    %c0_i32_1 = arith.constant 0 : i32
    %c0_i32_2 = arith.constant 0 : i32
    return %c0_i32, %c0_i32_0, %c0_i32_1 : i32, i32, i32
  }
  func.func @transform_13(%arg0: i32) -> (i32, i32, i32) {
    %c0_i32 = arith.constant 0 : i32
    %c0_i32_0 = arith.constant 0 : i32
    %c0_i32_1 = arith.constant 0 : i32
    %c0_i32_2 = arith.constant 0 : i32
    return %c0_i32, %c0_i32_0, %c0_i32_1 : i32, i32, i32
  }
  func.func @transform_14(%arg0: i32) -> (i32, i32, i32) {
    %c0_i32 = arith.constant 0 : i32
    %c0_i32_0 = arith.constant 0 : i32
    %c0_i32_1 = arith.constant 0 : i32
    %c0_i32_2 = arith.constant 0 : i32
    return %c0_i32, %c0_i32_0, %c0_i32_1 : i32, i32, i32
  }
  func.func @transform_15(%arg0: i32) -> (i32, i32) {
    %c0_i32 = arith.constant 0 : i32
    %c0_i32_0 = arith.constant 0 : i32
    %c0_i32_1 = arith.constant 0 : i32
    return %c0_i32, %c0_i32_0 : i32, i32
  }
  func.func @transform_16(%arg0: i32) -> (i32, i32) {
    %c0_i32 = arith.constant 0 : i32
    %c0_i32_0 = arith.constant 0 : i32
    %c0_i32_1 = arith.constant 0 : i32
    return %c0_i32, %c0_i32_0 : i32, i32
  }
  func.func @transform_17(%arg0: i32) -> i32 {
    %c0_i32 = arith.constant 0 : i32
    %c0_i32_0 = arith.constant 0 : i32
    return %c0_i32 : i32
  }
  func.func @transform_18(%arg0: i32) -> (i32, i32, i32) {
    %c0_i32 = arith.constant 0 : i32
    %c0_i32_0 = arith.constant 0 : i32
    %c0_i32_1 = arith.constant 0 : i32
    return %arg0, %c0_i32, %c0_i32_0 : i32, i32, i32
  }
}

</mosaic_0001>

<llo_original>
// kernel: tpu_custom_call.1
$region0: #{tpu_custom_call.1}
  #allocation0 [shape = 'u32[]', space=smem, size = 0x4, offset = 0x4, fixed_abs, tag = 'smem constant byte address 0x4 - core index']
  #allocation1 [shape = 'u32[72,128]{1,0:T(1,128)}', space=vmem, size = 0x9000, scoped, tag = 'internal scratch']
  %s0 = inlined_call_operand.vmem [shape: f32[2,32,16], index: 0, kind: input, shape index: {}]
  %s1 = inlined_call_operand.vmem [shape: f32[1,16], index: 1, kind: input, shape index: {}]
  %s2 = inlined_call_operand.vmem [shape: f32[1,16], index: 2, kind: input, shape index: {}]
  %s3 = inlined_call_operand.vmem [shape: f32[16,32], index: 3, kind: input, shape index: {}]
  %s4 = inlined_call_operand.vmem [shape: f32[1,32], index: 4, kind: input, shape index: {}]
  %s5 = inlined_call_operand.hbm [shape: f32[4,32,32], index: 5, kind: input, shape index: {}]
  %s6 = inlined_call_operand.vmem [shape: f32[4,1,32], index: 6, kind: input, shape index: {}]
  %s7 = inlined_call_operand.vmem [shape: f32[4,1,32], index: 7, kind: input, shape index: {}]
  %s8 = inlined_call_operand.vmem [shape: f32[4,1,32], index: 8, kind: input, shape index: {}]
  %s9 = inlined_call_operand.hbm [shape: f32[12,32,32], index: 9, kind: input, shape index: {}]
  %s10 = inlined_call_operand.vmem [shape: f32[4,1,32], index: 10, kind: input, shape index: {}]
  %s11 = inlined_call_operand.vmem [shape: f32[4,1,32], index: 11, kind: input, shape index: {}]
  %s12 = inlined_call_operand.vmem [shape: f32[4,1,32], index: 12, kind: input, shape index: {}]
  %s13 = inlined_call_operand.hbm [shape: f32[4,32,64], index: 13, kind: input, shape index: {}]
  %s14 = inlined_call_operand.vmem [shape: f32[4,1,64], index: 14, kind: input, shape index: {}]
  %s15 = inlined_call_operand.vmem [shape: f32[32,16], index: 15, kind: input, shape index: {}]
  %s16 = inlined_call_operand.vmem [shape: f32[1,16], index: 16, kind: input, shape index: {}]
  %s17 = inlined_call_operand.vmem [shape: f32[9], index: 17, kind: input, shape index: {}]
  %s18 = inlined_call_operand.vmem [shape: f32[2,32,16], index: 18, kind: output, shape index: {}]
  %s19 = sld [smem:[#allocation0]]
  $region121: #{tpu_custom_call.1} parent=0
    _
  %s21 = ssub.s32 1, %s19
  %s22 = scalar_select 0, %s21, %s19
  $region1: #{tpu_custom_call.1} parent=0
    #allocation2 [shape = 'u8[65536]{0}', space=vmem, size = 0x10000, scoped, tag = 'input window, operand 5, single buffered']
    #allocation3 [shape = 's32[2]{0}', space=sflag, size = 0x8, scoped, tag = 'scoped memory for tpu_custom_call.1']
    #allocation4 [shape = 's32[2]{0}', space=sflag, size = 0x8, scoped, tag = 'scoped memory for tpu_custom_call.1']
    #allocation5 [shape = 'u8[196608]{0}', space=vmem, size = 0x30000, scoped, tag = 'input window, operand 9, single buffered']
    #allocation6 [shape = 's32[1]{0}', space=sflag, size = 0x4, scoped, tag = 'scoped memory for tpu_custom_call.1']
    #allocation7 [shape = 'u8[65536]{0}', space=vmem, size = 0x10000, scoped, tag = 'input window, operand 13, single buffered']
    #allocation8 [shape = 'u8[512]{0}', space=smem, size = 0x200, scoped, tag = 'input window, operand 17, single buffered']
    %23 = vsyncpa [#allocation3], 0
    %24 = vsyncpa [#allocation6], 0
    %25 = vsyncpa [#allocation4], 0
    loop: start=0, step=1, limit=4
    $region2: #{tpu_custom_call.1} parent=1 // loop_pre_header
      _
    $region3: #{tpu_custom_call.1} parent=1 // loop_header
      %s27 = sphi 0, %s31
      %p28 = scmp.ge.s32.totalorder %s27, 4
      %s37 = sphi 0, %s39
      %s40 = sphi 0, %s37
      %s41 = sphi 0, %s40
      %s57 = sphi 0, %s41
      %s61 = sphi 0, %s61
      %s63 = sphi 0, %s61
      %s64 = sphi 0, %s63
      %s78 = sphi 0, %s64
      %s82 = sphi 0, %s82
      %s84 = sphi 0, %s82
      %s85 = sphi 0, %s84
      %s99 = sphi 0, %s85
      %s103 = sphi 0, %s103
      %s105 = sphi 0, %s103
      %s106 = sphi 0, %s105
      %s120 = sphi 0, %s106
      %s124 = sphi 0, %s124
      %s126 = sphi 0, %s124
      %s127 = sphi 0, %s126
      %s141 = sphi 0, %s127
      %s145 = sphi 0, %s145
      %s147 = sphi 0, %s145
      %s148 = sphi 0, %s147
      %s162 = sphi 0, %s148
      %s166 = sphi 0, %s166
      %s168 = sphi 0, %s166
      %s169 = sphi 0, %s168
      %s183 = sphi 0, %s169
      %s187 = sphi 0, %s187
      %s189 = sphi 0, %s187
      %s190 = sphi 0, %s189
      %s204 = sphi 0, %s190
      %s208 = sphi 0, %s208
      %s210 = sphi 0, %s208
      %s211 = sphi 0, %s210
      %s225 = sphi 0, %s211
      %s229 = sphi 0, %s229
      %s231 = sphi 0, %s229
      %s232 = sphi 0, %s231
      %s246 = sphi 0, %s232
      %s250 = sphi 0, %s250
      %s252 = sphi 0, %s250
      %s253 = sphi 0, %s252
      %s267 = sphi 0, %s253
      %s271 = sphi 0, %s271
      %s273 = sphi 0, %s271
      %s274 = sphi 0, %s273
      %s288 = sphi 0, %s274
      %s292 = sphi 0, %s292
      %s294 = sphi 0, %s292
      %s295 = sphi 0, %s294
      %s309 = sphi 0, %s295
      %s313 = sphi 0, %s313
      %s315 = sphi 0, %s313
      %s316 = sphi 0, %s315
      %s330 = sphi 0, %s316
      %s334 = sphi 0, %s334
      %s336 = sphi 0, %s334
      %s337 = sphi 0, %s336
      %s351 = sphi 0, %s337
      %s355 = sphi 0, %s355
      %s357 = sphi 0, %s355
      %s358 = sphi 0, %s357
      %s372 = sphi 0, %s358
      %s376 = sphi 0, %s376
      %s378 = sphi 0, %s376
      %s379 = sphi 0, %s378
      %s393 = sphi 0, %s379
      %s397 = sphi 0, %s397
      %s399 = sphi 0, %s397
      %s400 = sphi 0, %s399
      %s414 = sphi 0, %s400
      %s420 = sphi 0, %s422
      %s423 = sphi 0, %s420
      %s424 = sphi 0, %s423
      %s440 = sphi 0, %s424
    $region4: #{tpu_custom_call.1} parent=1 // loop_header_branch
      %30 = sbr.rel (%p28) target = $region8
    $region5: #{tpu_custom_call.1} parent=1 // loop_body
      %s32 = ssub.s32 %s27, 1
      %s33 = ssub.s32 %s27, 2
      %s34 = sadd.s32 %s27, 1
      %s35 = ssub.s32 %s27, %s34
      %p36 = scmp.eq.s32.totalorder %s35, 0
      %s38 = sadd.s32 %s37, 1
      %s39 = scalar_select %p36, %s37, %s38
      %p42 = pneg %p36
      %p43 = scmp.eq.s32.totalorder %s27, 1
      %p44 = por %p42, %p43
      %p45 = scmp.ne.s32.totalorder %s37, %s40
      %p46 = scmp.eq.s32.totalorder %s27, 0
      %p47 = por %p45, %p46
      %p48 = scmp.ne.s32.totalorder %s37, %s40
      %p49 = scmp.eq.s32.totalorder %s32, 1
      %p50 = por %p48, %p49
      %p51 = scmp.ne.s32.totalorder %s40, %s41
      %p52 = scmp.eq.s32.totalorder %s32, 0
      %p53 = por %p51, %p52
      %p54 = scmp.ne.s32.totalorder %s40, %s41
      %p55 = scmp.eq.s32.totalorder %s33, 1
      %p56 = por %p54, %p55
      %p58 = scmp.ne.s32.totalorder %s41, %s57
      %p59 = scmp.eq.s32.totalorder %s33, 0
      %p60 = por %p58, %p59
      %s62 = sadd.s32 %s61, 1
      %p65 = scmp.eq.s32.totalorder %s27, 1
      %p66 = scmp.ne.s32.totalorder %s61, %s63
      %p67 = scmp.eq.s32.totalorder %s27, 0
      %p68 = por %p66, %p67
      %p69 = scmp.ne.s32.totalorder %s61, %s63
      %p70 = scmp.eq.s32.totalorder %s32, 1
      %p71 = por %p69, %p70
      %p72 = scmp.ne.s32.totalorder %s63, %s64
      %p73 = scmp.eq.s32.totalorder %s32, 0
      %p74 = por %p72, %p73
      %p75 = scmp.ne.s32.totalorder %s63, %s64
      %p76 = scmp.eq.s32.totalorder %s33, 1
      %p77 = por %p75, %p76
      %p79 = scmp.ne.s32.totalorder %s64, %s78
      %p80 = scmp.eq.s32.totalorder %s33, 0
      %p81 = por %p79, %p80
      %s83 = sadd.s32 %s82, 1
      %p86 = scmp.eq.s32.totalorder %s27, 1
      %p87 = scmp.ne.s32.totalorder %s82, %s84
      %p88 = scmp.eq.s32.totalorder %s27, 0
      %p89 = por %p87, %p88
      %p90 = scmp.ne.s32.totalorder %s82, %s84
      %p91 = scmp.eq.s32.totalorder %s32, 1
      %p92 = por %p90, %p91
      %p93 = scmp.ne.s32.totalorder %s84, %s85
      %p94 = scmp.eq.s32.totalorder %s32, 0
      %p95 = por %p93, %p94
      %p96 = scmp.ne.s32.totalorder %s84, %s85
      %p97 = scmp.eq.s32.totalorder %s33, 1
      %p98 = por %p96, %p97
      %p100 = scmp.ne.s32.totalorder %s85, %s99
      %p101 = scmp.eq.s32.totalorder %s33, 0
      %p102 = por %p100, %p101
      %s104 = sadd.s32 %s103, 1
      %p107 = scmp.eq.s32.totalorder %s27, 1
      %p108 = scmp.ne.s32.totalorder %s103, %s105
      %p109 = scmp.eq.s32.totalorder %s27, 0
      %p110 = por %p108, %p109
      %p111 = scmp.ne.s32.totalorder %s103, %s105
      %p112 = scmp.eq.s32.totalorder %s32, 1
      %p113 = por %p111, %p112
      %p114 = scmp.ne.s32.totalorder %s105, %s106
      %p115 = scmp.eq.s32.totalorder %s32, 0
      %p116 = por %p114, %p115
      %p117 = scmp.ne.s32.totalorder %s105, %s106
      %p118 = scmp.eq.s32.totalorder %s33, 1
      %p119 = por %p117, %p118
      %p121 = scmp.ne.s32.totalorder %s106, %s120
      %p122 = scmp.eq.s32.totalorder %s33, 0
      %p123 = por %p121, %p122
      %s125 = sadd.s32 %s124, 1
      %p128 = scmp.eq.s32.totalorder %s27, 1
      %p129 = scmp.ne.s32.totalorder %s124, %s126
      %p130 = scmp.eq.s32.totalorder %s27, 0
      %p131 = por %p129, %p130
      %p132 = scmp.ne.s32.totalorder %s124, %s126
      %p133 = scmp.eq.s32.totalorder %s32, 1
      %p134 = por %p132, %p133
      %p135 = scmp.ne.s32.totalorder %s126, %s127
      %p136 = scmp.eq.s32.totalorder %s32, 0
      %p137 = por %p135, %p136
      %p138 = scmp.ne.s32.totalorder %s126, %s127
      %p139 = scmp.eq.s32.totalorder %s33, 1
      %p140 = por %p138, %p139
      %p142 = scmp.ne.s32.totalorder %s127, %s141
      %p143 = scmp.eq.s32.totalorder %s33, 0
      %p144 = por %p142, %p143
      %s146 = sadd.s32 %s145, 1
      %p149 = scmp.eq.s32.totalorder %s27, 1
      %p150 = scmp.ne.s32.totalorder %s145, %s147
      %p151 = scmp.eq.s32.totalorder %s27, 0
      %p152 = por %p150, %p151
      %p153 = scmp.ne.s32.totalorder %s145, %s147
      %p154 = scmp.eq.s32.totalorder %s32, 1
      %p155 = por %p153, %p154
      %p156 = scmp.ne.s32.totalorder %s147, %s148
      %p157 = scmp.eq.s32.totalorder %s32, 0
      %p158 = por %p156, %p157
      %p159 = scmp.ne.s32.totalorder %s147, %s148
      %p160 = scmp.eq.s32.totalorder %s33, 1
      %p161 = por %p159, %p160
      %p163 = scmp.ne.s32.totalorder %s148, %s162
      %p164 = scmp.eq.s32.totalorder %s33, 0
      %p165 = por %p163, %p164
      %s167 = sadd.s32 %s166, 1
      %p170 = scmp.eq.s32.totalorder %s27, 1
      %p171 = scmp.ne.s32.totalorder %s166, %s168
      %p172 = scmp.eq.s32.totalorder %s27, 0
      %p173 = por %p171, %p172
      %p174 = scmp.ne.s32.totalorder %s166, %s168
      %p175 = scmp.eq.s32.totalorder %s32, 1
      %p176 = por %p174, %p175
      %p177 = scmp.ne.s32.totalorder %s168, %s169
      %p178 = scmp.eq.s32.totalorder %s32, 0
      %p179 = por %p177, %p178
      %p180 = scmp.ne.s32.totalorder %s168, %s169
      %p181 = scmp.eq.s32.totalorder %s33, 1
      %p182 = por %p180, %p181
      %p184 = scmp.ne.s32.totalorder %s169, %s183
      %p185 = scmp.eq.s32.totalorder %s33, 0
      %p186 = por %p184, %p185
      %s188 = sadd.s32 %s187, 1
      %p191 = scmp.eq.s32.totalorder %s27, 1
      %p192 = scmp.ne.s32.totalorder %s187, %s189
      %p193 = scmp.eq.s32.totalorder %s27, 0
      %p194 = por %p192, %p193
      %p195 = scmp.ne.s32.totalorder %s187, %s189
      %p196 = scmp.eq.s32.totalorder %s32, 1
      %p197 = por %p195, %p196
      %p198 = scmp.ne.s32.totalorder %s189, %s190
      %p199 = scmp.eq.s32.totalorder %s32, 0
      %p200 = por %p198, %p199
      %p201 = scmp.ne.s32.totalorder %s189, %s190
      %p202 = scmp.eq.s32.totalorder %s33, 1
      %p203 = por %p201, %p202
      %p205 = scmp.ne.s32.totalorder %s190, %s204
      %p206 = scmp.eq.s32.totalorder %s33, 0
      %p207 = por %p205, %p206
      %s209 = sadd.s32 %s208, 1
      %p212 = scmp.eq.s32.totalorder %s27, 1
      %p213 = scmp.ne.s32.totalorder %s208, %s210
      %p214 = scmp.eq.s32.totalorder %s27, 0
      %p215 = por %p213, %p214
      %p216 = scmp.ne.s32.totalorder %s208, %s210
      %p217 = scmp.eq.s32.totalorder %s32, 1
      %p218 = por %p216, %p217
      %p219 = scmp.ne.s32.totalorder %s210, %s211
      %p220 = scmp.eq.s32.totalorder %s32, 0
      %p221 = por %p219, %p220
      %p222 = scmp.ne.s32.totalorder %s210, %s211
      %p223 = scmp.eq.s32.totalorder %s33, 1
      %p224 = por %p222, %p223
      %p226 = scmp.ne.s32.totalorder %s211, %s225
      %p227 = scmp.eq.s32.totalorder %s33, 0
      %p228 = por %p226, %p227
      %s230 = sadd.s32 %s229, 1
      %p233 = scmp.eq.s32.totalorder %s27, 1
      %p234 = scmp.ne.s32.totalorder %s229, %s231
      %p235 = scmp.eq.s32.totalorder %s27, 0
      %p236 = por %p234, %p235
      %p237 = scmp.ne.s32.totalorder %s229, %s231
      %p238 = scmp.eq.s32.totalorder %s32, 1
      %p239 = por %p237, %p238
      %p240 = scmp.ne.s32.totalorder %s231, %s232
      %p241 = scmp.eq.s32.totalorder %s32, 0
      %p242 = por %p240, %p241
      %p243 = scmp.ne.s32.totalorder %s231, %s232
      %p244 = scmp.eq.s32.totalorder %s33, 1
      %p245 = por %p243, %p244
      %p247 = scmp.ne.s32.totalorder %s232, %s246
      %p248 = scmp.eq.s32.totalorder %s33, 0
      %p249 = por %p247, %p248
      %s251 = sadd.s32 %s250, 1
      %p254 = scmp.eq.s32.totalorder %s27, 1
      %p255 = scmp.ne.s32.totalorder %s250, %s252
      %p256 = scmp.eq.s32.totalorder %s27, 0
      %p257 = por %p255, %p256
      %p258 = scmp.ne.s32.totalorder %s250, %s252
      %p259 = scmp.eq.s32.totalorder %s32, 1
      %p260 = por %p258, %p259
      %p261 = scmp.ne.s32.totalorder %s252, %s253
      %p262 = scmp.eq.s32.totalorder %s32, 0
      %p263 = por %p261, %p262
      %p264 = scmp.ne.s32.totalorder %s252, %s253
      %p265 = scmp.eq.s32.totalorder %s33, 1
      %p266 = por %p264, %p265
      %p268 = scmp.ne.s32.totalorder %s253, %s267
      %p269 = scmp.eq.s32.totalorder %s33, 0
      %p270 = por %p268, %p269
      %s272 = sadd.s32 %s271, 1
      %p275 = scmp.eq.s32.totalorder %s27, 1
      %p276 = scmp.ne.s32.totalorder %s271, %s273
      %p277 = scmp.eq.s32.totalorder %s27, 0
      %p278 = por %p276, %p277
      %p279 = scmp.ne.s32.totalorder %s271, %s273
      %p280 = scmp.eq.s32.totalorder %s32, 1
      %p281 = por %p279, %p280
      %p282 = scmp.ne.s32.totalorder %s273, %s274
      %p283 = scmp.eq.s32.totalorder %s32, 0
      %p284 = por %p282, %p283
      %p285 = scmp.ne.s32.totalorder %s273, %s274
      %p286 = scmp.eq.s32.totalorder %s33, 1
      %p287 = por %p285, %p286
      %p289 = scmp.ne.s32.totalorder %s274, %s288
      %p290 = scmp.eq.s32.totalorder %s33, 0
      %p291 = por %p289, %p290
      %s293 = sadd.s32 %s292, 1
      %p296 = scmp.eq.s32.totalorder %s27, 1
      %p297 = scmp.ne.s32.totalorder %s292, %s294
      %p298 = scmp.eq.s32.totalorder %s27, 0
      %p299 = por %p297, %p298
      %p300 = scmp.ne.s32.totalorder %s292, %s294
      %p301 = scmp.eq.s32.totalorder %s32, 1
      %p302 = por %p300, %p301
      %p303 = scmp.ne.s32.totalorder %s294, %s295
      %p304 = scmp.eq.s32.totalorder %s32, 0
      %p305 = por %p303, %p304
      %p306 = scmp.ne.s32.totalorder %s294, %s295
      %p307 = scmp.eq.s32.totalorder %s33, 1
      %p308 = por %p306, %p307
      %p310 = scmp.ne.s32.totalorder %s295, %s309
      %p311 = scmp.eq.s32.totalorder %s33, 0
      %p312 = por %p310, %p311
      %s314 = sadd.s32 %s313, 1
      %p317 = scmp.eq.s32.totalorder %s27, 1
      %p318 = scmp.ne.s32.totalorder %s313, %s315
      %p319 = scmp.eq.s32.totalorder %s27, 0
      %p320 = por %p318, %p319
      %p321 = scmp.ne.s32.totalorder %s313, %s315
      %p322 = scmp.eq.s32.totalorder %s32, 1
      %p323 = por %p321, %p322
      %p324 = scmp.ne.s32.totalorder %s315, %s316
      %p325 = scmp.eq.s32.totalorder %s32, 0
      %p326 = por %p324, %p325
      %p327 = scmp.ne.s32.totalorder %s315, %s316
      %p328 = scmp.eq.s32.totalorder %s33, 1
      %p329 = por %p327, %p328
      %p331 = scmp.ne.s32.totalorder %s316, %s330
      %p332 = scmp.eq.s32.totalorder %s33, 0
      %p333 = por %p331, %p332
      %s335 = sadd.s32 %s334, 1
      %p338 = scmp.eq.s32.totalorder %s27, 1
      %p339 = scmp.ne.s32.totalorder %s334, %s336
      %p340 = scmp.eq.s32.totalorder %s27, 0
      %p341 = por %p339, %p340
      %p342 = scmp.ne.s32.totalorder %s334, %s336
      %p343 = scmp.eq.s32.totalorder %s32, 1
      %p344 = por %p342, %p343
      %p345 = scmp.ne.s32.totalorder %s336, %s337
      %p346 = scmp.eq.s32.totalorder %s32, 0
      %p347 = por %p345, %p346
      %p348 = scmp.ne.s32.totalorder %s336, %s337
      %p349 = scmp.eq.s32.totalorder %s33, 1
      %p350 = por %p348, %p349
      %p352 = scmp.ne.s32.totalorder %s337, %s351
      %p353 = scmp.eq.s32.totalorder %s33, 0
      %p354 = por %p352, %p353
      %s356 = sadd.s32 %s355, 1
      %p359 = scmp.eq.s32.totalorder %s27, 1
      %p360 = scmp.ne.s32.totalorder %s355, %s357
      %p361 = scmp.eq.s32.totalorder %s27, 0
      %p362 = por %p360, %p361
      %p363 = scmp.ne.s32.totalorder %s355, %s357
      %p364 = scmp.eq.s32.totalorder %s32, 1
      %p365 = por %p363, %p364
      %p366 = scmp.ne.s32.totalorder %s357, %s358
      %p367 = scmp.eq.s32.totalorder %s32, 0
      %p368 = por %p366, %p367
      %p369 = scmp.ne.s32.totalorder %s357, %s358
      %p370 = scmp.eq.s32.totalorder %s33, 1
      %p371 = por %p369, %p370
      %p373 = scmp.ne.s32.totalorder %s358, %s372
      %p374 = scmp.eq.s32.totalorder %s33, 0
      %p375 = por %p373, %p374
      %s377 = sadd.s32 %s376, 1
      %p380 = scmp.eq.s32.totalorder %s27, 1
      %p381 = scmp.ne.s32.totalorder %s376, %s378
      %p382 = scmp.eq.s32.totalorder %s27, 0
      %p383 = por %p381, %p382
      %p384 = scmp.ne.s32.totalorder %s376, %s378
      %p385 = scmp.eq.s32.totalorder %s32, 1
      %p386 = por %p384, %p385
      %p387 = scmp.ne.s32.totalorder %s378, %s379
      %p388 = scmp.eq.s32.totalorder %s32, 0
      %p389 = por %p387, %p388
      %p390 = scmp.ne.s32.totalorder %s378, %s379
      %p391 = scmp.eq.s32.totalorder %s33, 1
      %p392 = por %p390, %p391
      %p394 = scmp.ne.s32.totalorder %s379, %s393
      %p395 = scmp.eq.s32.totalorder %s33, 0
      %p396 = por %p394, %p395
      %s398 = sadd.s32 %s397, 1
      %p401 = scmp.eq.s32.totalorder %s27, 1
      %p402 = scmp.ne.s32.totalorder %s397, %s399
      %p403 = scmp.eq.s32.totalorder %s27, 0
      %p404 = por %p402, %p403
      %p405 = scmp.ne.s32.totalorder %s397, %s399
      %p406 = scmp.eq.s32.totalorder %s32, 1
      %p407 = por %p405, %p406
      %p408 = scmp.ne.s32.totalorder %s399, %s400
      %p409 = scmp.eq.s32.totalorder %s32, 0
      %p410 = por %p408, %p409
      %p411 = scmp.ne.s32.totalorder %s399, %s400
      %p412 = scmp.eq.s32.totalorder %s33, 1
      %p413 = por %p411, %p412
      %p415 = scmp.ne.s32.totalorder %s400, %s414
      %p416 = scmp.eq.s32.totalorder %s33, 0
      %p417 = por %p415, %p416
      %s418 = ssub.s32 %s27, %s34
      %p419 = scmp.eq.s32.totalorder %s418, 0
      %s421 = sadd.s32 %s420, 1
      %s422 = scalar_select %p419, %s420, %s421
      %p425 = pneg %p419
      %p426 = scmp.eq.s32.totalorder %s27, 1
      %p427 = por %p425, %p426
      %p428 = scmp.ne.s32.totalorder %s420, %s423
      %p429 = scmp.eq.s32.totalorder %s27, 0
      %p430 = por %p428, %p429
      %p431 = scmp.ne.s32.totalorder %s420, %s423
      %p432 = scmp.eq.s32.totalorder %s32, 1
      %p433 = por %p431, %p432
      %p434 = scmp.ne.s32.totalorder %s423, %s424
      %p435 = scmp.eq.s32.totalorder %s32, 0
      %p436 = por %p434, %p435
      %p437 = scmp.ne.s32.totalorder %s423, %s424
      %p438 = scmp.eq.s32.totalorder %s33, 1
      %p439 = por %p437, %p438
      %p441 = scmp.ne.s32.totalorder %s424, %s440
      %p442 = scmp.eq.s32.totalorder %s33, 0
      %p443 = por %p441, %p442
      %p444 = scmp.le.s32.totalorder 1, %s27
      %p445 = scmp.lt.s32.totalorder %s27, 3
      %p446 = pnand %p444, %p445
      %p447 = pneg %p446
      // Predicated region
      $region9: #{tpu_custom_call.1} parent=5 // pred_check
        _
      $region10: #{tpu_custom_call.1} parent=5 // pred_check_branch
        %449 = sbr.rel (%p446) target = $region12
      $region11: #{tpu_custom_call.1} parent=5 // pred_region
        %s450 = ssub.s32 %s27, 1
        // Predicated region
        $region13: #{tpu_custom_call.1} parent=11 // pred_check
          %p451 = pneg %p74
        $region14: #{tpu_custom_call.1} parent=11 // pred_check_branch
          %453 = sbr.rel (%p451) target = $region16
        $region15: #{tpu_custom_call.1} parent=11 // pred_region
          _
        $region16: #{tpu_custom_call.1} parent=11 // pred_fallthru
          _
        // Predicated region
        $region17: #{tpu_custom_call.1} parent=11 // pred_check
          %p454 = pneg %p95
        $region18: #{tpu_custom_call.1} parent=11 // pred_check_branch
          %456 = sbr.rel (%p454) target = $region20
        $region19: #{tpu_custom_call.1} parent=11 // pred_region
          _
        $region20: #{tpu_custom_call.1} parent=11 // pred_fallthru
          _
        // Predicated region
        $region21: #{tpu_custom_call.1} parent=11 // pred_check
          %p457 = pneg %p116
        $region22: #{tpu_custom_call.1} parent=11 // pred_check_branch
          %459 = sbr.rel (%p457) target = $region24
        $region23: #{tpu_custom_call.1} parent=11 // pred_region
          _
        $region24: #{tpu_custom_call.1} parent=11 // pred_fallthru
          _
        // Predicated region
        $region25: #{tpu_custom_call.1} parent=11 // pred_check
          %p460 = pneg %p137
        $region26: #{tpu_custom_call.1} parent=11 // pred_check_branch
          %462 = sbr.rel (%p460) target = $region28
        $region27: #{tpu_custom_call.1} parent=11 // pred_region
          _
        $region28: #{tpu_custom_call.1} parent=11 // pred_fallthru
          _
        // Predicated region
        $region29: #{tpu_custom_call.1} parent=11 // pred_check
          %p463 = pneg %p158
        $region30: #{tpu_custom_call.1} parent=11 // pred_check_branch
          %465 = sbr.rel (%p463) target = $region32
        $region31: #{tpu_custom_call.1} parent=11 // pred_region
          %467 = vsyncadd [#allocation3], 0
          %s468 = sshll.u32 %s5, 4
          %s469 = int_to_ptr.hbm [resolvable:$true] %s468
          %s470 = sshll.u32 [#allocation2], 4
          %s471 = int_to_ptr.vmem [resolvable:$true] %s470
          %476 = dma.hbm_to_vmem [thread:$0]  %s469, 2048, %s471, [#allocation3], 128, 128, 8
        $region32: #{tpu_custom_call.1} parent=11 // pred_fallthru
          _
        // Predicated region
        $region33: #{tpu_custom_call.1} parent=11 // pred_check
          %p477 = pneg %p179
        $region34: #{tpu_custom_call.1} parent=11 // pred_check_branch
          %479 = sbr.rel (%p477) target = $region36
        $region35: #{tpu_custom_call.1} parent=11 // pred_region
          _
        $region36: #{tpu_custom_call.1} parent=11 // pred_fallthru
          _
        // Predicated region
        $region37: #{tpu_custom_call.1} parent=11 // pred_check
          %p480 = pneg %p200
        $region38: #{tpu_custom_call.1} parent=11 // pred_check_branch
          %482 = sbr.rel (%p480) target = $region40
        $region39: #{tpu_custom_call.1} parent=11 // pred_region
          _
        $region40: #{tpu_custom_call.1} parent=11 // pred_fallthru
          _
        // Predicated region
        $region41: #{tpu_custom_call.1} parent=11 // pred_check
          %p483 = pneg %p221
        $region42: #{tpu_custom_call.1} parent=11 // pred_check_branch
          %485 = sbr.rel (%p483) target = $region44
        $region43: #{tpu_custom_call.1} parent=11 // pred_region
          _
        $region44: #{tpu_custom_call.1} parent=11 // pred_fallthru
          _
        // Predicated region
        $region45: #{tpu_custom_call.1} parent=11 // pred_check
          %p486 = pneg %p242
        $region46: #{tpu_custom_call.1} parent=11 // pred_check_branch
          %488 = sbr.rel (%p486) target = $region48
        $region47: #{tpu_custom_call.1} parent=11 // pred_region
          %490 = vsyncadd [#allocation6], 0
          %s491 = sshll.u32 %s9, 4
          %s492 = int_to_ptr.hbm [resolvable:$true] %s491
          %s493 = sshll.u32 [#allocation5], 4
          %s494 = int_to_ptr.vmem [resolvable:$true] %s493
          %499 = dma.hbm_to_vmem [thread:$0]  %s492, 6144, %s494, [#allocation6], 128, 128, 8
        $region48: #{tpu_custom_call.1} parent=11 // pred_fallthru
          _
        // Predicated region
        $region49: #{tpu_custom_call.1} parent=11 // pred_check
          %p500 = pneg %p263
        $region50: #{tpu_custom_call.1} parent=11 // pred_check_branch
          %502 = sbr.rel (%p500) target = $region52
        $region51: #{tpu_custom_call.1} parent=11 // pred_region
          _
        $region52: #{tpu_custom_call.1} parent=11 // pred_fallthru
          _
        // Predicated region
        $region53: #{tpu_custom_call.1} parent=11 // pred_check
          %p503 = pneg %p284
        $region54: #{tpu_custom_call.1} parent=11 // pred_check_branch
          %505 = sbr.rel (%p503) target = $region56
        $region55: #{tpu_custom_call.1} parent=11 // pred_region
          _
        $region56: #{tpu_custom_call.1} parent=11 // pred_fallthru
          _
        // Predicated region
        $region57: #{tpu_custom_call.1} parent=11 // pred_check
          %p506 = pneg %p305
        $region58: #{tpu_custom_call.1} parent=11 // pred_check_branch
          %508 = sbr.rel (%p506) target = $region60
        $region59: #{tpu_custom_call.1} parent=11 // pred_region
          _
        $region60: #{tpu_custom_call.1} parent=11 // pred_fallthru
          _
        // Predicated region
        $region61: #{tpu_custom_call.1} parent=11 // pred_check
          %p509 = pneg %p326
        $region62: #{tpu_custom_call.1} parent=11 // pred_check_branch
          %511 = sbr.rel (%p509) target = $region64
        $region63: #{tpu_custom_call.1} parent=11 // pred_region
          %513 = vsyncadd [#allocation6], 0
          %s514 = sshll.u32 %s13, 4
          %s515 = int_to_ptr.hbm [resolvable:$true] %s514
          %s516 = sshll.u32 [#allocation7], 4
          %s517 = int_to_ptr.vmem [resolvable:$true] %s516
          %522 = dma.hbm_to_vmem [thread:$0]  %s515, 2048, %s517, [#allocation6], 128, 128, 8
        $region64: #{tpu_custom_call.1} parent=11 // pred_fallthru
          _
        // Predicated region
        $region65: #{tpu_custom_call.1} parent=11 // pred_check
          %p523 = pneg %p347
        $region66: #{tpu_custom_call.1} parent=11 // pred_check_branch
          %525 = sbr.rel (%p523) target = $region68
        $region67: #{tpu_custom_call.1} parent=11 // pred_region
          _
        $region68: #{tpu_custom_call.1} parent=11 // pred_fallthru
          _
        // Predicated region
        $region69: #{tpu_custom_call.1} parent=11 // pred_check
          %p526 = pneg %p368
        $region70: #{tpu_custom_call.1} parent=11 // pred_check_branch
          %528 = sbr.rel (%p526) target = $region72
        $region71: #{tpu_custom_call.1} parent=11 // pred_region
          _
        $region72: #{tpu_custom_call.1} parent=11 // pred_fallthru
          _
        // Predicated region
        $region73: #{tpu_custom_call.1} parent=11 // pred_check
          %p529 = pneg %p389
        $region74: #{tpu_custom_call.1} parent=11 // pred_check_branch
          %531 = sbr.rel (%p529) target = $region76
        $region75: #{tpu_custom_call.1} parent=11 // pred_region
          _
        $region76: #{tpu_custom_call.1} parent=11 // pred_fallthru
          _
        // Predicated region
        $region77: #{tpu_custom_call.1} parent=11 // pred_check
          %p532 = pneg %p410
        $region78: #{tpu_custom_call.1} parent=11 // pred_check_branch
          %534 = sbr.rel (%p532) target = $region80
        $region79: #{tpu_custom_call.1} parent=11 // pred_region
          %536 = vsyncadd [#allocation4], 0
          %s538 = sshll.u32 %s17, 4
          %s539 = int_to_ptr.vmem [resolvable:$true] %s538
          %541 = dma.vmem_to_smem %s539, 16, [#allocation8], [#allocation4]
        $region80: #{tpu_custom_call.1} parent=11 // pred_fallthru
          _
      $region12: #{tpu_custom_call.1} parent=5 // pred_fallthru
        _
      %p542 = scmp.lt.s32.totalorder %s27, 2
      // Predicated region
      $region81: #{tpu_custom_call.1} parent=5 // pred_check
        %p543 = pneg %p542
      $region82: #{tpu_custom_call.1} parent=5 // pred_check_branch
        %545 = sbr.rel (%p543) target = $region84
      $region83: #{tpu_custom_call.1} parent=5 // pred_region
        // Predicated region
        $region85: #{tpu_custom_call.1} parent=83 // pred_check
          %p546 = pneg %p47
        $region86: #{tpu_custom_call.1} parent=83 // pred_check_branch
          %548 = sbr.rel (%p546) target = $region88
        $region87: #{tpu_custom_call.1} parent=83 // pred_region
          %p549 = scmp.lt.s32.totalorder %s27, 1
          %s550 = scalar_select %p549, %s27, 1
          %s551 = smul.addr %s550, 4
          %s552 = smul.addr %s551, 8
          %s553 = scalar_lea.vmem %s0, %s552
        $region88: #{tpu_custom_call.1} parent=83 // pred_fallthru
          _
      $region84: #{tpu_custom_call.1} parent=5 // pred_fallthru
        _
      %p554 = scmp.le.s32.totalorder 1, %s27
      %p555 = scmp.lt.s32.totalorder %s27, 3
      %p556 = pnand %p554, %p555
      %p557 = pneg %p556
      // Predicated region
      $region89: #{tpu_custom_call.1} parent=5 // pred_check
        _
      $region90: #{tpu_custom_call.1} parent=5 // pred_check_branch
        %559 = sbr.rel (%p556) target = $region92
      $region91: #{tpu_custom_call.1} parent=5 // pred_region
        %s560 = ssub.s32 %s27, 1
        // Predicated region
        $region93: #{tpu_custom_call.1} parent=91 // pred_check
          %p561 = pneg %p158
        $region94: #{tpu_custom_call.1} parent=91 // pred_check_branch
          %563 = sbr.rel (%p561) target = $region96
        $region95: #{tpu_custom_call.1} parent=91 // pred_region
          %565 = dma.done [#allocation3], 2048
        $region96: #{tpu_custom_call.1} parent=91 // pred_fallthru
          _
        // Predicated region
        $region97: #{tpu_custom_call.1} parent=91 // pred_check
          %p566 = pneg %p242
        $region98: #{tpu_custom_call.1} parent=91 // pred_check_branch
          %568 = sbr.rel (%p566) target = $region100
        $region99: #{tpu_custom_call.1} parent=91 // pred_region
          %570 = dma.done [#allocation6], 6144
        $region100: #{tpu_custom_call.1} parent=91 // pred_fallthru
          _
        // Predicated region
        $region101: #{tpu_custom_call.1} parent=91 // pred_check
          %p571 = pneg %p326
        $region102: #{tpu_custom_call.1} parent=91 // pred_check_branch
          %573 = sbr.rel (%p571) target = $region104
        $region103: #{tpu_custom_call.1} parent=91 // pred_region
          %575 = dma.done [#allocation6], 2048
        $region104: #{tpu_custom_call.1} parent=91 // pred_fallthru
          _
        // Predicated region
        $region105: #{tpu_custom_call.1} parent=91 // pred_check
          %p576 = pneg %p410
        $region106: #{tpu_custom_call.1} parent=91 // pred_check_branch
          %578 = sbr.rel (%p576) target = $region108
        $region107: #{tpu_custom_call.1} parent=91 // pred_region
          %580 = dma.done [#allocation4], 16
        $region108: #{tpu_custom_call.1} parent=91 // pred_fallthru
          _
        %581 = sfence
        %p582 = scmp.lt.s32.totalorder %s32, 1
        %s583 = scalar_select %p582, %s32, 1
        %s584 = smul.addr %s583, 4
        %s585 = smul.addr %s584, 8
        %s586 = scalar_lea.vmem %s0, %s585
        %p587 = pneg %p53
        %p588 = pneg %p50
        %p589 = pneg %p74
        %p590 = pneg %p71
        %p591 = pneg %p95
        %p592 = pneg %p92
        %p593 = pneg %p116
        %p594 = pneg %p113
        %p595 = pneg %p137
        %p596 = pneg %p134
        %p597 = pneg %p158
        %p598 = pneg %p155
        %p599 = pneg %p179
        %p600 = pneg %p176
        %p601 = pneg %p200
        %p602 = pneg %p197
        %p603 = pneg %p221
        %p604 = pneg %p218
        %p605 = pneg %p242
        %p606 = pneg %p239
        %p607 = pneg %p263
        %p608 = pneg %p260
        %p609 = pneg %p284
        %p610 = pneg %p281
        %p611 = pneg %p305
        %p612 = pneg %p302
        %p613 = pneg %p326
        %p614 = pneg %p323
        %p615 = pneg %p347
        %p616 = pneg %p344
        %p617 = pneg %p368
        %p618 = pneg %p365
        %p619 = pneg %p389
        %p620 = pneg %p386
        %p621 = pneg %p410
        %p622 = pneg %p407
        %p623 = pneg %p436
        %p624 = pneg %p433
        %p625 = scmp.lt.s32.totalorder %s32, 1
        %s626 = scalar_select %p625, %s32, 1
        %s627 = smul.addr %s626, 4
        %s628 = smul.addr %s627, 8
        %s629 = scalar_lea.vmem %s18, %s628
        %p630 = scmp.lt.s32.totalorder %s32, 1
        %s631 = scalar_select %p630, %s32, 1
        %s632 = smul.addr %s631, 4
        %s633 = smul.addr %s632, 8
        %s634 = scalar_lea.vmem %s0, %s633
        %p635 = scmp.lt.s32.totalorder %s32, 1
        %s636 = scalar_select %p635, %s32, 1
        %s637 = smul.addr %s636, 4
        %s638 = smul.addr %s637, 8
        %s639 = scalar_lea.vmem %s18, %s638
        %v640 = vld [vmem:[%s634] sm:$0xff]
        %v641 = vld [vmem:[%s634 + $0x8] sm:$0xff]
        %v642 = vld [vmem:[%s634 + $0x10] sm:$0xff]
        %v643 = vld [vmem:[%s634 + $0x18] sm:$0xff]
        %v644 = vld [vmem:[%s1] sm:$0x1]
        %v645 = vld [vmem:[%s2] sm:$0x1]
        %vm646 = vcmask 130048
        %v647 = vsel %vm646, %v640, 0.0
        %v648 = vsel %vm646, %v641, 0.0
        %v649 = vadd.f32 %v647, %v648
        %v650 = vsel %vm646, %v642, 0.0
        %v651 = vadd.f32 %v649, %v650
        %v652 = vsel %vm646, %v643, 0.0
        %v653 = vadd.f32 %v651, %v652
        %654 = vadd.xlane.f32.xlu0 %v653
        %v655 = vpop.xlane.xlu0 %654
        %v656 = vrot.slane %v655, 4
        %v657 = vadd.f32 %v655, %v656
        %v658 = vrot.slane %v657, 2
        %v659 = vadd.f32 %v657, %v658
        %v660 = vrot.slane %v659, 1
        %v661 = vadd.f32 %v659, %v660
        %s662 = vtos %v661
        %v663 = vrcp.pop 512.0
        %v664 = vmul.f32 512.0, %v663
        %v665 = vsub.f32 1.0, %v664
        %v666 = vmul.f32 %v663, %v665
        %v667 = vadd.f32 %v663, %v666
        %vm668 = vweird.f32 %v663
        %v669 = vsel %vm668, %v663, %v667
        %s670 = vtos %v669
        %s671 = smul.f32 %s662, %s670
        %v672 = vmul.f32 %v640, %v640
        %v673 = vmul.f32 %v641, %v641
        %v674 = vmul.f32 %v642, %v642
        %v675 = vmul.f32 %v643, %v643
        %v676 = vsel %vm646, %v672, 0.0
        %v677 = vsel %vm646, %v673, 0.0
        %v678 = vadd.f32 %v676, %v677
        %v679 = vsel %vm646, %v674, 0.0
        %v680 = vadd.f32 %v678, %v679
        %v681 = vsel %vm646, %v675, 0.0
        %v682 = vadd.f32 %v680, %v681
        %683 = vadd.xlane.f32.xlu0 %v682
        %v684 = vpop.xlane.xlu0 %683
        %v685 = vrot.slane %v684, 4
        %v686 = vadd.f32 %v684, %v685
        %v687 = vrot.slane %v686, 2
        %v688 = vadd.f32 %v686, %v687
        %v689 = vrot.slane %v688, 1
        %v690 = vadd.f32 %v688, %v689
        %s691 = vtos %v690
        %v692 = vrcp.pop 512.0
        %v693 = vmul.f32 512.0, %v692
        %v694 = vsub.f32 1.0, %v693
        %v695 = vmul.f32 %v692, %v694
        %v696 = vadd.f32 %v692, %v695
        %vm697 = vweird.f32 %v692
        %v698 = vsel %vm697, %v692, %v696
        %s699 = vtos %v698
        %s700 = smul.f32 %s691, %s699
        %s701 = smul.f32 %s671, %s671
        %s702 = ssub.f32 %s700, %s701
        %s703 = sadd.f32 %s702, 1e-08
        %v704 = vstv %s703
        %v705 = vrsqrt.pop %v704
        %v706 = vmul.f32 %v705, %v704
        %v707 = vmul.f32 %v706, %v705
        %v708 = vmul.f32 0.5, %v707
        %v709 = vsub.f32 1.5, %v708
        %v710 = vmul.f32 %v705, %v709
        %vm711 = vweird.f32 %v704
        %vm712 = vweird.f32 %v705
        %vm713 = vmor %vm711, %vm712
        %v714 = vsel %vm713, %v705, %v710
        %s715 = vtos %v714
        %v716 = vstv %s715
        %v717 = vmul.f32 %v716, %v644
        %v719 = vperm.slane %v717, 0
        %v721 = vmul.f32 %v640, %v719
        %v722 = vmul.f32 %v641, %v719
        %v723 = vmul.f32 %v642, %v719
        %v724 = vmul.f32 %v643, %v719
        %v725 = vstv %s671
        %v726 = vmul.f32 %v725, %v717
        %v727 = vsub.f32 %v645, %v726
        %v729 = vperm.slane %v727, 0
        %v731 = vadd.f32 %v721, %v729
        %v732 = vadd.f32 %v722, %v729
        %v733 = vadd.f32 %v723, %v729
        %v734 = vadd.f32 %v724, %v729
        %v735 = vld [vmem:[%s3] sm:$0xff]
        %v736 = vld [vmem:[%s3 + $0x8] sm:$0xff]
        %v737 = vld [vmem:[%s4] sm:$0x1]
        %v739 = vperm.slane %v737, 0
        %v742 = vsel %vm646, %v731, 0
        %v745 = vsel %vm646, %v732, 0
        %v748 = vsel %vm646, %v733, 0
        %v751 = vsel %vm646, %v734, 0
        %753 = vmatpush.msra.mxu0 0.0
        %754 = vmatpush.msra.mxu0 0.0
        %755 = vmatpush.msra.mxu0 0.0
        %756 = vmatpush.msra.mxu0 0.0
        %757 = vmatpush.msra.mxu0 0.0
        %758 = vmatpush.msra.mxu0 0.0
        %759 = vmatpush.msra.mxu0 0.0
        %760 = vmatpush.msra.mxu0 0.0
        %761 = vmatpush.msra.mxu0 0.0
        %762 = vmatpush.msra.mxu0 0.0
        %763 = vmatpush.msra.mxu0 0.0
        %764 = vmatpush.msra.mxu0 0.0
        %765 = vmatpush.msra.mxu0 0.0
        %766 = vmatpush.msra.mxu0 0.0
        %767 = vmatpush.msra.mxu0 %v736
        %768 = vmatpush.msra.mxu0 %v735
        %769 = vmatmul.f32.gmra.mxu0 %v742
        %v770 = vpop.f32.mrf.mxu0
        %v771 = vadd.f32 %v739, %v770
        %772 = vmatmul.f32.gmra.mxu0 %v745
        %v773 = vpop.f32.mrf.mxu0
        %v774 = vadd.f32 %v739, %v773
        %775 = vmatmul.f32.gmra.mxu0 %v748
        %v776 = vpop.f32.mrf.mxu0
        %v777 = vadd.f32 %v739, %v776
        %778 = vmatmul.f32.gmra.mxu0 %v751
        %v779 = vpop.f32.mrf.mxu0
        %v780 = vadd.f32 %v739, %v779
        %781 = vdwg.mxu0
        %v782 = vlaneseq
        %v783 = vshrl.u32 %v782, 7
        %v784 = vadd.s32 %v783, 8
        %v785 = vadd.s32 %v783, 16
        %v786 = vadd.s32 %v783, 24
        %vm787 = vcmp.ge.s32.totalorder %v783, 1
        %vm788 = vcmp.ge.s32.totalorder %v784, 1
        %vm789 = vcmp.ge.s32.totalorder %v785, 1
        %vm790 = vcmp.ge.s32.totalorder %v786, 1
        %vm791 = vcmp.lt.s32.totalorder %v783, 31
        %vm792 = vcmp.lt.s32.totalorder %v784, 31
        %vm793 = vcmp.lt.s32.totalorder %v785, 31
        %vm794 = vcmp.lt.s32.totalorder %v786, 31
        %vm795 = vcmp.ge.s32.totalorder %v783, 2
        %vm796 = vcmp.ge.s32.totalorder %v784, 2
        %vm797 = vcmp.ge.s32.totalorder %v785, 2
        %vm798 = vcmp.ge.s32.totalorder %v786, 2
        %vm799 = vcmp.lt.s32.totalorder %v783, 30
        %vm800 = vcmp.lt.s32.totalorder %v784, 30
        %vm801 = vcmp.lt.s32.totalorder %v785, 30
        %vm802 = vcmp.lt.s32.totalorder %v786, 30
        %s803 = sld [smem:[#allocation8]]
        %s804 = sld [smem:[#allocation8 + $0x1]]
        %v805 = vld [vmem:[#allocation2] sm:$0xff]
        %v806 = vld [vmem:[#allocation2 + $0x8] sm:$0xff]
        %v807 = vld [vmem:[#allocation2 + $0x10] sm:$0xff]
        %v808 = vld [vmem:[#allocation2 + $0x18] sm:$0xff]
        %v809 = vld [vmem:[%s6] sm:$0x1]
        %v811 = vperm.slane %v809, 0
        %vm813 = vcmask 261120
        %v815 = vsel %vm813, %v771, 0
        %v818 = vsel %vm813, %v774, 0
        %v821 = vsel %vm813, %v777, 0
        %v824 = vsel %vm813, %v780, 0
        %826 = vmatpush.msra.mxu0 0.0
        %827 = vmatpush.msra.mxu0 0.0
        %828 = vmatpush.msra.mxu0 0.0
        %829 = vmatpush.msra.mxu0 0.0
        %830 = vmatpush.msra.mxu0 0.0
        %831 = vmatpush.msra.mxu0 0.0
        %832 = vmatpush.msra.mxu0 0.0
        %833 = vmatpush.msra.mxu0 0.0
        %834 = vmatpush.msra.mxu0 0.0
        %835 = vmatpush.msra.mxu0 0.0
        %836 = vmatpush.msra.mxu0 0.0
        %837 = vmatpush.msra.mxu0 0.0
        %838 = vmatpush.msra.mxu0 %v808
        %839 = vmatpush.msra.mxu0 %v807
        %840 = vmatpush.msra.mxu0 %v806
        %841 = vmatpush.msra.mxu0 %v805
        %842 = vmatmul.f32.gmra.mxu0 %v815
        %v843 = vpop.f32.mrf.mxu0
        %v844 = vadd.f32 %v811, %v843
        %845 = vmatmul.f32.gmra.mxu0 %v818
        %v846 = vpop.f32.mrf.mxu0
        %v847 = vadd.f32 %v811, %v846
        %848 = vmatmul.f32.gmra.mxu0 %v821
        %v849 = vpop.f32.mrf.mxu0
        %v850 = vadd.f32 %v811, %v849
        %851 = vmatmul.f32.gmra.mxu0 %v824
        %v852 = vpop.f32.mrf.mxu0
        %v853 = vadd.f32 %v811, %v852
        %854 = vdwg.mxu0
        %vm855 = vcmp.ge.f32.partialorder %v844, 0.0
        %vm856 = vcmp.ge.f32.partialorder %v847, 0.0
        %vm857 = vcmp.ge.f32.partialorder %v850, 0.0
        %vm858 = vcmp.ge.f32.partialorder %v853, 0.0
        %v859 = vstv %s803
        %v860 = vmul.f32 %v859, %v844
        %v861 = vmul.f32 %v859, %v847
        %v862 = vmul.f32 %v859, %v850
        %v863 = vmul.f32 %v859, %v853
        %v864 = vsel %vm855, %v844, %v860
        %v865 = vsel %vm856, %v847, %v861
        %v866 = vsel %vm857, %v850, %v862
        %v867 = vsel %vm858, %v853, %v863
        %v868 = vld [vmem:[%s7] sm:$0x1]
        %v869 = vld [vmem:[%s8] sm:$0x1]
        %v870 = vsel %vm813, %v864, 0.0
        %v871 = vsel %vm813, %v865, 0.0
        %v872 = vadd.f32 %v870, %v871
        %v873 = vsel %vm813, %v866, 0.0
        %v874 = vadd.f32 %v872, %v873
        %v875 = vsel %vm813, %v867, 0.0
        %v876 = vadd.f32 %v874, %v875
        %877 = vadd.xlane.f32.xlu0 %v876
        %v878 = vpop.xlane.xlu0 %877
        %v879 = vrot.slane %v878, 4
        %v880 = vadd.f32 %v878, %v879
        %v881 = vrot.slane %v880, 2
        %v882 = vadd.f32 %v880, %v881
        %v883 = vrot.slane %v882, 1
        %v884 = vadd.f32 %v882, %v883
        %s885 = vtos %v884
        %v886 = vrcp.pop 1024.0
        %v887 = vmul.f32 1024.0, %v886
        %v888 = vsub.f32 1.0, %v887
        %v889 = vmul.f32 %v886, %v888
        %v890 = vadd.f32 %v886, %v889
        %vm891 = vweird.f32 %v886
        %v892 = vsel %vm891, %v886, %v890
        %s893 = vtos %v892
        %s894 = smul.f32 %s885, %s893
        %v895 = vmul.f32 %v864, %v864
        %v896 = vmul.f32 %v865, %v865
        %v897 = vmul.f32 %v866, %v866
        %v898 = vmul.f32 %v867, %v867
        %v899 = vsel %vm813, %v895, 0.0
        %v900 = vsel %vm813, %v896, 0.0
        %v901 = vadd.f32 %v899, %v900
        %v902 = vsel %vm813, %v897, 0.0
        %v903 = vadd.f32 %v901, %v902
        %v904 = vsel %vm813, %v898, 0.0
        %v905 = vadd.f32 %v903, %v904
        %906 = vadd.xlane.f32.xlu0 %v905
        %v907 = vpop.xlane.xlu0 %906
        %v908 = vrot.slane %v907, 4
        %v909 = vadd.f32 %v907, %v908
        %v910 = vrot.slane %v909, 2
        %v911 = vadd.f32 %v909, %v910
        %v912 = vrot.slane %v911, 1
        %v913 = vadd.f32 %v911, %v912
        %s914 = vtos %v913
        %v915 = vrcp.pop 1024.0
        %v916 = vmul.f32 1024.0, %v915
        %v917 = vsub.f32 1.0, %v916
        %v918 = vmul.f32 %v915, %v917
        %v919 = vadd.f32 %v915, %v918
        %vm920 = vweird.f32 %v915
        %v921 = vsel %vm920, %v915, %v919
        %s922 = vtos %v921
        %s923 = smul.f32 %s914, %s922
        %s924 = smul.f32 %s894, %s894
        %s925 = ssub.f32 %s923, %s924
        %s926 = sadd.f32 %s925, 1e-08
        %v927 = vstv %s926
        %v928 = vrsqrt.pop %v927
        %v929 = vmul.f32 %v928, %v927
        %v930 = vmul.f32 %v929, %v928
        %v931 = vmul.f32 0.5, %v930
        %v932 = vsub.f32 1.5, %v931
        %v933 = vmul.f32 %v928, %v932
        %vm934 = vweird.f32 %v927
        %vm935 = vweird.f32 %v928
        %vm936 = vmor %vm934, %vm935
        %v937 = vsel %vm936, %v928, %v933
        %s938 = vtos %v937
        %v939 = vstv %s938
        %v940 = vmul.f32 %v939, %v868
        %v942 = vperm.slane %v940, 0
        %v944 = vmul.f32 %v864, %v942
        %v945 = vmul.f32 %v865, %v942
        %v946 = vmul.f32 %v866, %v942
        %v947 = vmul.f32 %v867, %v942
        %v948 = vstv %s894
        %v949 = vmul.f32 %v948, %v940
        %v950 = vsub.f32 %v869, %v949
        %v952 = vperm.slane %v950, 0
        %v954 = vadd.f32 %v944, %v952
        %v955 = vadd.f32 %v945, %v952
        %v956 = vadd.f32 %v946, %v952
        %v957 = vadd.f32 %v947, %v952
        %v958 = vrot.slane %v954, 7
        %v959 = vrot.slane %v955, 7
        %v960 = vrot.slane %v956, 7
        %v961 = vrot.slane %v957, 7
        %vm962 = vcmp.lt.s32.totalorder %v783, 1
        %v963 = vsel %vm962, %v960, %v961
        %v964 = vsel %vm962, %v959, %v960
        %v965 = vsel %vm962, %v958, %v959
        %v966 = vsel %vm962, %v961, %v958
        %v967 = vsel %vm787, %v966, 0.0
        %v968 = vsel %vm788, %v965, 0.0
        %v969 = vsel %vm789, %v964, 0.0
        %v970 = vsel %vm790, %v963, 0.0
        %v971 = vrot.slane %v954, 1
        %v972 = vrot.slane %v955, 1
        %v973 = vrot.slane %v956, 1
        %v974 = vrot.slane %v957, 1
        %vm975 = vcmp.lt.s32.totalorder %v783, 7
        %v976 = vsel %vm975, %v973, %v974
        %v977 = vsel %vm975, %v972, %v973
        %v978 = vsel %vm975, %v971, %v972
        %v979 = vsel %vm975, %v974, %v971
        %v980 = vsel %vm791, %v978, 0.0
        %v981 = vsel %vm792, %v977, 0.0
        %v982 = vsel %vm793, %v976, 0.0
        %v983 = vsel %vm794, %v979, 0.0
        %v984 = vld [vmem:[#allocation5] sm:$0xff]
        %v985 = vld [vmem:[#allocation5 + $0x8] sm:$0xff]
        %v986 = vld [vmem:[#allocation5 + $0x10] sm:$0xff]
        %v987 = vld [vmem:[#allocation5 + $0x18] sm:$0xff]
        %s988 = scalar_lea.vmem [#allocation5], 32
        %v989 = vld [vmem:[%s988] sm:$0xff]
        %v990 = vld [vmem:[%s988 + $0x8] sm:$0xff]
        %v991 = vld [vmem:[%s988 + $0x10] sm:$0xff]
        %v992 = vld [vmem:[%s988 + $0x18] sm:$0xff]
        %v994 = vsel %vm813, %v954, 0
        %v997 = vsel %vm813, %v955, 0
        %v1000 = vsel %vm813, %v956, 0
        %v1003 = vsel %vm813, %v957, 0
        %1005 = vmatpush.msra.mxu0 0.0
        %1006 = vmatpush.msra.mxu0 0.0
        %1007 = vmatpush.msra.mxu0 0.0
        %1008 = vmatpush.msra.mxu0 0.0
        %1009 = vmatpush.msra.mxu0 0.0
        %1010 = vmatpush.msra.mxu0 0.0
        %1011 = vmatpush.msra.mxu0 0.0
        %1012 = vmatpush.msra.mxu0 0.0
        %1013 = vmatpush.msra.mxu0 0.0
        %1014 = vmatpush.msra.mxu0 0.0
        %1015 = vmatpush.msra.mxu0 0.0
        %1016 = vmatpush.msra.mxu0 0.0
        %1017 = vmatpush.msra.mxu0 %v992
        %1018 = vmatpush.msra.mxu0 %v991
        %1019 = vmatpush.msra.mxu0 %v990
        %1020 = vmatpush.msra.mxu0 %v989
        %1021 = vmatmul.f32.gmra.mxu0 %v994
        %v1022 = vpop.f32.mrf.mxu0
        %v1023 = vadd.f32 0.0, %v1022
        %1024 = vmatmul.f32.gmra.mxu0 %v997
        %v1025 = vpop.f32.mrf.mxu0
        %v1026 = vadd.f32 0.0, %v1025
        %1027 = vmatmul.f32.gmra.mxu0 %v1000
        %v1028 = vpop.f32.mrf.mxu0
        %v1029 = vadd.f32 0.0, %v1028
        %1030 = vmatmul.f32.gmra.mxu0 %v1003
        %v1031 = vpop.f32.mrf.mxu0
        %v1032 = vadd.f32 0.0, %v1031
        %1033 = vdwg.mxu0
        %v1035 = vsel %vm813, %v967, 0
        %v1038 = vsel %vm813, %v968, 0
        %v1041 = vsel %vm813, %v969, 0
        %v1044 = vsel %vm813, %v970, 0
        %1046 = vmatpush.msra.mxu0 0.0
        %1047 = vmatpush.msra.mxu0 0.0
        %1048 = vmatpush.msra.mxu0 0.0
        %1049 = vmatpush.msra.mxu0 0.0
        %1050 = vmatpush.msra.mxu0 0.0
        %1051 = vmatpush.msra.mxu0 0.0
        %1052 = vmatpush.msra.mxu0 0.0
        %1053 = vmatpush.msra.mxu0 0.0
        %1054 = vmatpush.msra.mxu0 0.0
        %1055 = vmatpush.msra.mxu0 0.0
        %1056 = vmatpush.msra.mxu0 0.0
        %1057 = vmatpush.msra.mxu0 0.0
        %1058 = vmatpush.msra.mxu0 %v987
        %1059 = vmatpush.msra.mxu0 %v986
        %1060 = vmatpush.msra.mxu0 %v985
        %1061 = vmatpush.msra.mxu0 %v984
        %1062 = vmatmul.f32.gmra.mxu0 %v1035
        %v1063 = vpop.f32.mrf.mxu0
        %v1064 = vadd.f32 %v1023, %v1063
        %1065 = vmatmul.f32.gmra.mxu0 %v1038
        %v1066 = vpop.f32.mrf.mxu0
        %v1067 = vadd.f32 %v1026, %v1066
        %1068 = vmatmul.f32.gmra.mxu0 %v1041
        %v1069 = vpop.f32.mrf.mxu0
        %v1070 = vadd.f32 %v1029, %v1069
        %1071 = vmatmul.f32.gmra.mxu0 %v1044
        %v1072 = vpop.f32.mrf.mxu0
        %v1073 = vadd.f32 %v1032, %v1072
        %1074 = vdwg.mxu0
        %s1075 = scalar_lea.vmem [#allocation5], 64
        %v1076 = vld [vmem:[%s1075] sm:$0xff]
        %v1077 = vld [vmem:[%s1075 + $0x8] sm:$0xff]
        %v1078 = vld [vmem:[%s1075 + $0x10] sm:$0xff]
        %v1079 = vld [vmem:[%s1075 + $0x18] sm:$0xff]
        %v1081 = vsel %vm813, %v980, 0
        %v1084 = vsel %vm813, %v981, 0
        %v1087 = vsel %vm813, %v982, 0
        %v1090 = vsel %vm813, %v983, 0
        %1092 = vmatpush.msra.mxu0 0.0
        %1093 = vmatpush.msra.mxu0 0.0
        %1094 = vmatpush.msra.mxu0 0.0
        %1095 = vmatpush.msra.mxu0 0.0
        %1096 = vmatpush.msra.mxu0 0.0
        %1097 = vmatpush.msra.mxu0 0.0
        %1098 = vmatpush.msra.mxu0 0.0
        %1099 = vmatpush.msra.mxu0 0.0
        %1100 = vmatpush.msra.mxu0 0.0
        %1101 = vmatpush.msra.mxu0 0.0
        %1102 = vmatpush.msra.mxu0 0.0
        %1103 = vmatpush.msra.mxu0 0.0
        %1104 = vmatpush.msra.mxu0 %v1079
        %1105 = vmatpush.msra.mxu0 %v1078
        %1106 = vmatpush.msra.mxu0 %v1077
        %1107 = vmatpush.msra.mxu0 %v1076
        %1108 = vmatmul.f32.gmra.mxu0 %v1081
        %v1109 = vpop.f32.mrf.mxu0
        %v1110 = vadd.f32 0.0, %v1109
        %1111 = vmatmul.f32.gmra.mxu0 %v1084
        %v1112 = vpop.f32.mrf.mxu0
        %v1113 = vadd.f32 0.0, %v1112
        %1114 = vmatmul.f32.gmra.mxu0 %v1087
        %v1115 = vpop.f32.mrf.mxu0
        %v1116 = vadd.f32 0.0, %v1115
        %1117 = vmatmul.f32.gmra.mxu0 %v1090
        %v1118 = vpop.f32.mrf.mxu0
        %v1119 = vadd.f32 0.0, %v1118
        %1120 = vdwg.mxu0
        %v1121 = vadd.f32 %v1064, %v1110
        %v1122 = vadd.f32 %v1067, %v1113
        %v1123 = vadd.f32 %v1070, %v1116
        %v1124 = vadd.f32 %v1073, %v1119
        %v1125 = vld [vmem:[%s10] sm:$0x1]
        %v1127 = vperm.slane %v1125, 0
        %v1129 = vadd.f32 %v1121, %v1127
        %v1130 = vadd.f32 %v1122, %v1127
        %v1131 = vadd.f32 %v1123, %v1127
        %v1132 = vadd.f32 %v1124, %v1127
        %vm1133 = vcmp.ge.f32.partialorder %v1129, 0.0
        %vm1134 = vcmp.ge.f32.partialorder %v1130, 0.0
        %vm1135 = vcmp.ge.f32.partialorder %v1131, 0.0
        %vm1136 = vcmp.ge.f32.partialorder %v1132, 0.0
        %v1137 = vstv %s804
        %v1138 = vmul.f32 %v1137, %v1129
        %v1139 = vmul.f32 %v1137, %v1130
        %v1140 = vmul.f32 %v1137, %v1131
        %v1141 = vmul.f32 %v1137, %v1132
        %v1142 = vsel %vm1133, %v1129, %v1138
        %v1143 = vsel %vm1134, %v1130, %v1139
        %v1144 = vsel %vm1135, %v1131, %v1140
        %v1145 = vsel %vm1136, %v1132, %v1141
        %v1146 = vld [vmem:[%s11] sm:$0x1]
        %v1147 = vld [vmem:[%s12] sm:$0x1]
        %v1148 = vsel %vm813, %v1142, 0.0
        %v1149 = vsel %vm813, %v1143, 0.0
        %v1150 = vadd.f32 %v1148, %v1149
        %v1151 = vsel %vm813, %v1144, 0.0
        %v1152 = vadd.f32 %v1150, %v1151
        %v1153 = vsel %vm813, %v1145, 0.0
        %v1154 = vadd.f32 %v1152, %v1153
        %1155 = vadd.xlane.f32.xlu0 %v1154
        %v1156 = vpop.xlane.xlu0 %1155
        %v1157 = vrot.slane %v1156, 4
        %v1158 = vadd.f32 %v1156, %v1157
        %v1159 = vrot.slane %v1158, 2
        %v1160 = vadd.f32 %v1158, %v1159
        %v1161 = vrot.slane %v1160, 1
        %v1162 = vadd.f32 %v1160, %v1161
        %s1163 = vtos %v1162
        %v1164 = vrcp.pop 1024.0
        %v1165 = vmul.f32 1024.0, %v1164
        %v1166 = vsub.f32 1.0, %v1165
        %v1167 = vmul.f32 %v1164, %v1166
        %v1168 = vadd.f32 %v1164, %v1167
        %vm1169 = vweird.f32 %v1164
        %v1170 = vsel %vm1169, %v1164, %v1168
        %s1171 = vtos %v1170
        %s1172 = smul.f32 %s1163, %s1171
        %v1173 = vmul.f32 %v1142, %v1142
        %v1174 = vmul.f32 %v1143, %v1143
        %v1175 = vmul.f32 %v1144, %v1144
        %v1176 = vmul.f32 %v1145, %v1145
        %v1177 = vsel %vm813, %v1173, 0.0
        %v1178 = vsel %vm813, %v1174, 0.0
        %v1179 = vadd.f32 %v1177, %v1178
        %v1180 = vsel %vm813, %v1175, 0.0
        %v1181 = vadd.f32 %v1179, %v1180
        %v1182 = vsel %vm813, %v1176, 0.0
        %v1183 = vadd.f32 %v1181, %v1182
        %1184 = vadd.xlane.f32.xlu0 %v1183
        %v1185 = vpop.xlane.xlu0 %1184
        %v1186 = vrot.slane %v1185, 4
        %v1187 = vadd.f32 %v1185, %v1186
        %v1188 = vrot.slane %v1187, 2
        %v1189 = vadd.f32 %v1187, %v1188
        %v1190 = vrot.slane %v1189, 1
        %v1191 = vadd.f32 %v1189, %v1190
        %s1192 = vtos %v1191
        %v1193 = vrcp.pop 1024.0
        %v1194 = vmul.f32 1024.0, %v1193
        %v1195 = vsub.f32 1.0, %v1194
        %v1196 = vmul.f32 %v1193, %v1195
        %v1197 = vadd.f32 %v1193, %v1196
        %vm1198 = vweird.f32 %v1193
        %v1199 = vsel %vm1198, %v1193, %v1197
        %s1200 = vtos %v1199
        %s1201 = smul.f32 %s1192, %s1200
        %s1202 = smul.f32 %s1172, %s1172
        %s1203 = ssub.f32 %s1201, %s1202
        %s1204 = sadd.f32 %s1203, 1e-08
        %v1205 = vstv %s1204
        %v1206 = vrsqrt.pop %v1205
        %v1207 = vmul.f32 %v1206, %v1205
        %v1208 = vmul.f32 %v1207, %v1206
        %v1209 = vmul.f32 0.5, %v1208
        %v1210 = vsub.f32 1.5, %v1209
        %v1211 = vmul.f32 %v1206, %v1210
        %vm1212 = vweird.f32 %v1205
        %vm1213 = vweird.f32 %v1206
        %vm1214 = vmor %vm1212, %vm1213
        %v1215 = vsel %vm1214, %v1206, %v1211
        %s1216 = vtos %v1215
        %v1217 = vstv %s1216
        %v1218 = vmul.f32 %v1217, %v1146
        %v1220 = vperm.slane %v1218, 0
        %v1222 = vmul.f32 %v1142, %v1220
        %v1223 = vmul.f32 %v1143, %v1220
        %v1224 = vmul.f32 %v1144, %v1220
        %v1225 = vmul.f32 %v1145, %v1220
        %v1226 = vstv %s1172
        %v1227 = vmul.f32 %v1226, %v1218
        %v1228 = vsub.f32 %v1147, %v1227
        %v1230 = vperm.slane %v1228, 0
        %v1232 = vadd.f32 %v1222, %v1230
        %v1233 = vadd.f32 %v1223, %v1230
        %v1234 = vadd.f32 %v1224, %v1230
        %v1235 = vadd.f32 %v1225, %v1230
        %v1236 = vld [vmem:[#allocation7] sm:$0xff]
        %v1237 = vld [vmem:[#allocation7 + $0x8] sm:$0xff]
        %v1238 = vld [vmem:[#allocation7 + $0x10] sm:$0xff]
        %v1239 = vld [vmem:[#allocation7 + $0x18] sm:$0xff]
        %v1240 = vld [vmem:[%s14] sm:$0x1]
        %v1242 = vperm.slane %v1240, 0
        %v1245 = vsel %vm813, %v1232, 0
        %v1248 = vsel %vm813, %v1233, 0
        %v1251 = vsel %vm813, %v1234, 0
        %v1254 = vsel %vm813, %v1235, 0
        %1256 = vmatpush.msra.mxu0 0.0
        %1257 = vmatpush.msra.mxu0 0.0
        %1258 = vmatpush.msra.mxu0 0.0
        %1259 = vmatpush.msra.mxu0 0.0
        %1260 = vmatpush.msra.mxu0 0.0
        %1261 = vmatpush.msra.mxu0 0.0
        %1262 = vmatpush.msra.mxu0 0.0
        %1263 = vmatpush.msra.mxu0 0.0
        %1264 = vmatpush.msra.mxu0 0.0
        %1265 = vmatpush.msra.mxu0 0.0
        %1266 = vmatpush.msra.mxu0 0.0
        %1267 = vmatpush.msra.mxu0 0.0
        %1268 = vmatpush.msra.mxu0 %v1239
        %1269 = vmatpush.msra.mxu0 %v1238
        %1270 = vmatpush.msra.mxu0 %v1237
        %1271 = vmatpush.msra.mxu0 %v1236
        %1272 = vmatmul.f32.gmra.mxu0 %v1245
        %v1273 = vpop.f32.mrf.mxu0
        %v1274 = vadd.f32 %v1242, %v1273
        %1275 = vmatmul.f32.gmra.mxu0 %v1248
        %v1276 = vpop.f32.mrf.mxu0
        %v1277 = vadd.f32 %v1242, %v1276
        %1278 = vmatmul.f32.gmra.mxu0 %v1251
        %v1279 = vpop.f32.mrf.mxu0
        %v1280 = vadd.f32 %v1242, %v1279
        %1281 = vmatmul.f32.gmra.mxu0 %v1254
        %v1282 = vpop.f32.mrf.mxu0
        %v1283 = vadd.f32 %v1242, %v1282
        %1284 = vdwg.mxu0
        %v1285 = vadd.f32 %v771, %v1274
        %v1286 = vadd.f32 %v774, %v1277
        %v1287 = vadd.f32 %v777, %v1280
        %v1288 = vadd.f32 %v780, %v1283
        %v1289 = vadd.f32 %v1274, 0.0
        %v1290 = vadd.f32 %v1277, 0.0
        %v1291 = vadd.f32 %v1280, 0.0
        %v1292 = vadd.f32 %v1283, 0.0
        %s1293 = sld [smem:[#allocation8 + $0x2]]
        %s1294 = sld [smem:[#allocation8 + $0x3]]
        %s1295 = scalar_lea.vmem [#allocation2], 32
        %v1296 = vld [vmem:[%s1295] sm:$0xff]
        %v1297 = vld [vmem:[%s1295 + $0x8] sm:$0xff]
        %v1298 = vld [vmem:[%s1295 + $0x10] sm:$0xff]
        %v1299 = vld [vmem:[%s1295 + $0x18] sm:$0xff]
        %s1300 = scalar_lea.vmem %s6, 1
        %v1301 = vld [vmem:[%s1300] sm:$0x1]
        %v1303 = vperm.slane %v1301, 0
        %v1306 = vsel %vm813, %v1285, 0
        %v1309 = vsel %vm813, %v1286, 0
        %v1312 = vsel %vm813, %v1287, 0
        %v1315 = vsel %vm813, %v1288, 0
        %1317 = vmatpush.msra.mxu0 0.0
        %1318 = vmatpush.msra.mxu0 0.0
        %1319 = vmatpush.msra.mxu0 0.0
        %1320 = vmatpush.msra.mxu0 0.0
        %1321 = vmatpush.msra.mxu0 0.0
        %1322 = vmatpush.msra.mxu0 0.0
        %1323 = vmatpush.msra.mxu0 0.0
        %1324 = vmatpush.msra.mxu0 0.0
        %1325 = vmatpush.msra.mxu0 0.0
        %1326 = vmatpush.msra.mxu0 0.0
        %1327 = vmatpush.msra.mxu0 0.0
        %1328 = vmatpush.msra.mxu0 0.0
        %1329 = vmatpush.msra.mxu0 %v1299
        %1330 = vmatpush.msra.mxu0 %v1298
        %1331 = vmatpush.msra.mxu0 %v1297
        %1332 = vmatpush.msra.mxu0 %v1296
        %1333 = vmatmul.f32.gmra.mxu0 %v1306
        %v1334 = vpop.f32.mrf.mxu0
        %v1335 = vadd.f32 %v1303, %v1334
        %1336 = vmatmul.f32.gmra.mxu0 %v1309
        %v1337 = vpop.f32.mrf.mxu0
        %v1338 = vadd.f32 %v1303, %v1337
        %1339 = vmatmul.f32.gmra.mxu0 %v1312
        %v1340 = vpop.f32.mrf.mxu0
        %v1341 = vadd.f32 %v1303, %v1340
        %1342 = vmatmul.f32.gmra.mxu0 %v1315
        %v1343 = vpop.f32.mrf.mxu0
        %v1344 = vadd.f32 %v1303, %v1343
        %1345 = vdwg.mxu0
        %vm1346 = vcmp.ge.f32.partialorder %v1335, 0.0
        %vm1347 = vcmp.ge.f32.partialorder %v1338, 0.0
        %vm1348 = vcmp.ge.f32.partialorder %v1341, 0.0
        %vm1349 = vcmp.ge.f32.partialorder %v1344, 0.0
        %v1350 = vstv %s1293
        %v1351 = vmul.f32 %v1350, %v1335
        %v1352 = vmul.f32 %v1350, %v1338
        %v1353 = vmul.f32 %v1350, %v1341
        %v1354 = vmul.f32 %v1350, %v1344
        %v1355 = vsel %vm1346, %v1335, %v1351
        %v1356 = vsel %vm1347, %v1338, %v1352
        %v1357 = vsel %vm1348, %v1341, %v1353
        %v1358 = vsel %vm1349, %v1344, %v1354
        %s1359 = scalar_lea.vmem %s7, 1
        %v1360 = vld [vmem:[%s1359] sm:$0x1]
        %s1361 = scalar_lea.vmem %s8, 1
        %v1362 = vld [vmem:[%s1361] sm:$0x1]
        %v1363 = vsel %vm813, %v1355, 0.0
        %v1364 = vsel %vm813, %v1356, 0.0
        %v1365 = vadd.f32 %v1363, %v1364
        %v1366 = vsel %vm813, %v1357, 0.0
        %v1367 = vadd.f32 %v1365, %v1366
        %v1368 = vsel %vm813, %v1358, 0.0
        %v1369 = vadd.f32 %v1367, %v1368
        %1370 = vadd.xlane.f32.xlu0 %v1369
        %v1371 = vpop.xlane.xlu0 %1370
        %v1372 = vrot.slane %v1371, 4
        %v1373 = vadd.f32 %v1371, %v1372
        %v1374 = vrot.slane %v1373, 2
        %v1375 = vadd.f32 %v1373, %v1374
        %v1376 = vrot.slane %v1375, 1
        %v1377 = vadd.f32 %v1375, %v1376
        %s1378 = vtos %v1377
        %v1379 = vrcp.pop 1024.0
        %v1380 = vmul.f32 1024.0, %v1379
        %v1381 = vsub.f32 1.0, %v1380
        %v1382 = vmul.f32 %v1379, %v1381
        %v1383 = vadd.f32 %v1379, %v1382
        %vm1384 = vweird.f32 %v1379
        %v1385 = vsel %vm1384, %v1379, %v1383
        %s1386 = vtos %v1385
        %s1387 = smul.f32 %s1378, %s1386
        %v1388 = vmul.f32 %v1355, %v1355
        %v1389 = vmul.f32 %v1356, %v1356
        %v1390 = vmul.f32 %v1357, %v1357
        %v1391 = vmul.f32 %v1358, %v1358
        %v1392 = vsel %vm813, %v1388, 0.0
        %v1393 = vsel %vm813, %v1389, 0.0
        %v1394 = vadd.f32 %v1392, %v1393
        %v1395 = vsel %vm813, %v1390, 0.0
        %v1396 = vadd.f32 %v1394, %v1395
        %v1397 = vsel %vm813, %v1391, 0.0
        %v1398 = vadd.f32 %v1396, %v1397
        %1399 = vadd.xlane.f32.xlu0 %v1398
        %v1400 = vpop.xlane.xlu0 %1399
        %v1401 = vrot.slane %v1400, 4
        %v1402 = vadd.f32 %v1400, %v1401
        %v1403 = vrot.slane %v1402, 2
        %v1404 = vadd.f32 %v1402, %v1403
        %v1405 = vrot.slane %v1404, 1
        %v1406 = vadd.f32 %v1404, %v1405
        %s1407 = vtos %v1406
        %v1408 = vrcp.pop 1024.0
        %v1409 = vmul.f32 1024.0, %v1408
        %v1410 = vsub.f32 1.0, %v1409
        %v1411 = vmul.f32 %v1408, %v1410
        %v1412 = vadd.f32 %v1408, %v1411
        %vm1413 = vweird.f32 %v1408
        %v1414 = vsel %vm1413, %v1408, %v1412
        %s1415 = vtos %v1414
        %s1416 = smul.f32 %s1407, %s1415
        %s1417 = smul.f32 %s1387, %s1387
        %s1418 = ssub.f32 %s1416, %s1417
        %s1419 = sadd.f32 %s1418, 1e-08
        %v1420 = vstv %s1419
        %v1421 = vrsqrt.pop %v1420
        %v1422 = vmul.f32 %v1421, %v1420
        %v1423 = vmul.f32 %v1422, %v1421
        %v1424 = vmul.f32 0.5, %v1423
        %v1425 = vsub.f32 1.5, %v1424
        %v1426 = vmul.f32 %v1421, %v1425
        %vm1427 = vweird.f32 %v1420
        %vm1428 = vweird.f32 %v1421
        %vm1429 = vmor %vm1427, %vm1428
        %v1430 = vsel %vm1429, %v1421, %v1426
        %s1431 = vtos %v1430
        %v1432 = vstv %s1431
        %v1433 = vmul.f32 %v1432, %v1360
        %v1435 = vperm.slane %v1433, 0
        %v1437 = vmul.f32 %v1355, %v1435
        %v1438 = vmul.f32 %v1356, %v1435
        %v1439 = vmul.f32 %v1357, %v1435
        %v1440 = vmul.f32 %v1358, %v1435
        %v1441 = vstv %s1387
        %v1442 = vmul.f32 %v1441, %v1433
        %v1443 = vsub.f32 %v1362, %v1442
        %v1445 = vperm.slane %v1443, 0
        %v1447 = vadd.f32 %v1437, %v1445
        %v1448 = vadd.f32 %v1438, %v1445
        %v1449 = vadd.f32 %v1439, %v1445
        %v1450 = vadd.f32 %v1440, %v1445
        %v1451 = vrot.slane %v1447, 6
        %v1452 = vrot.slane %v1448, 6
        %v1453 = vrot.slane %v1449, 6
        %v1454 = vrot.slane %v1450, 6
        %vm1455 = vcmp.lt.s32.totalorder %v783, 2
        %v1456 = vsel %vm1455, %v1453, %v1454
        %v1457 = vsel %vm1455, %v1452, %v1453
        %v1458 = vsel %vm1455, %v1451, %v1452
        %v1459 = vsel %vm1455, %v1454, %v1451
        %v1460 = vsel %vm795, %v1459, 0.0
        %v1461 = vsel %vm796, %v1458, 0.0
        %v1462 = vsel %vm797, %v1457, 0.0
        %v1463 = vsel %vm798, %v1456, 0.0
        %v1464 = vrot.slane %v1447, 2
        %v1465 = vrot.slane %v1448, 2
        %v1466 = vrot.slane %v1449, 2
        %v1467 = vrot.slane %v1450, 2
        %vm1468 = vcmp.lt.s32.totalorder %v783, 6
        %v1469 = vsel %vm1468, %v1466, %v1467
        %v1470 = vsel %vm1468, %v1465, %v1466
        %v1471 = vsel %vm1468, %v1464, %v1465
        %v1472 = vsel %vm1468, %v1467, %v1464
        %v1473 = vsel %vm799, %v1471, 0.0
        %v1474 = vsel %vm800, %v1470, 0.0
        %v1475 = vsel %vm801, %v1469, 0.0
        %v1476 = vsel %vm802, %v1472, 0.0
        %s1477 = scalar_lea.vmem [#allocation5], 96
        %v1478 = vld [vmem:[%s1477] sm:$0xff]
        %v1479 = vld [vmem:[%s1477 + $0x8] sm:$0xff]
        %v1480 = vld [vmem:[%s1477 + $0x10] sm:$0xff]
        %v1481 = vld [vmem:[%s1477 + $0x18] sm:$0xff]
        %s1482 = scalar_lea.vmem [#allocation5], 128
        %v1483 = vld [vmem:[%s1482] sm:$0xff]
        %v1484 = vld [vmem:[%s1482 + $0x8] sm:$0xff]
        %v1485 = vld [vmem:[%s1482 + $0x10] sm:$0xff]
        %v1486 = vld [vmem:[%s1482 + $0x18] sm:$0xff]
        %v1488 = vsel %vm813, %v1447, 0
        %v1491 = vsel %vm813, %v1448, 0
        %v1494 = vsel %vm813, %v1449, 0
        %v1497 = vsel %vm813, %v1450, 0
        %1499 = vmatpush.msra.mxu0 0.0
        %1500 = vmatpush.msra.mxu0 0.0
        %1501 = vmatpush.msra.mxu0 0.0
        %1502 = vmatpush.msra.mxu0 0.0
        %1503 = vmatpush.msra.mxu0 0.0
        %1504 = vmatpush.msra.mxu0 0.0
        %1505 = vmatpush.msra.mxu0 0.0
        %1506 = vmatpush.msra.mxu0 0.0
        %1507 = vmatpush.msra.mxu0 0.0
        %1508 = vmatpush.msra.mxu0 0.0
        %1509 = vmatpush.msra.mxu0 0.0
        %1510 = vmatpush.msra.mxu0 0.0
        %1511 = vmatpush.msra.mxu0 %v1486
        %1512 = vmatpush.msra.mxu0 %v1485
        %1513 = vmatpush.msra.mxu0 %v1484
        %1514 = vmatpush.msra.mxu0 %v1483
        %1515 = vmatmul.f32.gmra.mxu0 %v1488
        %v1516 = vpop.f32.mrf.mxu0
        %v1517 = vadd.f32 0.0, %v1516
        %1518 = vmatmul.f32.gmra.mxu0 %v1491
        %v1519 = vpop.f32.mrf.mxu0
        %v1520 = vadd.f32 0.0, %v1519
        %1521 = vmatmul.f32.gmra.mxu0 %v1494
        %v1522 = vpop.f32.mrf.mxu0
        %v1523 = vadd.f32 0.0, %v1522
        %1524 = vmatmul.f32.gmra.mxu0 %v1497
        %v1525 = vpop.f32.mrf.mxu0
        %v1526 = vadd.f32 0.0, %v1525
        %1527 = vdwg.mxu0
        %v1529 = vsel %vm813, %v1460, 0
        %v1532 = vsel %vm813, %v1461, 0
        %v1535 = vsel %vm813, %v1462, 0
        %v1538 = vsel %vm813, %v1463, 0
        %1540 = vmatpush.msra.mxu0 0.0
        %1541 = vmatpush.msra.mxu0 0.0
        %1542 = vmatpush.msra.mxu0 0.0
        %1543 = vmatpush.msra.mxu0 0.0
        %1544 = vmatpush.msra.mxu0 0.0
        %1545 = vmatpush.msra.mxu0 0.0
        %1546 = vmatpush.msra.mxu0 0.0
        %1547 = vmatpush.msra.mxu0 0.0
        %1548 = vmatpush.msra.mxu0 0.0
        %1549 = vmatpush.msra.mxu0 0.0
        %1550 = vmatpush.msra.mxu0 0.0
        %1551 = vmatpush.msra.mxu0 0.0
        %1552 = vmatpush.msra.mxu0 %v1481
        %1553 = vmatpush.msra.mxu0 %v1480
        %1554 = vmatpush.msra.mxu0 %v1479
        %1555 = vmatpush.msra.mxu0 %v1478
        %1556 = vmatmul.f32.gmra.mxu0 %v1529
        %v1557 = vpop.f32.mrf.mxu0
        %v1558 = vadd.f32 %v1517, %v1557
        %1559 = vmatmul.f32.gmra.mxu0 %v1532
        %v1560 = vpop.f32.mrf.mxu0
        %v1561 = vadd.f32 %v1520, %v1560
        %1562 = vmatmul.f32.gmra.mxu0 %v1535
        %v1563 = vpop.f32.mrf.mxu0
        %v1564 = vadd.f32 %v1523, %v1563
        %1565 = vmatmul.f32.gmra.mxu0 %v1538
        %v1566 = vpop.f32.mrf.mxu0
        %v1567 = vadd.f32 %v1526, %v1566
        %1568 = vdwg.mxu0
        %s1569 = scalar_lea.vmem [#allocation5], 160
        %v1570 = vld [vmem:[%s1569] sm:$0xff]
        %v1571 = vld [vmem:[%s1569 + $0x8] sm:$0xff]
        %v1572 = vld [vmem:[%s1569 + $0x10] sm:$0xff]
        %v1573 = vld [vmem:[%s1569 + $0x18] sm:$0xff]
        %v1575 = vsel %vm813, %v1473, 0
        %v1578 = vsel %vm813, %v1474, 0
        %v1581 = vsel %vm813, %v1475, 0
        %v1584 = vsel %vm813, %v1476, 0
        %1586 = vmatpush.msra.mxu0 0.0
        %1587 = vmatpush.msra.mxu0 0.0
        %1588 = vmatpush.msra.mxu0 0.0
        %1589 = vmatpush.msra.mxu0 0.0
        %1590 = vmatpush.msra.mxu0 0.0
        %1591 = vmatpush.msra.mxu0 0.0
        %1592 = vmatpush.msra.mxu0 0.0
        %1593 = vmatpush.msra.mxu0 0.0
        %1594 = vmatpush.msra.mxu0 0.0
        %1595 = vmatpush.msra.mxu0 0.0
        %1596 = vmatpush.msra.mxu0 0.0
        %1597 = vmatpush.msra.mxu0 0.0
        %1598 = vmatpush.msra.mxu0 %v1573
        %1599 = vmatpush.msra.mxu0 %v1572
        %1600 = vmatpush.msra.mxu0 %v1571
        %1601 = vmatpush.msra.mxu0 %v1570
        %1602 = vmatmul.f32.gmra.mxu0 %v1575
        %v1603 = vpop.f32.mrf.mxu0
        %v1604 = vadd.f32 0.0, %v1603
        %1605 = vmatmul.f32.gmra.mxu0 %v1578
        %v1606 = vpop.f32.mrf.mxu0
        %v1607 = vadd.f32 0.0, %v1606
        %1608 = vmatmul.f32.gmra.mxu0 %v1581
        %v1609 = vpop.f32.mrf.mxu0
        %v1610 = vadd.f32 0.0, %v1609
        %1611 = vmatmul.f32.gmra.mxu0 %v1584
        %v1612 = vpop.f32.mrf.mxu0
        %v1613 = vadd.f32 0.0, %v1612
        %1614 = vdwg.mxu0
        %v1615 = vadd.f32 %v1558, %v1604
        %v1616 = vadd.f32 %v1561, %v1607
        %v1617 = vadd.f32 %v1564, %v1610
        %v1618 = vadd.f32 %v1567, %v1613
        %s1619 = scalar_lea.vmem %s10, 1
        %v1620 = vld [vmem:[%s1619] sm:$0x1]
        %v1622 = vperm.slane %v1620, 0
        %v1624 = vadd.f32 %v1615, %v1622
        %v1625 = vadd.f32 %v1616, %v1622
        %v1626 = vadd.f32 %v1617, %v1622
        %v1627 = vadd.f32 %v1618, %v1622
        %vm1628 = vcmp.ge.f32.partialorder %v1624, 0.0
        %vm1629 = vcmp.ge.f32.partialorder %v1625, 0.0
        %vm1630 = vcmp.ge.f32.partialorder %v1626, 0.0
        %vm1631 = vcmp.ge.f32.partialorder %v1627, 0.0
        %v1632 = vstv %s1294
        %v1633 = vmul.f32 %v1632, %v1624
        %v1634 = vmul.f32 %v1632, %v1625
        %v1635 = vmul.f32 %v1632, %v1626
        %v1636 = vmul.f32 %v1632, %v1627
        %v1637 = vsel %vm1628, %v1624, %v1633
        %v1638 = vsel %vm1629, %v1625, %v1634
        %v1639 = vsel %vm1630, %v1626, %v1635
        %v1640 = vsel %vm1631, %v1627, %v1636
        %s1641 = scalar_lea.vmem %s11, 1
        %v1642 = vld [vmem:[%s1641] sm:$0x1]
        %s1643 = scalar_lea.vmem %s12, 1
        %v1644 = vld [vmem:[%s1643] sm:$0x1]
        %v1645 = vsel %vm813, %v1637, 0.0
        %v1646 = vsel %vm813, %v1638, 0.0
        %v1647 = vadd.f32 %v1645, %v1646
        %v1648 = vsel %vm813, %v1639, 0.0
        %v1649 = vadd.f32 %v1647, %v1648
        %v1650 = vsel %vm813, %v1640, 0.0
        %v1651 = vadd.f32 %v1649, %v1650
        %1652 = vadd.xlane.f32.xlu0 %v1651
        %v1653 = vpop.xlane.xlu0 %1652
        %v1654 = vrot.slane %v1653, 4
        %v1655 = vadd.f32 %v1653, %v1654
        %v1656 = vrot.slane %v1655, 2
        %v1657 = vadd.f32 %v1655, %v1656
        %v1658 = vrot.slane %v1657, 1
        %v1659 = vadd.f32 %v1657, %v1658
        %s1660 = vtos %v1659
        %v1661 = vrcp.pop 1024.0
        %v1662 = vmul.f32 1024.0, %v1661
        %v1663 = vsub.f32 1.0, %v1662
        %v1664 = vmul.f32 %v1661, %v1663
        %v1665 = vadd.f32 %v1661, %v1664
        %vm1666 = vweird.f32 %v1661
        %v1667 = vsel %vm1666, %v1661, %v1665
        %s1668 = vtos %v1667
        %s1669 = smul.f32 %s1660, %s1668
        %v1670 = vmul.f32 %v1637, %v1637
        %v1671 = vmul.f32 %v1638, %v1638
        %v1672 = vmul.f32 %v1639, %v1639
        %v1673 = vmul.f32 %v1640, %v1640
        %v1674 = vsel %vm813, %v1670, 0.0
        %v1675 = vsel %vm813, %v1671, 0.0
        %v1676 = vadd.f32 %v1674, %v1675
        %v1677 = vsel %vm813, %v1672, 0.0
        %v1678 = vadd.f32 %v1676, %v1677
        %v1679 = vsel %vm813, %v1673, 0.0
        %v1680 = vadd.f32 %v1678, %v1679
        %1681 = vadd.xlane.f32.xlu0 %v1680
        %v1682 = vpop.xlane.xlu0 %1681
        %v1683 = vrot.slane %v1682, 4
        %v1684 = vadd.f32 %v1682, %v1683
        %v1685 = vrot.slane %v1684, 2
        %v1686 = vadd.f32 %v1684, %v1685
        %v1687 = vrot.slane %v1686, 1
        %v1688 = vadd.f32 %v1686, %v1687
        %s1689 = vtos %v1688
        %v1690 = vrcp.pop 1024.0
        %v1691 = vmul.f32 1024.0, %v1690
        %v1692 = vsub.f32 1.0, %v1691
        %v1693 = vmul.f32 %v1690, %v1692
        %v1694 = vadd.f32 %v1690, %v1693
        %vm1695 = vweird.f32 %v1690
        %v1696 = vsel %vm1695, %v1690, %v1694
        %s1697 = vtos %v1696
        %s1698 = smul.f32 %s1689, %s1697
        %s1699 = smul.f32 %s1669, %s1669
        %s1700 = ssub.f32 %s1698, %s1699
        %s1701 = sadd.f32 %s1700, 1e-08
        %v1702 = vstv %s1701
        %v1703 = vrsqrt.pop %v1702
        %v1704 = vmul.f32 %v1703, %v1702
        %v1705 = vmul.f32 %v1704, %v1703
        %v1706 = vmul.f32 0.5, %v1705
        %v1707 = vsub.f32 1.5, %v1706
        %v1708 = vmul.f32 %v1703, %v1707
        %vm1709 = vweird.f32 %v1702
        %vm1710 = vweird.f32 %v1703
        %vm1711 = vmor %vm1709, %vm1710
        %v1712 = vsel %vm1711, %v1703, %v1708
        %s1713 = vtos %v1712
        %v1714 = vstv %s1713
        %v1715 = vmul.f32 %v1714, %v1642
        %v1717 = vperm.slane %v1715, 0
        %v1719 = vmul.f32 %v1637, %v1717
        %v1720 = vmul.f32 %v1638, %v1717
        %v1721 = vmul.f32 %v1639, %v1717
        %v1722 = vmul.f32 %v1640, %v1717
        %v1723 = vstv %s1669
        %v1724 = vmul.f32 %v1723, %v1715
        %v1725 = vsub.f32 %v1644, %v1724
        %v1727 = vperm.slane %v1725, 0
        %v1729 = vadd.f32 %v1719, %v1727
        %v1730 = vadd.f32 %v1720, %v1727
        %v1731 = vadd.f32 %v1721, %v1727
        %v1732 = vadd.f32 %v1722, %v1727
        %s1733 = scalar_lea.vmem [#allocation7], 32
        %v1734 = vld [vmem:[%s1733] sm:$0xff]
        %v1735 = vld [vmem:[%s1733 + $0x8] sm:$0xff]
        %v1736 = vld [vmem:[%s1733 + $0x10] sm:$0xff]
        %v1737 = vld [vmem:[%s1733 + $0x18] sm:$0xff]
        %s1738 = scalar_lea.vmem %s14, 1
        %v1739 = vld [vmem:[%s1738] sm:$0x1]
        %v1741 = vperm.slane %v1739, 0
        %v1744 = vsel %vm813, %v1729, 0
        %v1747 = vsel %vm813, %v1730, 0
        %v1750 = vsel %vm813, %v1731, 0
        %v1753 = vsel %vm813, %v1732, 0
        %1755 = vmatpush.msra.mxu0 0.0
        %1756 = vmatpush.msra.mxu0 0.0
        %1757 = vmatpush.msra.mxu0 0.0
        %1758 = vmatpush.msra.mxu0 0.0
        %1759 = vmatpush.msra.mxu0 0.0
        %1760 = vmatpush.msra.mxu0 0.0
        %1761 = vmatpush.msra.mxu0 0.0
        %1762 = vmatpush.msra.mxu0 0.0
        %1763 = vmatpush.msra.mxu0 0.0
        %1764 = vmatpush.msra.mxu0 0.0
        %1765 = vmatpush.msra.mxu0 0.0
        %1766 = vmatpush.msra.mxu0 0.0
        %1767 = vmatpush.msra.mxu0 %v1737
        %1768 = vmatpush.msra.mxu0 %v1736
        %1769 = vmatpush.msra.mxu0 %v1735
        %1770 = vmatpush.msra.mxu0 %v1734
        %1771 = vmatmul.f32.gmra.mxu0 %v1744
        %v1772 = vpop.f32.mrf.mxu0
        %v1773 = vadd.f32 %v1741, %v1772
        %1774 = vmatmul.f32.gmra.mxu0 %v1747
        %v1775 = vpop.f32.mrf.mxu0
        %v1776 = vadd.f32 %v1741, %v1775
        %1777 = vmatmul.f32.gmra.mxu0 %v1750
        %v1778 = vpop.f32.mrf.mxu0
        %v1779 = vadd.f32 %v1741, %v1778
        %1780 = vmatmul.f32.gmra.mxu0 %v1753
        %v1781 = vpop.f32.mrf.mxu0
        %v1782 = vadd.f32 %v1741, %v1781
        %1783 = vdwg.mxu0
        %v1784 = vadd.f32 %v1285, %v1773
        %v1785 = vadd.f32 %v1286, %v1776
        %v1786 = vadd.f32 %v1287, %v1779
        %v1787 = vadd.f32 %v1288, %v1782
        %v1788 = vadd.f32 %v1289, %v1773
        %v1789 = vadd.f32 %v1290, %v1776
        %v1790 = vadd.f32 %v1291, %v1779
        %v1791 = vadd.f32 %v1292, %v1782
        %s1792 = sld [smem:[#allocation8 + $0x4]]
        %s1793 = sld [smem:[#allocation8 + $0x5]]
        %s1794 = scalar_lea.vmem [#allocation2], 64
        %v1795 = vld [vmem:[%s1794] sm:$0xff]
        %v1796 = vld [vmem:[%s1794 + $0x8] sm:$0xff]
        %v1797 = vld [vmem:[%s1794 + $0x10] sm:$0xff]
        %v1798 = vld [vmem:[%s1794 + $0x18] sm:$0xff]
        %s1799 = scalar_lea.vmem %s6, 2
        %v1800 = vld [vmem:[%s1799] sm:$0x1]
        %v1802 = vperm.slane %v1800, 0
        %v1805 = vsel %vm813, %v1784, 0
        %v1808 = vsel %vm813, %v1785, 0
        %v1811 = vsel %vm813, %v1786, 0
        %v1814 = vsel %vm813, %v1787, 0
        %1816 = vmatpush.msra.mxu0 0.0
        %1817 = vmatpush.msra.mxu0 0.0
        %1818 = vmatpush.msra.mxu0 0.0
        %1819 = vmatpush.msra.mxu0 0.0
        %1820 = vmatpush.msra.mxu0 0.0
        %1821 = vmatpush.msra.mxu0 0.0
        %1822 = vmatpush.msra.mxu0 0.0
        %1823 = vmatpush.msra.mxu0 0.0
        %1824 = vmatpush.msra.mxu0 0.0
        %1825 = vmatpush.msra.mxu0 0.0
        %1826 = vmatpush.msra.mxu0 0.0
        %1827 = vmatpush.msra.mxu0 0.0
        %1828 = vmatpush.msra.mxu0 %v1798
        %1829 = vmatpush.msra.mxu0 %v1797
        %1830 = vmatpush.msra.mxu0 %v1796
        %1831 = vmatpush.msra.mxu0 %v1795
        %1832 = vmatmul.f32.gmra.mxu0 %v1805
        %v1833 = vpop.f32.mrf.mxu0
        %v1834 = vadd.f32 %v1802, %v1833
        %1835 = vmatmul.f32.gmra.mxu0 %v1808
        %v1836 = vpop.f32.mrf.mxu0
        %v1837 = vadd.f32 %v1802, %v1836
        %1838 = vmatmul.f32.gmra.mxu0 %v1811
        %v1839 = vpop.f32.mrf.mxu0
        %v1840 = vadd.f32 %v1802, %v1839
        %1841 = vmatmul.f32.gmra.mxu0 %v1814
        %v1842 = vpop.f32.mrf.mxu0
        %v1843 = vadd.f32 %v1802, %v1842
        %1844 = vdwg.mxu0
        %vm1845 = vcmp.ge.f32.partialorder %v1834, 0.0
        %vm1846 = vcmp.ge.f32.partialorder %v1837, 0.0
        %vm1847 = vcmp.ge.f32.partialorder %v1840, 0.0
        %vm1848 = vcmp.ge.f32.partialorder %v1843, 0.0
        %v1849 = vstv %s1792
        %v1850 = vmul.f32 %v1849, %v1834
        %v1851 = vmul.f32 %v1849, %v1837
        %v1852 = vmul.f32 %v1849, %v1840
        %v1853 = vmul.f32 %v1849, %v1843
        %v1854 = vsel %vm1845, %v1834, %v1850
        %v1855 = vsel %vm1846, %v1837, %v1851
        %v1856 = vsel %vm1847, %v1840, %v1852
        %v1857 = vsel %vm1848, %v1843, %v1853
        %s1858 = scalar_lea.vmem %s7, 2
        %v1859 = vld [vmem:[%s1858] sm:$0x1]
        %s1860 = scalar_lea.vmem %s8, 2
        %v1861 = vld [vmem:[%s1860] sm:$0x1]
        %v1862 = vsel %vm813, %v1854, 0.0
        %v1863 = vsel %vm813, %v1855, 0.0
        %v1864 = vadd.f32 %v1862, %v1863
        %v1865 = vsel %vm813, %v1856, 0.0
        %v1866 = vadd.f32 %v1864, %v1865
        %v1867 = vsel %vm813, %v1857, 0.0
        %v1868 = vadd.f32 %v1866, %v1867
        %1869 = vadd.xlane.f32.xlu0 %v1868
        %v1870 = vpop.xlane.xlu0 %1869
        %v1871 = vrot.slane %v1870, 4
        %v1872 = vadd.f32 %v1870, %v1871
        %v1873 = vrot.slane %v1872, 2
        %v1874 = vadd.f32 %v1872, %v1873
        %v1875 = vrot.slane %v1874, 1
        %v1876 = vadd.f32 %v1874, %v1875
        %s1877 = vtos %v1876
        %v1878 = vrcp.pop 1024.0
        %v1879 = vmul.f32 1024.0, %v1878
        %v1880 = vsub.f32 1.0, %v1879
        %v1881 = vmul.f32 %v1878, %v1880
        %v1882 = vadd.f32 %v1878, %v1881
        %vm1883 = vweird.f32 %v1878
        %v1884 = vsel %vm1883, %v1878, %v1882
        %s1885 = vtos %v1884
        %s1886 = smul.f32 %s1877, %s1885
        %v1887 = vmul.f32 %v1854, %v1854
        %v1888 = vmul.f32 %v1855, %v1855
        %v1889 = vmul.f32 %v1856, %v1856
        %v1890 = vmul.f32 %v1857, %v1857
        %v1891 = vsel %vm813, %v1887, 0.0
        %v1892 = vsel %vm813, %v1888, 0.0
        %v1893 = vadd.f32 %v1891, %v1892
        %v1894 = vsel %vm813, %v1889, 0.0
        %v1895 = vadd.f32 %v1893, %v1894
        %v1896 = vsel %vm813, %v1890, 0.0
        %v1897 = vadd.f32 %v1895, %v1896
        %1898 = vadd.xlane.f32.xlu0 %v1897
        %v1899 = vpop.xlane.xlu0 %1898
        %v1900 = vrot.slane %v1899, 4
        %v1901 = vadd.f32 %v1899, %v1900
        %v1902 = vrot.slane %v1901, 2
        %v1903 = vadd.f32 %v1901, %v1902
        %v1904 = vrot.slane %v1903, 1
        %v1905 = vadd.f32 %v1903, %v1904
        %s1906 = vtos %v1905
        %v1907 = vrcp.pop 1024.0
        %v1908 = vmul.f32 1024.0, %v1907
        %v1909 = vsub.f32 1.0, %v1908
        %v1910 = vmul.f32 %v1907, %v1909
        %v1911 = vadd.f32 %v1907, %v1910
        %vm1912 = vweird.f32 %v1907
        %v1913 = vsel %vm1912, %v1907, %v1911
        %s1914 = vtos %v1913
        %s1915 = smul.f32 %s1906, %s1914
        %s1916 = smul.f32 %s1886, %s1886
        %s1917 = ssub.f32 %s1915, %s1916
        %s1918 = sadd.f32 %s1917, 1e-08
        %v1919 = vstv %s1918
        %v1920 = vrsqrt.pop %v1919
        %v1921 = vmul.f32 %v1920, %v1919
        %v1922 = vmul.f32 %v1921, %v1920
        %v1923 = vmul.f32 0.5, %v1922
        %v1924 = vsub.f32 1.5, %v1923
        %v1925 = vmul.f32 %v1920, %v1924
        %vm1926 = vweird.f32 %v1919
        %vm1927 = vweird.f32 %v1920
        %vm1928 = vmor %vm1926, %vm1927
        %v1929 = vsel %vm1928, %v1920, %v1925
        %s1930 = vtos %v1929
        %v1931 = vstv %s1930
        %v1932 = vmul.f32 %v1931, %v1859
        %v1934 = vperm.slane %v1932, 0
        %v1936 = vmul.f32 %v1854, %v1934
        %v1937 = vmul.f32 %v1855, %v1934
        %v1938 = vmul.f32 %v1856, %v1934
        %v1939 = vmul.f32 %v1857, %v1934
        %v1940 = vstv %s1886
        %v1941 = vmul.f32 %v1940, %v1932
        %v1942 = vsub.f32 %v1861, %v1941
        %v1944 = vperm.slane %v1942, 0
        %v1946 = vadd.f32 %v1936, %v1944
        %v1947 = vadd.f32 %v1937, %v1944
        %v1948 = vadd.f32 %v1938, %v1944
        %v1949 = vadd.f32 %v1939, %v1944
        %v1950 = vrot.slane %v1946, 7
        %v1951 = vrot.slane %v1947, 7
        %v1952 = vrot.slane %v1948, 7
        %v1953 = vrot.slane %v1949, 7
        %v1954 = vsel %vm962, %v1952, %v1953
        %v1955 = vsel %vm962, %v1951, %v1952
        %v1956 = vsel %vm962, %v1950, %v1951
        %v1957 = vsel %vm962, %v1953, %v1950
        %v1958 = vsel %vm787, %v1957, 0.0
        %v1959 = vsel %vm788, %v1956, 0.0
        %v1960 = vsel %vm789, %v1955, 0.0
        %v1961 = vsel %vm790, %v1954, 0.0
        %v1962 = vrot.slane %v1946, 1
        %v1963 = vrot.slane %v1947, 1
        %v1964 = vrot.slane %v1948, 1
        %v1965 = vrot.slane %v1949, 1
        %v1966 = vsel %vm975, %v1964, %v1965
        %v1967 = vsel %vm975, %v1963, %v1964
        %v1968 = vsel %vm975, %v1962, %v1963
        %v1969 = vsel %vm975, %v1965, %v1962
        %v1970 = vsel %vm791, %v1968, 0.0
        %v1971 = vsel %vm792, %v1967, 0.0
        %v1972 = vsel %vm793, %v1966, 0.0
        %v1973 = vsel %vm794, %v1969, 0.0
        %s1974 = scalar_lea.vmem [#allocation5], 192
        %v1975 = vld [vmem:[%s1974] sm:$0xff]
        %v1976 = vld [vmem:[%s1974 + $0x8] sm:$0xff]
        %v1977 = vld [vmem:[%s1974 + $0x10] sm:$0xff]
        %v1978 = vld [vmem:[%s1974 + $0x18] sm:$0xff]
        %s1979 = scalar_lea.vmem [#allocation5], 224
        %v1980 = vld [vmem:[%s1979] sm:$0xff]
        %v1981 = vld [vmem:[%s1979 + $0x8] sm:$0xff]
        %v1982 = vld [vmem:[%s1979 + $0x10] sm:$0xff]
        %v1983 = vld [vmem:[%s1979 + $0x18] sm:$0xff]
        %v1985 = vsel %vm813, %v1946, 0
        %v1988 = vsel %vm813, %v1947, 0
        %v1991 = vsel %vm813, %v1948, 0
        %v1994 = vsel %vm813, %v1949, 0
        %1996 = vmatpush.msra.mxu0 0.0
        %1997 = vmatpush.msra.mxu0 0.0
        %1998 = vmatpush.msra.mxu0 0.0
        %1999 = vmatpush.msra.mxu0 0.0
        %2000 = vmatpush.msra.mxu0 0.0
        %2001 = vmatpush.msra.mxu0 0.0
        %2002 = vmatpush.msra.mxu0 0.0
        %2003 = vmatpush.msra.mxu0 0.0
        %2004 = vmatpush.msra.mxu0 0.0
        %2005 = vmatpush.msra.mxu0 0.0
        %2006 = vmatpush.msra.mxu0 0.0
        %2007 = vmatpush.msra.mxu0 0.0
        %2008 = vmatpush.msra.mxu0 %v1983
        %2009 = vmatpush.msra.mxu0 %v1982
        %2010 = vmatpush.msra.mxu0 %v1981
        %2011 = vmatpush.msra.mxu0 %v1980
        %2012 = vmatmul.f32.gmra.mxu0 %v1985
        %v2013 = vpop.f32.mrf.mxu0
        %v2014 = vadd.f32 0.0, %v2013
        %2015 = vmatmul.f32.gmra.mxu0 %v1988
        %v2016 = vpop.f32.mrf.mxu0
        %v2017 = vadd.f32 0.0, %v2016
        %2018 = vmatmul.f32.gmra.mxu0 %v1991
        %v2019 = vpop.f32.mrf.mxu0
        %v2020 = vadd.f32 0.0, %v2019
        %2021 = vmatmul.f32.gmra.mxu0 %v1994
        %v2022 = vpop.f32.mrf.mxu0
        %v2023 = vadd.f32 0.0, %v2022
        %2024 = vdwg.mxu0
        %v2026 = vsel %vm813, %v1958, 0
        %v2029 = vsel %vm813, %v1959, 0
        %v2032 = vsel %vm813, %v1960, 0
        %v2035 = vsel %vm813, %v1961, 0
        %2037 = vmatpush.msra.mxu0 0.0
        %2038 = vmatpush.msra.mxu0 0.0
        %2039 = vmatpush.msra.mxu0 0.0
        %2040 = vmatpush.msra.mxu0 0.0
        %2041 = vmatpush.msra.mxu0 0.0
        %2042 = vmatpush.msra.mxu0 0.0
        %2043 = vmatpush.msra.mxu0 0.0
        %2044 = vmatpush.msra.mxu0 0.0
        %2045 = vmatpush.msra.mxu0 0.0
        %2046 = vmatpush.msra.mxu0 0.0
        %2047 = vmatpush.msra.mxu0 0.0
        %2048 = vmatpush.msra.mxu0 0.0
        %2049 = vmatpush.msra.mxu0 %v1978
        %2050 = vmatpush.msra.mxu0 %v1977
        %2051 = vmatpush.msra.mxu0 %v1976
        %2052 = vmatpush.msra.mxu0 %v1975
        %2053 = vmatmul.f32.gmra.mxu0 %v2026
        %v2054 = vpop.f32.mrf.mxu0
        %v2055 = vadd.f32 %v2014, %v2054
        %2056 = vmatmul.f32.gmra.mxu0 %v2029
        %v2057 = vpop.f32.mrf.mxu0
        %v2058 = vadd.f32 %v2017, %v2057
        %2059 = vmatmul.f32.gmra.mxu0 %v2032
        %v2060 = vpop.f32.mrf.mxu0
        %v2061 = vadd.f32 %v2020, %v2060
        %2062 = vmatmul.f32.gmra.mxu0 %v2035
        %v2063 = vpop.f32.mrf.mxu0
        %v2064 = vadd.f32 %v2023, %v2063
        %2065 = vdwg.mxu0
        %s2066 = scalar_lea.vmem [#allocation5], 256
        %v2067 = vld [vmem:[%s2066] sm:$0xff]
        %v2068 = vld [vmem:[%s2066 + $0x8] sm:$0xff]
        %v2069 = vld [vmem:[%s2066 + $0x10] sm:$0xff]
        %v2070 = vld [vmem:[%s2066 + $0x18] sm:$0xff]
        %v2072 = vsel %vm813, %v1970, 0
        %v2075 = vsel %vm813, %v1971, 0
        %v2078 = vsel %vm813, %v1972, 0
        %v2081 = vsel %vm813, %v1973, 0
        %2083 = vmatpush.msra.mxu0 0.0
        %2084 = vmatpush.msra.mxu0 0.0
        %2085 = vmatpush.msra.mxu0 0.0
        %2086 = vmatpush.msra.mxu0 0.0
        %2087 = vmatpush.msra.mxu0 0.0
        %2088 = vmatpush.msra.mxu0 0.0
        %2089 = vmatpush.msra.mxu0 0.0
        %2090 = vmatpush.msra.mxu0 0.0
        %2091 = vmatpush.msra.mxu0 0.0
        %2092 = vmatpush.msra.mxu0 0.0
        %2093 = vmatpush.msra.mxu0 0.0
        %2094 = vmatpush.msra.mxu0 0.0
        %2095 = vmatpush.msra.mxu0 %v2070
        %2096 = vmatpush.msra.mxu0 %v2069
        %2097 = vmatpush.msra.mxu0 %v2068
        %2098 = vmatpush.msra.mxu0 %v2067
        %2099 = vmatmul.f32.gmra.mxu0 %v2072
        %v2100 = vpop.f32.mrf.mxu0
        %v2101 = vadd.f32 0.0, %v2100
        %2102 = vmatmul.f32.gmra.mxu0 %v2075
        %v2103 = vpop.f32.mrf.mxu0
        %v2104 = vadd.f32 0.0, %v2103
        %2105 = vmatmul.f32.gmra.mxu0 %v2078
        %v2106 = vpop.f32.mrf.mxu0
        %v2107 = vadd.f32 0.0, %v2106
        %2108 = vmatmul.f32.gmra.mxu0 %v2081
        %v2109 = vpop.f32.mrf.mxu0
        %v2110 = vadd.f32 0.0, %v2109
        %2111 = vdwg.mxu0
        %v2112 = vadd.f32 %v2055, %v2101
        %v2113 = vadd.f32 %v2058, %v2104
        %v2114 = vadd.f32 %v2061, %v2107
        %v2115 = vadd.f32 %v2064, %v2110
        %s2116 = scalar_lea.vmem %s10, 2
        %v2117 = vld [vmem:[%s2116] sm:$0x1]
        %v2119 = vperm.slane %v2117, 0
        %v2121 = vadd.f32 %v2112, %v2119
        %v2122 = vadd.f32 %v2113, %v2119
        %v2123 = vadd.f32 %v2114, %v2119
        %v2124 = vadd.f32 %v2115, %v2119
        %vm2125 = vcmp.ge.f32.partialorder %v2121, 0.0
        %vm2126 = vcmp.ge.f32.partialorder %v2122, 0.0
        %vm2127 = vcmp.ge.f32.partialorder %v2123, 0.0
        %vm2128 = vcmp.ge.f32.partialorder %v2124, 0.0
        %v2129 = vstv %s1793
        %v2130 = vmul.f32 %v2129, %v2121
        %v2131 = vmul.f32 %v2129, %v2122
        %v2132 = vmul.f32 %v2129, %v2123
        %v2133 = vmul.f32 %v2129, %v2124
        %v2134 = vsel %vm2125, %v2121, %v2130
        %v2135 = vsel %vm2126, %v2122, %v2131
        %v2136 = vsel %vm2127, %v2123, %v2132
        %v2137 = vsel %vm2128, %v2124, %v2133
        %s2138 = scalar_lea.vmem %s11, 2
        %v2139 = vld [vmem:[%s2138] sm:$0x1]
        %s2140 = scalar_lea.vmem %s12, 2
        %v2141 = vld [vmem:[%s2140] sm:$0x1]
        %v2142 = vsel %vm813, %v2134, 0.0
        %v2143 = vsel %vm813, %v2135, 0.0
        %v2144 = vadd.f32 %v2142, %v2143
        %v2145 = vsel %vm813, %v2136, 0.0
        %v2146 = vadd.f32 %v2144, %v2145
        %v2147 = vsel %vm813, %v2137, 0.0
        %v2148 = vadd.f32 %v2146, %v2147
        %2149 = vadd.xlane.f32.xlu0 %v2148
        %v2150 = vpop.xlane.xlu0 %2149
        %v2151 = vrot.slane %v2150, 4
        %v2152 = vadd.f32 %v2150, %v2151
        %v2153 = vrot.slane %v2152, 2
        %v2154 = vadd.f32 %v2152, %v2153
        %v2155 = vrot.slane %v2154, 1
        %v2156 = vadd.f32 %v2154, %v2155
        %s2157 = vtos %v2156
        %v2158 = vrcp.pop 1024.0
        %v2159 = vmul.f32 1024.0, %v2158
        %v2160 = vsub.f32 1.0, %v2159
        %v2161 = vmul.f32 %v2158, %v2160
        %v2162 = vadd.f32 %v2158, %v2161
        %vm2163 = vweird.f32 %v2158
        %v2164 = vsel %vm2163, %v2158, %v2162
        %s2165 = vtos %v2164
        %s2166 = smul.f32 %s2157, %s2165
        %v2167 = vmul.f32 %v2134, %v2134
        %v2168 = vmul.f32 %v2135, %v2135
        %v2169 = vmul.f32 %v2136, %v2136
        %v2170 = vmul.f32 %v2137, %v2137
        %v2171 = vsel %vm813, %v2167, 0.0
        %v2172 = vsel %vm813, %v2168, 0.0
        %v2173 = vadd.f32 %v2171, %v2172
        %v2174 = vsel %vm813, %v2169, 0.0
        %v2175 = vadd.f32 %v2173, %v2174
        %v2176 = vsel %vm813, %v2170, 0.0
        %v2177 = vadd.f32 %v2175, %v2176
        %2178 = vadd.xlane.f32.xlu0 %v2177
        %v2179 = vpop.xlane.xlu0 %2178
        %v2180 = vrot.slane %v2179, 4
        %v2181 = vadd.f32 %v2179, %v2180
        %v2182 = vrot.slane %v2181, 2
        %v2183 = vadd.f32 %v2181, %v2182
        %v2184 = vrot.slane %v2183, 1
        %v2185 = vadd.f32 %v2183, %v2184
        %s2186 = vtos %v2185
        %v2187 = vrcp.pop 1024.0
        %v2188 = vmul.f32 1024.0, %v2187
        %v2189 = vsub.f32 1.0, %v2188
        %v2190 = vmul.f32 %v2187, %v2189
        %v2191 = vadd.f32 %v2187, %v2190
        %vm2192 = vweird.f32 %v2187
        %v2193 = vsel %vm2192, %v2187, %v2191
        %s2194 = vtos %v2193
        %s2195 = smul.f32 %s2186, %s2194
        %s2196 = smul.f32 %s2166, %s2166
        %s2197 = ssub.f32 %s2195, %s2196
        %s2198 = sadd.f32 %s2197, 1e-08
        %v2199 = vstv %s2198
        %v2200 = vrsqrt.pop %v2199
        %v2201 = vmul.f32 %v2200, %v2199
        %v2202 = vmul.f32 %v2201, %v2200
        %v2203 = vmul.f32 0.5, %v2202
        %v2204 = vsub.f32 1.5, %v2203
        %v2205 = vmul.f32 %v2200, %v2204
        %vm2206 = vweird.f32 %v2199
        %vm2207 = vweird.f32 %v2200
        %vm2208 = vmor %vm2206, %vm2207
        %v2209 = vsel %vm2208, %v2200, %v2205
        %s2210 = vtos %v2209
        %v2211 = vstv %s2210
        %v2212 = vmul.f32 %v2211, %v2139
        %v2214 = vperm.slane %v2212, 0
        %v2216 = vmul.f32 %v2134, %v2214
        %v2217 = vmul.f32 %v2135, %v2214
        %v2218 = vmul.f32 %v2136, %v2214
        %v2219 = vmul.f32 %v2137, %v2214
        %v2220 = vstv %s2166
        %v2221 = vmul.f32 %v2220, %v2212
        %v2222 = vsub.f32 %v2141, %v2221
        %v2224 = vperm.slane %v2222, 0
        %v2226 = vadd.f32 %v2216, %v2224
        %v2227 = vadd.f32 %v2217, %v2224
        %v2228 = vadd.f32 %v2218, %v2224
        %v2229 = vadd.f32 %v2219, %v2224
        %s2230 = scalar_lea.vmem [#allocation7], 64
        %v2231 = vld [vmem:[%s2230] sm:$0xff]
        %v2232 = vld [vmem:[%s2230 + $0x8] sm:$0xff]
        %v2233 = vld [vmem:[%s2230 + $0x10] sm:$0xff]
        %v2234 = vld [vmem:[%s2230 + $0x18] sm:$0xff]
        %s2235 = scalar_lea.vmem %s14, 2
        %v2236 = vld [vmem:[%s2235] sm:$0x1]
        %v2238 = vperm.slane %v2236, 0
        %v2241 = vsel %vm813, %v2226, 0
        %v2244 = vsel %vm813, %v2227, 0
        %v2247 = vsel %vm813, %v2228, 0
        %v2250 = vsel %vm813, %v2229, 0
        %2252 = vmatpush.msra.mxu0 0.0
        %2253 = vmatpush.msra.mxu0 0.0
        %2254 = vmatpush.msra.mxu0 0.0
        %2255 = vmatpush.msra.mxu0 0.0
        %2256 = vmatpush.msra.mxu0 0.0
        %2257 = vmatpush.msra.mxu0 0.0
        %2258 = vmatpush.msra.mxu0 0.0
        %2259 = vmatpush.msra.mxu0 0.0
        %2260 = vmatpush.msra.mxu0 0.0
        %2261 = vmatpush.msra.mxu0 0.0
        %2262 = vmatpush.msra.mxu0 0.0
        %2263 = vmatpush.msra.mxu0 0.0
        %2264 = vmatpush.msra.mxu0 %v2234
        %2265 = vmatpush.msra.mxu0 %v2233
        %2266 = vmatpush.msra.mxu0 %v2232
        %2267 = vmatpush.msra.mxu0 %v2231
        %2268 = vmatmul.f32.gmra.mxu0 %v2241
        %v2269 = vpop.f32.mrf.mxu0
        %v2270 = vadd.f32 %v2238, %v2269
        %2271 = vmatmul.f32.gmra.mxu0 %v2244
        %v2272 = vpop.f32.mrf.mxu0
        %v2273 = vadd.f32 %v2238, %v2272
        %2274 = vmatmul.f32.gmra.mxu0 %v2247
        %v2275 = vpop.f32.mrf.mxu0
        %v2276 = vadd.f32 %v2238, %v2275
        %2277 = vmatmul.f32.gmra.mxu0 %v2250
        %v2278 = vpop.f32.mrf.mxu0
        %v2279 = vadd.f32 %v2238, %v2278
        %2280 = vdwg.mxu0
        %v2281 = vadd.f32 %v1784, %v2270
        %v2282 = vadd.f32 %v1785, %v2273
        %v2283 = vadd.f32 %v1786, %v2276
        %v2284 = vadd.f32 %v1787, %v2279
        %v2285 = vadd.f32 %v1788, %v2270
        %v2286 = vadd.f32 %v1789, %v2273
        %v2287 = vadd.f32 %v1790, %v2276
        %v2288 = vadd.f32 %v1791, %v2279
        %s2289 = sld [smem:[#allocation8 + $0x6]]
        %s2290 = sld [smem:[#allocation8 + $0x7]]
        %s2291 = scalar_lea.vmem [#allocation2], 96
        %v2292 = vld [vmem:[%s2291] sm:$0xff]
        %v2293 = vld [vmem:[%s2291 + $0x8] sm:$0xff]
        %v2294 = vld [vmem:[%s2291 + $0x10] sm:$0xff]
        %v2295 = vld [vmem:[%s2291 + $0x18] sm:$0xff]
        %s2296 = scalar_lea.vmem %s6, 3
        %v2297 = vld [vmem:[%s2296] sm:$0x1]
        %v2299 = vperm.slane %v2297, 0
        %v2302 = vsel %vm813, %v2281, 0
        %v2305 = vsel %vm813, %v2282, 0
        %v2308 = vsel %vm813, %v2283, 0
        %v2311 = vsel %vm813, %v2284, 0
        %2313 = vmatpush.msra.mxu0 0.0
        %2314 = vmatpush.msra.mxu0 0.0
        %2315 = vmatpush.msra.mxu0 0.0
        %2316 = vmatpush.msra.mxu0 0.0
        %2317 = vmatpush.msra.mxu0 0.0
        %2318 = vmatpush.msra.mxu0 0.0
        %2319 = vmatpush.msra.mxu0 0.0
        %2320 = vmatpush.msra.mxu0 0.0
        %2321 = vmatpush.msra.mxu0 0.0
        %2322 = vmatpush.msra.mxu0 0.0
        %2323 = vmatpush.msra.mxu0 0.0
        %2324 = vmatpush.msra.mxu0 0.0
        %2325 = vmatpush.msra.mxu0 %v2295
        %2326 = vmatpush.msra.mxu0 %v2294
        %2327 = vmatpush.msra.mxu0 %v2293
        %2328 = vmatpush.msra.mxu0 %v2292
        %2329 = vmatmul.f32.gmra.mxu0 %v2302
        %v2330 = vpop.f32.mrf.mxu0
        %v2331 = vadd.f32 %v2299, %v2330
        %2332 = vmatmul.f32.gmra.mxu0 %v2305
        %v2333 = vpop.f32.mrf.mxu0
        %v2334 = vadd.f32 %v2299, %v2333
        %2335 = vmatmul.f32.gmra.mxu0 %v2308
        %v2336 = vpop.f32.mrf.mxu0
        %v2337 = vadd.f32 %v2299, %v2336
        %2338 = vmatmul.f32.gmra.mxu0 %v2311
        %v2339 = vpop.f32.mrf.mxu0
        %v2340 = vadd.f32 %v2299, %v2339
        %2341 = vdwg.mxu0
        %vm2342 = vcmp.ge.f32.partialorder %v2331, 0.0
        %vm2343 = vcmp.ge.f32.partialorder %v2334, 0.0
        %vm2344 = vcmp.ge.f32.partialorder %v2337, 0.0
        %vm2345 = vcmp.ge.f32.partialorder %v2340, 0.0
        %v2346 = vstv %s2289
        %v2347 = vmul.f32 %v2346, %v2331
        %v2348 = vmul.f32 %v2346, %v2334
        %v2349 = vmul.f32 %v2346, %v2337
        %v2350 = vmul.f32 %v2346, %v2340
        %v2351 = vsel %vm2342, %v2331, %v2347
        %v2352 = vsel %vm2343, %v2334, %v2348
        %v2353 = vsel %vm2344, %v2337, %v2349
        %v2354 = vsel %vm2345, %v2340, %v2350
        %s2355 = scalar_lea.vmem %s7, 3
        %v2356 = vld [vmem:[%s2355] sm:$0x1]
        %s2357 = scalar_lea.vmem %s8, 3
        %v2358 = vld [vmem:[%s2357] sm:$0x1]
        %v2359 = vsel %vm813, %v2351, 0.0
        %v2360 = vsel %vm813, %v2352, 0.0
        %v2361 = vadd.f32 %v2359, %v2360
        %v2362 = vsel %vm813, %v2353, 0.0
        %v2363 = vadd.f32 %v2361, %v2362
        %v2364 = vsel %vm813, %v2354, 0.0
        %v2365 = vadd.f32 %v2363, %v2364
        %2366 = vadd.xlane.f32.xlu0 %v2365
        %v2367 = vpop.xlane.xlu0 %2366
        %v2368 = vrot.slane %v2367, 4
        %v2369 = vadd.f32 %v2367, %v2368
        %v2370 = vrot.slane %v2369, 2
        %v2371 = vadd.f32 %v2369, %v2370
        %v2372 = vrot.slane %v2371, 1
        %v2373 = vadd.f32 %v2371, %v2372
        %s2374 = vtos %v2373
        %v2375 = vrcp.pop 1024.0
        %v2376 = vmul.f32 1024.0, %v2375
        %v2377 = vsub.f32 1.0, %v2376
        %v2378 = vmul.f32 %v2375, %v2377
        %v2379 = vadd.f32 %v2375, %v2378
        %vm2380 = vweird.f32 %v2375
        %v2381 = vsel %vm2380, %v2375, %v2379
        %s2382 = vtos %v2381
        %s2383 = smul.f32 %s2374, %s2382
        %v2384 = vmul.f32 %v2351, %v2351
        %v2385 = vmul.f32 %v2352, %v2352
        %v2386 = vmul.f32 %v2353, %v2353
        %v2387 = vmul.f32 %v2354, %v2354
        %v2388 = vsel %vm813, %v2384, 0.0
        %v2389 = vsel %vm813, %v2385, 0.0
        %v2390 = vadd.f32 %v2388, %v2389
        %v2391 = vsel %vm813, %v2386, 0.0
        %v2392 = vadd.f32 %v2390, %v2391
        %v2393 = vsel %vm813, %v2387, 0.0
        %v2394 = vadd.f32 %v2392, %v2393
        %2395 = vadd.xlane.f32.xlu0 %v2394
        %v2396 = vpop.xlane.xlu0 %2395
        %v2397 = vrot.slane %v2396, 4
        %v2398 = vadd.f32 %v2396, %v2397
        %v2399 = vrot.slane %v2398, 2
        %v2400 = vadd.f32 %v2398, %v2399
        %v2401 = vrot.slane %v2400, 1
        %v2402 = vadd.f32 %v2400, %v2401
        %s2403 = vtos %v2402
        %v2404 = vrcp.pop 1024.0
        %v2405 = vmul.f32 1024.0, %v2404
        %v2406 = vsub.f32 1.0, %v2405
        %v2407 = vmul.f32 %v2404, %v2406
        %v2408 = vadd.f32 %v2404, %v2407
        %vm2409 = vweird.f32 %v2404
        %v2410 = vsel %vm2409, %v2404, %v2408
        %s2411 = vtos %v2410
        %s2412 = smul.f32 %s2403, %s2411
        %s2413 = smul.f32 %s2383, %s2383
        %s2414 = ssub.f32 %s2412, %s2413
        %s2415 = sadd.f32 %s2414, 1e-08
        %v2416 = vstv %s2415
        %v2417 = vrsqrt.pop %v2416
        %v2418 = vmul.f32 %v2417, %v2416
        %v2419 = vmul.f32 %v2418, %v2417
        %v2420 = vmul.f32 0.5, %v2419
        %v2421 = vsub.f32 1.5, %v2420
        %v2422 = vmul.f32 %v2417, %v2421
        %vm2423 = vweird.f32 %v2416
        %vm2424 = vweird.f32 %v2417
        %vm2425 = vmor %vm2423, %vm2424
        %v2426 = vsel %vm2425, %v2417, %v2422
        %s2427 = vtos %v2426
        %v2428 = vstv %s2427
        %v2429 = vmul.f32 %v2428, %v2356
        %v2431 = vperm.slane %v2429, 0
        %v2433 = vmul.f32 %v2351, %v2431
        %v2434 = vmul.f32 %v2352, %v2431
        %v2435 = vmul.f32 %v2353, %v2431
        %v2436 = vmul.f32 %v2354, %v2431
        %v2437 = vstv %s2383
        %v2438 = vmul.f32 %v2437, %v2429
        %v2439 = vsub.f32 %v2358, %v2438
        %v2441 = vperm.slane %v2439, 0
        %v2443 = vadd.f32 %v2433, %v2441
        %v2444 = vadd.f32 %v2434, %v2441
        %v2445 = vadd.f32 %v2435, %v2441
        %v2446 = vadd.f32 %v2436, %v2441
        %v2447 = vrot.slane %v2443, 6
        %v2448 = vrot.slane %v2444, 6
        %v2449 = vrot.slane %v2445, 6
        %v2450 = vrot.slane %v2446, 6
        %v2451 = vsel %vm1455, %v2449, %v2450
        %v2452 = vsel %vm1455, %v2448, %v2449
        %v2453 = vsel %vm1455, %v2447, %v2448
        %v2454 = vsel %vm1455, %v2450, %v2447
        %v2455 = vsel %vm795, %v2454, 0.0
        %v2456 = vsel %vm796, %v2453, 0.0
        %v2457 = vsel %vm797, %v2452, 0.0
        %v2458 = vsel %vm798, %v2451, 0.0
        %v2459 = vrot.slane %v2443, 2
        %v2460 = vrot.slane %v2444, 2
        %v2461 = vrot.slane %v2445, 2
        %v2462 = vrot.slane %v2446, 2
        %v2463 = vsel %vm1468, %v2461, %v2462
        %v2464 = vsel %vm1468, %v2460, %v2461
        %v2465 = vsel %vm1468, %v2459, %v2460
        %v2466 = vsel %vm1468, %v2462, %v2459
        %v2467 = vsel %vm799, %v2465, 0.0
        %v2468 = vsel %vm800, %v2464, 0.0
        %v2469 = vsel %vm801, %v2463, 0.0
        %v2470 = vsel %vm802, %v2466, 0.0
        %s2471 = scalar_lea.vmem [#allocation5], 288
        %v2472 = vld [vmem:[%s2471] sm:$0xff]
        %v2473 = vld [vmem:[%s2471 + $0x8] sm:$0xff]
        %v2474 = vld [vmem:[%s2471 + $0x10] sm:$0xff]
        %v2475 = vld [vmem:[%s2471 + $0x18] sm:$0xff]
        %s2476 = scalar_lea.vmem [#allocation5], 320
        %v2477 = vld [vmem:[%s2476] sm:$0xff]
        %v2478 = vld [vmem:[%s2476 + $0x8] sm:$0xff]
        %v2479 = vld [vmem:[%s2476 + $0x10] sm:$0xff]
        %v2480 = vld [vmem:[%s2476 + $0x18] sm:$0xff]
        %v2482 = vsel %vm813, %v2443, 0
        %v2485 = vsel %vm813, %v2444, 0
        %v2488 = vsel %vm813, %v2445, 0
        %v2491 = vsel %vm813, %v2446, 0
        %2493 = vmatpush.msra.mxu0 0.0
        %2494 = vmatpush.msra.mxu0 0.0
        %2495 = vmatpush.msra.mxu0 0.0
        %2496 = vmatpush.msra.mxu0 0.0
        %2497 = vmatpush.msra.mxu0 0.0
        %2498 = vmatpush.msra.mxu0 0.0
        %2499 = vmatpush.msra.mxu0 0.0
        %2500 = vmatpush.msra.mxu0 0.0
        %2501 = vmatpush.msra.mxu0 0.0
        %2502 = vmatpush.msra.mxu0 0.0
        %2503 = vmatpush.msra.mxu0 0.0
        %2504 = vmatpush.msra.mxu0 0.0
        %2505 = vmatpush.msra.mxu0 %v2480
        %2506 = vmatpush.msra.mxu0 %v2479
        %2507 = vmatpush.msra.mxu0 %v2478
        %2508 = vmatpush.msra.mxu0 %v2477
        %2509 = vmatmul.f32.gmra.mxu0 %v2482
        %v2510 = vpop.f32.mrf.mxu0
        %v2511 = vadd.f32 0.0, %v2510
        %2512 = vmatmul.f32.gmra.mxu0 %v2485
        %v2513 = vpop.f32.mrf.mxu0
        %v2514 = vadd.f32 0.0, %v2513
        %2515 = vmatmul.f32.gmra.mxu0 %v2488
        %v2516 = vpop.f32.mrf.mxu0
        %v2517 = vadd.f32 0.0, %v2516
        %2518 = vmatmul.f32.gmra.mxu0 %v2491
        %v2519 = vpop.f32.mrf.mxu0
        %v2520 = vadd.f32 0.0, %v2519
        %2521 = vdwg.mxu0
        %v2523 = vsel %vm813, %v2455, 0
        %v2526 = vsel %vm813, %v2456, 0
        %v2529 = vsel %vm813, %v2457, 0
        %v2532 = vsel %vm813, %v2458, 0
        %2534 = vmatpush.msra.mxu0 0.0
        %2535 = vmatpush.msra.mxu0 0.0
        %2536 = vmatpush.msra.mxu0 0.0
        %2537 = vmatpush.msra.mxu0 0.0
        %2538 = vmatpush.msra.mxu0 0.0
        %2539 = vmatpush.msra.mxu0 0.0
        %2540 = vmatpush.msra.mxu0 0.0
        %2541 = vmatpush.msra.mxu0 0.0
        %2542 = vmatpush.msra.mxu0 0.0
        %2543 = vmatpush.msra.mxu0 0.0
        %2544 = vmatpush.msra.mxu0 0.0
        %2545 = vmatpush.msra.mxu0 0.0
        %2546 = vmatpush.msra.mxu0 %v2475
        %2547 = vmatpush.msra.mxu0 %v2474
        %2548 = vmatpush.msra.mxu0 %v2473
        %2549 = vmatpush.msra.mxu0 %v2472
        %2550 = vmatmul.f32.gmra.mxu0 %v2523
        %v2551 = vpop.f32.mrf.mxu0
        %v2552 = vadd.f32 %v2511, %v2551
        %2553 = vmatmul.f32.gmra.mxu0 %v2526
        %v2554 = vpop.f32.mrf.mxu0
        %v2555 = vadd.f32 %v2514, %v2554
        %2556 = vmatmul.f32.gmra.mxu0 %v2529
        %v2557 = vpop.f32.mrf.mxu0
        %v2558 = vadd.f32 %v2517, %v2557
        %2559 = vmatmul.f32.gmra.mxu0 %v2532
        %v2560 = vpop.f32.mrf.mxu0
        %v2561 = vadd.f32 %v2520, %v2560
        %2562 = vdwg.mxu0
        %s2563 = scalar_lea.vmem [#allocation5], 352
        %v2564 = vld [vmem:[%s2563] sm:$0xff]
        %v2565 = vld [vmem:[%s2563 + $0x8] sm:$0xff]
        %v2566 = vld [vmem:[%s2563 + $0x10] sm:$0xff]
        %v2567 = vld [vmem:[%s2563 + $0x18] sm:$0xff]
        %v2569 = vsel %vm813, %v2467, 0
        %v2572 = vsel %vm813, %v2468, 0
        %v2575 = vsel %vm813, %v2469, 0
        %v2578 = vsel %vm813, %v2470, 0
        %2580 = vmatpush.msra.mxu0 0.0
        %2581 = vmatpush.msra.mxu0 0.0
        %2582 = vmatpush.msra.mxu0 0.0
        %2583 = vmatpush.msra.mxu0 0.0
        %2584 = vmatpush.msra.mxu0 0.0
        %2585 = vmatpush.msra.mxu0 0.0
        %2586 = vmatpush.msra.mxu0 0.0
        %2587 = vmatpush.msra.mxu0 0.0
        %2588 = vmatpush.msra.mxu0 0.0
        %2589 = vmatpush.msra.mxu0 0.0
        %2590 = vmatpush.msra.mxu0 0.0
        %2591 = vmatpush.msra.mxu0 0.0
        %2592 = vmatpush.msra.mxu0 %v2567
        %2593 = vmatpush.msra.mxu0 %v2566
        %2594 = vmatpush.msra.mxu0 %v2565
        %2595 = vmatpush.msra.mxu0 %v2564
        %2596 = vmatmul.f32.gmra.mxu0 %v2569
        %v2597 = vpop.f32.mrf.mxu0
        %v2598 = vadd.f32 0.0, %v2597
        %2599 = vmatmul.f32.gmra.mxu0 %v2572
        %v2600 = vpop.f32.mrf.mxu0
        %v2601 = vadd.f32 0.0, %v2600
        %2602 = vmatmul.f32.gmra.mxu0 %v2575
        %v2603 = vpop.f32.mrf.mxu0
        %v2604 = vadd.f32 0.0, %v2603
        %2605 = vmatmul.f32.gmra.mxu0 %v2578
        %v2606 = vpop.f32.mrf.mxu0
        %v2607 = vadd.f32 0.0, %v2606
        %2608 = vdwg.mxu0
        %v2609 = vadd.f32 %v2552, %v2598
        %v2610 = vadd.f32 %v2555, %v2601
        %v2611 = vadd.f32 %v2558, %v2604
        %v2612 = vadd.f32 %v2561, %v2607
        %s2613 = scalar_lea.vmem %s10, 3
        %v2614 = vld [vmem:[%s2613] sm:$0x1]
        %v2616 = vperm.slane %v2614, 0
        %v2618 = vadd.f32 %v2609, %v2616
        %v2619 = vadd.f32 %v2610, %v2616
        %v2620 = vadd.f32 %v2611, %v2616
        %v2621 = vadd.f32 %v2612, %v2616
        %vm2622 = vcmp.ge.f32.partialorder %v2618, 0.0
        %vm2623 = vcmp.ge.f32.partialorder %v2619, 0.0
        %vm2624 = vcmp.ge.f32.partialorder %v2620, 0.0
        %vm2625 = vcmp.ge.f32.partialorder %v2621, 0.0
        %v2626 = vstv %s2290
        %v2627 = vmul.f32 %v2626, %v2618
        %v2628 = vmul.f32 %v2626, %v2619
        %v2629 = vmul.f32 %v2626, %v2620
        %v2630 = vmul.f32 %v2626, %v2621
        %v2631 = vsel %vm2622, %v2618, %v2627
        %v2632 = vsel %vm2623, %v2619, %v2628
        %v2633 = vsel %vm2624, %v2620, %v2629
        %v2634 = vsel %vm2625, %v2621, %v2630
        %s2635 = scalar_lea.vmem %s11, 3
        %v2636 = vld [vmem:[%s2635] sm:$0x1]
        %s2637 = scalar_lea.vmem %s12, 3
        %v2638 = vld [vmem:[%s2637] sm:$0x1]
        %v2639 = vsel %vm813, %v2631, 0.0
        %v2640 = vsel %vm813, %v2632, 0.0
        %v2641 = vadd.f32 %v2639, %v2640
        %v2642 = vsel %vm813, %v2633, 0.0
        %v2643 = vadd.f32 %v2641, %v2642
        %v2644 = vsel %vm813, %v2634, 0.0
        %v2645 = vadd.f32 %v2643, %v2644
        %2646 = vadd.xlane.f32.xlu0 %v2645
        %v2647 = vpop.xlane.xlu0 %2646
        %v2648 = vrot.slane %v2647, 4
        %v2649 = vadd.f32 %v2647, %v2648
        %v2650 = vrot.slane %v2649, 2
        %v2651 = vadd.f32 %v2649, %v2650
        %v2652 = vrot.slane %v2651, 1
        %v2653 = vadd.f32 %v2651, %v2652
        %s2654 = vtos %v2653
        %v2655 = vrcp.pop 1024.0
        %v2656 = vmul.f32 1024.0, %v2655
        %v2657 = vsub.f32 1.0, %v2656
        %v2658 = vmul.f32 %v2655, %v2657
        %v2659 = vadd.f32 %v2655, %v2658
        %vm2660 = vweird.f32 %v2655
        %v2661 = vsel %vm2660, %v2655, %v2659
        %s2662 = vtos %v2661
        %s2663 = smul.f32 %s2654, %s2662
        %v2664 = vmul.f32 %v2631, %v2631
        %v2665 = vmul.f32 %v2632, %v2632
        %v2666 = vmul.f32 %v2633, %v2633
        %v2667 = vmul.f32 %v2634, %v2634
        %v2668 = vsel %vm813, %v2664, 0.0
        %v2669 = vsel %vm813, %v2665, 0.0
        %v2670 = vadd.f32 %v2668, %v2669
        %v2671 = vsel %vm813, %v2666, 0.0
        %v2672 = vadd.f32 %v2670, %v2671
        %v2673 = vsel %vm813, %v2667, 0.0
        %v2674 = vadd.f32 %v2672, %v2673
        %2675 = vadd.xlane.f32.xlu0 %v2674
        %v2676 = vpop.xlane.xlu0 %2675
        %v2677 = vrot.slane %v2676, 4
        %v2678 = vadd.f32 %v2676, %v2677
        %v2679 = vrot.slane %v2678, 2
        %v2680 = vadd.f32 %v2678, %v2679
        %v2681 = vrot.slane %v2680, 1
        %v2682 = vadd.f32 %v2680, %v2681
        %s2683 = vtos %v2682
        %v2684 = vrcp.pop 1024.0
        %v2685 = vmul.f32 1024.0, %v2684
        %v2686 = vsub.f32 1.0, %v2685
        %v2687 = vmul.f32 %v2684, %v2686
        %v2688 = vadd.f32 %v2684, %v2687
        %vm2689 = vweird.f32 %v2684
        %v2690 = vsel %vm2689, %v2684, %v2688
        %s2691 = vtos %v2690
        %s2692 = smul.f32 %s2683, %s2691
        %s2693 = smul.f32 %s2663, %s2663
        %s2694 = ssub.f32 %s2692, %s2693
        %s2695 = sadd.f32 %s2694, 1e-08
        %v2696 = vstv %s2695
        %v2697 = vrsqrt.pop %v2696
        %v2698 = vmul.f32 %v2697, %v2696
        %v2699 = vmul.f32 %v2698, %v2697
        %v2700 = vmul.f32 0.5, %v2699
        %v2701 = vsub.f32 1.5, %v2700
        %v2702 = vmul.f32 %v2697, %v2701
        %vm2703 = vweird.f32 %v2696
        %vm2704 = vweird.f32 %v2697
        %vm2705 = vmor %vm2703, %vm2704
        %v2706 = vsel %vm2705, %v2697, %v2702
        %s2707 = vtos %v2706
        %v2708 = vstv %s2707
        %v2709 = vmul.f32 %v2708, %v2636
        %v2711 = vperm.slane %v2709, 0
        %v2713 = vmul.f32 %v2631, %v2711
        %v2714 = vmul.f32 %v2632, %v2711
        %v2715 = vmul.f32 %v2633, %v2711
        %v2716 = vmul.f32 %v2634, %v2711
        %v2717 = vstv %s2663
        %v2718 = vmul.f32 %v2717, %v2709
        %v2719 = vsub.f32 %v2638, %v2718
        %v2721 = vperm.slane %v2719, 0
        %v2723 = vadd.f32 %v2713, %v2721
        %v2724 = vadd.f32 %v2714, %v2721
        %v2725 = vadd.f32 %v2715, %v2721
        %v2726 = vadd.f32 %v2716, %v2721
        %s2727 = scalar_lea.vmem [#allocation7], 96
        %v2728 = vld [vmem:[%s2727] sm:$0xff]
        %v2729 = vld [vmem:[%s2727 + $0x8] sm:$0xff]
        %v2730 = vld [vmem:[%s2727 + $0x10] sm:$0xff]
        %v2731 = vld [vmem:[%s2727 + $0x18] sm:$0xff]
        %s2732 = scalar_lea.vmem %s14, 3
        %v2733 = vld [vmem:[%s2732] sm:$0x1]
        %v2735 = vperm.slane %v2733, 0
        %v2738 = vsel %vm813, %v2723, 0
        %v2741 = vsel %vm813, %v2724, 0
        %v2744 = vsel %vm813, %v2725, 0
        %v2747 = vsel %vm813, %v2726, 0
        %2749 = vmatpush.msra.mxu0 0.0
        %2750 = vmatpush.msra.mxu0 0.0
        %2751 = vmatpush.msra.mxu0 0.0
        %2752 = vmatpush.msra.mxu0 0.0
        %2753 = vmatpush.msra.mxu0 0.0
        %2754 = vmatpush.msra.mxu0 0.0
        %2755 = vmatpush.msra.mxu0 0.0
        %2756 = vmatpush.msra.mxu0 0.0
        %2757 = vmatpush.msra.mxu0 0.0
        %2758 = vmatpush.msra.mxu0 0.0
        %2759 = vmatpush.msra.mxu0 0.0
        %2760 = vmatpush.msra.mxu0 0.0
        %2761 = vmatpush.msra.mxu0 %v2731
        %2762 = vmatpush.msra.mxu0 %v2730
        %2763 = vmatpush.msra.mxu0 %v2729
        %2764 = vmatpush.msra.mxu0 %v2728
        %2765 = vmatmul.f32.gmra.mxu0 %v2738
        %v2766 = vpop.f32.mrf.mxu0
        %v2767 = vadd.f32 %v2735, %v2766
        %2768 = vmatmul.f32.gmra.mxu0 %v2741
        %v2769 = vpop.f32.mrf.mxu0
        %v2770 = vadd.f32 %v2735, %v2769
        %2771 = vmatmul.f32.gmra.mxu0 %v2744
        %v2772 = vpop.f32.mrf.mxu0
        %v2773 = vadd.f32 %v2735, %v2772
        %2774 = vmatmul.f32.gmra.mxu0 %v2747
        %v2775 = vpop.f32.mrf.mxu0
        %v2776 = vadd.f32 %v2735, %v2775
        %2777 = vdwg.mxu0
        %v2778 = vadd.f32 %v2285, %v2767
        %v2779 = vadd.f32 %v2286, %v2770
        %v2780 = vadd.f32 %v2287, %v2773
        %v2781 = vadd.f32 %v2288, %v2776
        %s2782 = sld [smem:[#allocation8 + $0x8]]
        %vm2783 = vcmp.ge.f32.partialorder %v2778, 0.0
        %vm2784 = vcmp.ge.f32.partialorder %v2779, 0.0
        %vm2785 = vcmp.ge.f32.partialorder %v2780, 0.0
        %vm2786 = vcmp.ge.f32.partialorder %v2781, 0.0
        %v2787 = vstv %s2782
        %v2788 = vmul.f32 %v2787, %v2778
        %v2789 = vmul.f32 %v2787, %v2779
        %v2790 = vmul.f32 %v2787, %v2780
        %v2791 = vmul.f32 %v2787, %v2781
        %v2792 = vsel %vm2783, %v2778, %v2788
        %v2793 = vsel %vm2784, %v2779, %v2789
        %v2794 = vsel %vm2785, %v2780, %v2790
        %v2795 = vsel %vm2786, %v2781, %v2791
        %v2796 = vld [vmem:[%s15] sm:$0xff]
        %v2797 = vld [vmem:[%s15 + $0x8] sm:$0xff]
        %v2798 = vld [vmem:[%s15 + $0x10] sm:$0xff]
        %v2799 = vld [vmem:[%s15 + $0x18] sm:$0xff]
        %v2800 = vld [vmem:[%s16] sm:$0x1]
        %v2802 = vperm.slane %v2800, 0
        %2808 = vrot.lane.b32.xlu0 %v2792, 96
        %v2809 = vpop.permute.xlu0 %2808
        %2810 = vrot.lane.b32.xlu0 %v2793, 96
        %v2811 = vpop.permute.xlu0 %2810
        %2812 = vrot.lane.b32.xlu0 %v2794, 96
        %v2813 = vpop.permute.xlu0 %2812
        %2814 = vrot.lane.b32.xlu0 %v2795, 96
        %v2815 = vpop.permute.xlu0 %2814
        %v2816 = vsel %vm813, %v2809, 0
        %v2818 = vsel %vm813, %v2811, 0
        %v2820 = vsel %vm813, %v2813, 0
        %v2822 = vsel %vm813, %v2815, 0
        %2824 = vmatpush.msra.mxu0 0.0
        %2825 = vmatpush.msra.mxu0 0.0
        %2826 = vmatpush.msra.mxu0 0.0
        %2827 = vmatpush.msra.mxu0 0.0
        %2828 = vmatpush.msra.mxu0 0.0
        %2829 = vmatpush.msra.mxu0 0.0
        %2830 = vmatpush.msra.mxu0 0.0
        %2831 = vmatpush.msra.mxu0 0.0
        %2832 = vmatpush.msra.mxu0 0.0
        %2833 = vmatpush.msra.mxu0 0.0
        %2834 = vmatpush.msra.mxu0 0.0
        %2835 = vmatpush.msra.mxu0 0.0
        %2836 = vmatpush.msra.mxu0 %v2799
        %2837 = vmatpush.msra.mxu0 %v2798
        %2838 = vmatpush.msra.mxu0 %v2797
        %2839 = vmatpush.msra.mxu0 %v2796
        %2840 = vmatmul.f32.gmra.mxu0 %v2816
        %v2841 = vpop.f32.mrf.mxu0
        %v2842 = vadd.f32 %v2802, %v2841
        %2843 = vmatmul.f32.gmra.mxu0 %v2818
        %v2844 = vpop.f32.mrf.mxu0
        %v2845 = vadd.f32 %v2802, %v2844
        %2846 = vmatmul.f32.gmra.mxu0 %v2820
        %v2847 = vpop.f32.mrf.mxu0
        %v2848 = vadd.f32 %v2802, %v2847
        %2849 = vmatmul.f32.gmra.mxu0 %v2822
        %v2850 = vpop.f32.mrf.mxu0
        %v2851 = vadd.f32 %v2802, %v2850
        %2852 = vdwg.mxu0
        %v2853 = vxor.u32 %v2842, 2147483648
        %v2854 = vxor.u32 %v2845, 2147483648
        %v2855 = vxor.u32 %v2848, 2147483648
        %v2856 = vxor.u32 %v2851, 2147483648
        %v2857 = vmul.f32 %v2853, 1.442695
        %v2858 = vpow.pop %v2857
        %v2859 = vmul.f32 %v2854, 1.442695
        %v2860 = vpow.pop %v2859
        %v2861 = vmul.f32 %v2855, 1.442695
        %v2862 = vpow.pop %v2861
        %v2863 = vmul.f32 %v2856, 1.442695
        %v2864 = vpow.pop %v2863
        %v2865 = vadd.f32 %v2858, 1.0
        %v2866 = vadd.f32 %v2860, 1.0
        %v2867 = vadd.f32 %v2862, 1.0
        %v2868 = vadd.f32 %v2864, 1.0
        %v2869 = vrcp.pop %v2865
        %v2870 = vmul.f32 %v2865, %v2869
        %v2871 = vsub.f32 1.0, %v2870
        %v2872 = vmul.f32 %v2869, %v2871
        %v2873 = vadd.f32 %v2869, %v2872
        %vm2874 = vweird.f32 %v2865
        %vm2875 = vweird.f32 %v2869
        %vm2876 = vmor %vm2874, %vm2875
        %v2877 = vsel %vm2876, %v2869, %v2873
        %v2878 = vand.u32 2147483647, %v2865
        %vm2879 = vcmp.eq.f32.partialorder %v2878, 8.507059e+37
        %v2880 = vand.u32 %v2865, 2147483648
        %v2881 = vor.u32 1.1754944e-38, %v2880
        %v2882 = vsel %vm2879, %v2881, %v2877
        %v2883 = vmul.f32 1.0, %v2882
        %v2884 = vrcp.pop %v2866
        %v2885 = vmul.f32 %v2866, %v2884
        %v2886 = vsub.f32 1.0, %v2885
        %v2887 = vmul.f32 %v2884, %v2886
        %v2888 = vadd.f32 %v2884, %v2887
        %vm2889 = vweird.f32 %v2866
        %vm2890 = vweird.f32 %v2884
        %vm2891 = vmor %vm2889, %vm2890
        %v2892 = vsel %vm2891, %v2884, %v2888
        %v2893 = vand.u32 2147483647, %v2866
        %vm2894 = vcmp.eq.f32.partialorder %v2893, 8.507059e+37
        %v2895 = vand.u32 %v2866, 2147483648
        %v2896 = vor.u32 1.1754944e-38, %v2895
        %v2897 = vsel %vm2894, %v2896, %v2892
        %v2898 = vmul.f32 1.0, %v2897
        %v2899 = vrcp.pop %v2867
        %v2900 = vmul.f32 %v2867, %v2899
        %v2901 = vsub.f32 1.0, %v2900
        %v2902 = vmul.f32 %v2899, %v2901
        %v2903 = vadd.f32 %v2899, %v2902
        %vm2904 = vweird.f32 %v2867
        %vm2905 = vweird.f32 %v2899
        %vm2906 = vmor %vm2904, %vm2905
        %v2907 = vsel %vm2906, %v2899, %v2903
        %v2908 = vand.u32 2147483647, %v2867
        %vm2909 = vcmp.eq.f32.partialorder %v2908, 8.507059e+37
        %v2910 = vand.u32 %v2867, 2147483648
        %v2911 = vor.u32 1.1754944e-38, %v2910
        %v2912 = vsel %vm2909, %v2911, %v2907
        %v2913 = vmul.f32 1.0, %v2912
        %v2914 = vrcp.pop %v2868
        %v2915 = vmul.f32 %v2868, %v2914
        %v2916 = vsub.f32 1.0, %v2915
        %v2917 = vmul.f32 %v2914, %v2916
        %v2918 = vadd.f32 %v2914, %v2917
        %vm2919 = vweird.f32 %v2868
        %vm2920 = vweird.f32 %v2914
        %vm2921 = vmor %vm2919, %vm2920
        %v2922 = vsel %vm2921, %v2914, %v2918
        %v2923 = vand.u32 2147483647, %v2868
        %vm2924 = vcmp.eq.f32.partialorder %v2923, 8.507059e+37
        %v2925 = vand.u32 %v2868, 2147483648
        %v2926 = vor.u32 1.1754944e-38, %v2925
        %v2927 = vsel %vm2924, %v2926, %v2922
        %v2928 = vmul.f32 1.0, %v2927
        %2929 = vst.msk [vmem:[%s639] sm:$0xff] %vm646, %v2883
        %2930 = vst.msk [vmem:[%s639 + $0x8] sm:$0xff] %vm646, %v2898
        %2931 = vst.msk [vmem:[%s639 + $0x10] sm:$0xff] %vm646, %v2913
        %2932 = vst.msk [vmem:[%s639 + $0x18] sm:$0xff] %vm646, %v2928
        %p2933 = scmp.lt.s32.totalorder %s32, 1
        %s2934 = scalar_select %p2933, %s32, 1
        %s2935 = smul.addr %s2934, 4
        %s2936 = smul.addr %s2935, 8
        %s2937 = scalar_lea.vmem %s18, %s2936
        // Predicated region
        $region109: #{tpu_custom_call.1} parent=91 // pred_check
          %p2938 = pneg %p433
        $region110: #{tpu_custom_call.1} parent=91 // pred_check_branch
          %2940 = sbr.rel (%p2938) target = $region112
        $region111: #{tpu_custom_call.1} parent=91 // pred_region
          _
        $region112: #{tpu_custom_call.1} parent=91 // pred_fallthru
          _
      $region92: #{tpu_custom_call.1} parent=5 // pred_fallthru
        _
      %p2941 = scmp.le.s32.totalorder 2, %s27
      // Predicated region
      $region113: #{tpu_custom_call.1} parent=5 // pred_check
        %p2942 = pneg %p2941
      $region114: #{tpu_custom_call.1} parent=5 // pred_check_branch
        %2944 = sbr.rel (%p2942) target = $region116
      $region115: #{tpu_custom_call.1} parent=5 // pred_region
        %s2945 = ssub.s32 %s27, 2
        // Predicated region
        $region117: #{tpu_custom_call.1} parent=115 // pred_check
          %p2946 = pneg %p439
        $region118: #{tpu_custom_call.1} parent=115 // pred_check_branch
          %2948 = sbr.rel (%p2946) target = $region120
        $region119: #{tpu_custom_call.1} parent=115 // pred_region
          %p2949 = scmp.lt.s32.totalorder %s33, 1
          %s2950 = scalar_select %p2949, %s33, 1
          %s2951 = smul.addr %s2950, 4
          %s2952 = smul.addr %s2951, 8
          %s2953 = scalar_lea.vmem %s18, %s2952
        $region120: #{tpu_custom_call.1} parent=115 // pred_fallthru
          _
      $region116: #{tpu_custom_call.1} parent=5 // pred_fallthru
        _
    $region6: #{tpu_custom_call.1} parent=1 // loop_footer
      %s31 = sadd.s32 1, %s27
    $region7: #{tpu_custom_call.1} parent=1 // loop_footer_branch
      %26 = sbr.rel target = $region3
    $region8: #{tpu_custom_call.1} parent=1 // loop_exit
      _
    %2954 = vsyncpa [#allocation3], 1
    %s2955 = scalar_lea.sflag [#allocation3], 1
    %2956 = vsyncpa %s2955, 1
    %2957 = vsyncpa [#allocation6], 1
    %2958 = vsyncpa [#allocation4], 1
    %s2959 = scalar_lea.sflag [#allocation4], 1
    %2960 = vsyncpa %s2959, 1

</llo_original>
